<compile_context>
chip_gen: v6e
topology: v6e:2x2x1
jax: 0.10.0
libtpu: 0.0.40
codegen_flags: <defaults>
</compile_context>

<pallas_src>
import functools
import math

import jax
import jax.numpy as jnp
from jax.experimental import pallas as pl
from jax.experimental.pallas import tpu as pltpu


def _fold_bn(params, eps):
    gamma, beta, mean, var = params
    scale = gamma / jnp.sqrt(var + eps)
    shift = beta - mean * scale
    return scale.astype(jnp.float32), shift.astype(jnp.float32)


def _pick_tm(B, cap=512):
    """Largest multiple-of-8 divisor of B (<= cap), preferring >= 2 even steps (v7x megacore)."""
    start = min(B, cap)
    start -= start % 8
    best_multi = best_any = None
    for cand in range(start, 7, -8):
        if B % cand:
            continue
        steps = B // cand
        if best_any is None:
            best_any = cand
        if steps >= 2 and best_multi is None:
            best_multi = cand
        if steps >= 2 and steps % 2 == 0:
            return cand
    if best_multi is not None:
        return best_multi
    if best_any is not None:
        return best_any
    return min(B, 8)


def _vmem_budget_bytes():
    """~3/4 of physical VMEM (v7x: 64->48 MiB, v5e/v6e: 128->96 MiB), clamped to [32, 96] MiB."""
    try:
        cap = int(getattr(pltpu.get_tpu_info(), "vmem_capacity_bytes"))
    except Exception:
        cap = 64 << 20
    return max(32 << 20, min(96 << 20, (cap * 3) // 4))


def _working_set_bytes(tn, *, tm, d1, d2, k_chunk, cd_bytes, out_bytes):
    return (2 * tm * tn * out_bytes            # double-buffered output tile
            + 2 * d1 * tn * cd_bytes           # double-buffered E^T tile
            + 2 * d1 * d2 * d1 * cd_bytes      # Wp2 (conservatively counted double-buffered)
            + 2 * tm * d1 * 4                  # e1 tile (f32)
            + 2 * tm * d2 * 4                  # r tile (f32)
            + 2 * 4 * d1 * 4                   # folded BN params
            + tm * d1 * cd_bytes               # y scratch
            + tm * k_chunk * d1 * 4)           # live f32 k-chunk intermediate


def _pick_tn(nE, *, budget_bytes, cap=4096, **ws_kwargs):
    start = min(nE, cap)
    start -= start % 128
    for cand in range(start, 127, -128):
        if nE % cand:
            continue
        if _working_set_bytes(cand, **ws_kwargs) <= budget_bytes:
            return cand
    return 128


def _const_spec(shape, *, single_buffer):
    index_map = lambda i, j: (0,) * len(shape)
    if single_buffer and hasattr(pl, "Buffered"):
        # Constant-index blocks never change -> single-buffer them to free VMEM for a larger tn.
        return pl.BlockSpec(shape, index_map, pipeline_mode=pl.Buffered(1))
    return pl.BlockSpec(shape, index_map)


def tucker_kernel(e1_ref, r_ref, wp2_ref, bn_ref, et_ref, out_ref, y_scratch,
                  *, d1, d2, k_chunk, compute_dtype):
    # CORRECTNESS: the y_scratch cache below is only valid because the entity axis
    # (grid axis 1) is the innermost, sequentially executed ("arbitrary") axis.
    # It must never be reordered or made (core-)parallel.
    @pl.when(pl.program_id(1) == 0)
    def _():
        bn = bn_ref[...]                                           # (4, d1) f32: s0, o0, s1, o1
        # bn0 (eval, folded) + input_dropout (identity in eval)
        x = e1_ref[...].astype(jnp.float32) * bn[0:1, :] + bn[1:2, :]   # (tm, d1) f32
        rr = r_ref[...].astype(jnp.float32)                              # (tm, d2) f32
        xc = x.astype(compute_dtype)
        tm = x.shape[0]

        # Tucker contraction h[b, j] = sum_k r[b, k] * (sum_i x[b, i] * W[k, i, j]),
        # blocked over k-chunks so the live f32 intermediate stays ~O(2 MiB) on v7x.
        h = jnp.zeros((tm, d1), dtype=jnp.float32)
        for k0 in range(0, d2, k_chunk):
            kc = min(k_chunk, d2 - k0)
            t = jnp.dot(xc, wp2_ref[:, k0 * d1:(k0 + kc) * d1],
                        preferred_element_type=jnp.float32)              # (tm, kc*d1) f32
            t3 = t.reshape(tm, kc, d1)
            h = h + jnp.sum(rr[:, k0:k0 + kc, None] * t3, axis=1)        # vectorized reduction

        # hidden_dropout1 (identity), bn1 (eval, folded), hidden_dropout2 (identity)
        y = h * bn[2:3, :] + bn[3:4, :]
        y_scratch[...] = y.astype(compute_dtype)

    # Entity scoring for this (batch tile, entity tile); lane-dense tn-wide output.
    logits = jnp.dot(y_scratch[...], et_ref[...],
                     preferred_element_type=jnp.float32)                  # (tm, tn) f32
    # sigmoid: exp on the EUP, approximate reciprocal keeps the divide off the VPU path.
    scores = pl.reciprocal(1.0 + jnp.exp(-logits), approx=True)
    out_ref[...] = scores.astype(out_ref.dtype)


@functools.partial(jax.jit, static_argnames=("compute_dtype", "out_dtype", "tm", "tn",
                                              "k_chunk", "single_buffer_consts"))
def tucker_forward(e1, r, W, E_weight, bn0_params, bn1_params, *,
                   compute_dtype=jnp.bfloat16, out_dtype=jnp.bfloat16,
                   tm=None, tn=None, k_chunk=None, single_buffer_consts=False, eps=1e-5):
    B, d1 = e1.shape
    d2 = r.shape[1]
    nE = E_weight.shape[0]
    assert W.shape == (d2, d1, d1)
    assert E_weight.shape == (nE, d1)
    assert nE % 128 == 0, "nE must be a multiple of 128 (pad E for lane-dense entity tiles)"

    if tm is None:
        tm = _pick_tm(B)
    assert B % tm == 0 and tm % 8 == 0, "batch tile must divide B and be a multiple of 8"

    cd_bytes = jnp.dtype(compute_dtype).itemsize
    out_bytes = jnp.dtype(out_dtype).itemsize

    if k_chunk is None:
        # Cap the live (tm, k_chunk*d1) f32 intermediate at ~2 MiB.
        k_chunk = max(1, min(d2, (2 << 20) // max(1, tm * d1 * 4)))

    budget = _vmem_budget_bytes()
    if tn is None:
        tn = _pick_tn(nE, budget_bytes=int(budget * 0.85), cap=4096,
                      tm=tm, d1=d1, d2=d2, k_chunk=k_chunk,
                      cd_bytes=cd_bytes, out_bytes=out_bytes)
    assert nE % tn == 0 and tn % 128 == 0, "entity tile must divide nE and be a multiple of 128"

    # Parameter folding / layout prep (pure parameter work, done once outside the kernel).
    s0, o0 = _fold_bn(bn0_params, eps)
    s1, o1 = _fold_bn(bn1_params, eps)
    bn = jnp.stack([s0, o0, s1, o1], axis=0)                                  # (4, d1) f32
    # Wp2[i, k*d1 + j] = W[k, i, j]  -> lane-dense MXU matmuls inside the kernel.
    wp2 = jnp.transpose(W, (1, 0, 2)).reshape(d1, d2 * d1).astype(compute_dtype)
    et = E_weight.T.astype(compute_dtype)                                      # (d1, nE)
    e1f = e1.astype(jnp.float32)
    rf = r.astype(jnp.float32)

    grid = (B // tm, nE // tn)
    cost = pl.CostEstimate(
        flops=2 * B * d1 * d1 * d2 + 2 * B * d2 * d1 + 2 * B * d1 * nE,
        transcendentals=B * nE,
        bytes_accessed=(e1f.size * 4 + rf.size * 4
                        + wp2.size * cd_bytes + bn.size * 4
                        + grid[0] * et.size * cd_bytes     # E^T re-streamed per batch tile
                        + B * nE * out_bytes),             # score writeback (bf16 by default)
    )

    kernel = functools.partial(tucker_kernel, d1=d1, d2=d2, k_chunk=k_chunk,
                               compute_dtype=compute_dtype)

    out = pl.pallas_call(
        kernel,
        out_shape=jax.ShapeDtypeStruct((B, nE), out_dtype),
        grid_spec=pltpu.PrefetchScalarGridSpec(
            num_scalar_prefetch=0,
            grid=grid,
            in_specs=[
                pl.BlockSpec((tm, d1), lambda i, j: (i, 0)),                 # e1 tile
                pl.BlockSpec((tm, d2), lambda i, j: (i, 0)),                 # r tile
                _const_spec((d1, d2 * d1), single_buffer=single_buffer_consts),  # Wp2 (resident)
                _const_spec((4, d1), single_buffer=single_buffer_consts),        # folded BN params
                pl.BlockSpec((d1, tn), lambda i, j: (0, j)),                 # E^T tile (lane-dense)
            ],
            out_specs=pl.BlockSpec((tm, tn), lambda i, j: (i, j)),           # lane-dense output
            scratch_shapes=[pltpu.VMEM((tm, d1), compute_dtype)],            # cached y per batch tile
        ),
        compiler_params=pltpu.CompilerParams(
            # Entity axis must stay "arbitrary" (sequential) -- y_scratch reuse depends on it.
            dimension_semantics=("parallel", "arbitrary"),
            vmem_limit_bytes=int(budget),
        ),
        cost_estimate=cost,
    )(e1f, rf, wp2, bn, et)
    return out


def _sigmoid(x):
    return 1.0 / (1.0 + jnp.exp(-x))


def tucker_reference_f32(e1, r, W, E_weight, bn0_params, bn1_params, eps=1e-5):
    """Mirrors the PyTorch module's forward (eval mode), full f32, highest matmul precision."""
    B, d1 = e1.shape
    d2 = r.shape[1]
    g0, b0, m0, v0 = bn0_params
    x = (e1 - m0) / jnp.sqrt(v0 + eps) * g0 + b0
    W_mat = jnp.dot(r, W.reshape(d2, d1 * d1), precision=jax.lax.Precision.HIGHEST)
    W_mat = W_mat.reshape(B, d1, d1)
    h = jnp.einsum("bi,bij->bj", x, W_mat, precision=jax.lax.Precision.HIGHEST)
    g1, b1, m1, v1 = bn1_params
    y = (h - m1) / jnp.sqrt(v1 + eps) * g1 + b1
    logits = jnp.dot(y, E_weight.T, precision=jax.lax.Precision.HIGHEST)
    return _sigmoid(logits)


def tucker_reference_policy(e1, r, W, E_weight, bn0_params, bn1_params, compute_dtype, eps=1e-5):
    """Same math and dtype policy as the Pallas kernel (compute_dtype operands, f32 accumulation)."""
    B, d1 = e1.shape
    d2 = r.shape[1]
    s0, o0 = _fold_bn(bn0_params, eps)
    s1, o1 = _fold_bn(bn1_params, eps)
    x = e1 * s0 + o0
    wp2 = jnp.transpose(W, (1, 0, 2)).reshape(d1, d2 * d1).astype(compute_dtype)
    t = jnp.dot(x.astype(compute_dtype), wp2, preferred_element_type=jnp.float32)
    h = jnp.sum(r[:, :, None].astype(jnp.float32) * t.reshape(B, d2, d1), axis=1)
    y = h * s1 + o1
    logits = jnp.dot(y.astype(compute_dtype), E_weight.T.astype(compute_dtype),
                     preferred_element_type=jnp.float32)
    return _sigmoid(logits)


if __name__ == "__main__":
    # Small TuckER-like shapes, lane-aligned: entity dim d1=128, relation dim d2=32,
    # batch B=16, nE=256 candidate entities to score against.
    B, d1, d2, nE = 16, 128, 32, 256

    key = jax.random.PRNGKey(0)
    ks = jax.random.split(key, 12)

    e1 = 0.25 * jax.random.normal(ks[0], (B, d1), dtype=jnp.float32)     # entity embeddings
    r = 0.25 * jax.random.normal(ks[1], (B, d2), dtype=jnp.float32)      # relation embeddings
    W = jax.random.uniform(ks[2], (d2, d1, d1), jnp.float32, -1.0, 1.0)  # core tensor ~ U(-1, 1)
    E_weight = math.sqrt(2.0 / (nE + d1)) * jax.random.normal(           # xavier_normal_ init
        ks[3], (nE, d1), dtype=jnp.float32)

    bn0_params = (1.0 + 0.1 * jax.random.normal(ks[4], (d1,), jnp.float32),   # gamma
                  0.1 * jax.random.normal(ks[5], (d1,), jnp.float32),          # beta
                  0.1 * jax.random.normal(ks[6], (d1,), jnp.float32),          # running_mean
                  jax.random.uniform(ks[7], (d1,), jnp.float32, 0.5, 1.5))     # running_var
    bn1_params = (1.0 + 0.1 * jax.random.normal(ks[8], (d1,), jnp.float32),
                  0.1 * jax.random.normal(ks[9], (d1,), jnp.float32),
                  0.1 * jax.random.normal(ks[10], (d1,), jnp.float32),
                  jax.random.uniform(ks[11], (d1,), jnp.float32, 0.5, 1.5))

    # bf16 compute + bf16 scores (recommended: the entity sweep is writeback-bound on all gens).
    out_bf16 = jax.block_until_ready(
        tucker_forward(e1, r, W, E_weight, bn0_params, bn1_params,
                       compute_dtype=jnp.bfloat16, out_dtype=jnp.bfloat16))
    # f32 compute + f32 scores for a tighter semantic check.
    out_f32 = jax.block_until_ready(
        tucker_forward(e1, r, W, E_weight, bn0_params, bn1_params,
                       compute_dtype=jnp.float32, out_dtype=jnp.float32))

    ref_f32 = tucker_reference_f32(e1, r, W, E_weight, bn0_params, bn1_params)
    ref_bf16 = tucker_reference_policy(e1, r, W, E_weight, bn0_params, bn1_params, jnp.bfloat16)

    assert out_bf16.shape == (B, nE) and out_bf16.dtype == jnp.bfloat16
    assert out_f32.shape == (B, nE) and out_f32.dtype == jnp.float32

    out_bf16_f = out_bf16.astype(jnp.float32)
    # Kernel vs an XLA reference with the identical dtype policy (slack for bf16 output
    # quantization + approx reciprocal in the sigmoid epilogue).
    assert float(jnp.max(jnp.abs(out_bf16_f - ref_bf16))) < 1.5e-2, "bf16 kernel mismatch vs bf16 reference"
    # Semantic checks vs the full-f32 reference of the original module's forward.
    assert float(jnp.max(jnp.abs(out_f32 - ref_f32))) < 5e-2, "f32 kernel mismatch vs f32 reference"
    assert float(jnp.max(jnp.abs(out_bf16_f - ref_f32))) < 5e-2, "bf16 kernel drift vs f32 reference"

    print("KERNEL_OK")
</pallas_src>

<mosaic_0001>
module attributes {stable_mosaic.version = 11 : i64} {
  func.func @tucker_kernel(%arg0: i32, %arg1: i32, %arg2: memref<8x128xf32, #tpu.memory_space<vmem>>, %arg3: memref<8x32xf32, #tpu.memory_space<vmem>>, %arg4: memref<128x4096xbf16, #tpu.memory_space<vmem>>, %arg5: memref<4x128xf32, #tpu.memory_space<vmem>>, %arg6: memref<128x256xbf16, #tpu.memory_space<vmem>>, %arg7: memref<8x256xbf16, #tpu.memory_space<vmem>>, %arg8: memref<8x128xbf16, #tpu.memory_space<vmem>>) attributes {dimension_semantics = [#tpu.dimension_semantics<parallel>, #tpu.dimension_semantics<arbitrary>], iteration_bounds = array<i64: 2, 1>, scalar_prefetch = 0 : i64, scratch_operands = 1 : i64, tpu.core_type = #tpu.core_type<tc>, window_params = [{transform_indices = @transform_0, window_bounds = array<i64: 8, 128>}, {transform_indices = @transform_1, window_bounds = array<i64: 8, 32>}, {pipeline_mode = #tpu.pipeline_mode<synchronous>, transform_indices = @transform_2, window_bounds = array<i64: 128, 4096>}, {pipeline_mode = #tpu.pipeline_mode<synchronous>, transform_indices = @transform_3, window_bounds = array<i64: 4, 128>}, {transform_indices = @transform_4, window_bounds = array<i64: 128, 256>}, {transform_indices = @transform_5, window_bounds = array<i64: 8, 256>}]} {
    %c0_i32 = arith.constant 0 : i32
    %0 = arith.cmpi eq, %arg1, %c0_i32 : i32
    %1 = arith.extui %0 : i1 to i32
    %c0_i32_0 = arith.constant 0 : i32
    %2 = arith.cmpi ne, %1, %c0_i32_0 : i32
    scf.if %2 {
      %c0_8 = arith.constant 0 : index
      %c0_9 = arith.constant 0 : index
      %14 = vector.load %arg5[%c0_8, %c0_9] : memref<4x128xf32, #tpu.memory_space<vmem>>, vector<4x128xf32>
      %c0_10 = arith.constant 0 : index
      %c0_11 = arith.constant 0 : index
      %15 = vector.load %arg2[%c0_10, %c0_11] : memref<8x128xf32, #tpu.memory_space<vmem>>, vector<8x128xf32>
      %16 = vector.extract_strided_slice %14 {offsets = [0, 0], sizes = [1, 128], strides = [1, 1]} : vector<4x128xf32> to vector<1x128xf32>
      %17 = vector.broadcast %16 : vector<1x128xf32> to vector<8x128xf32>
      %18 = arith.mulf %15, %17 : vector<8x128xf32>
      %19 = vector.extract_strided_slice %14 {offsets = [1, 0], sizes = [1, 128], strides = [1, 1]} : vector<4x128xf32> to vector<1x128xf32>
      %20 = vector.broadcast %19 : vector<1x128xf32> to vector<8x128xf32>
      %21 = arith.addf %18, %20 : vector<8x128xf32>
      %c0_12 = arith.constant 0 : index
      %c0_13 = arith.constant 0 : index
      %22 = vector.load %arg3[%c0_12, %c0_13] : memref<8x32xf32, #tpu.memory_space<vmem>>, vector<8x32xf32>
      %23 = arith.truncf %21 : vector<8x128xf32> to vector<8x128xbf16>
      %cst_14 = arith.constant 0.000000e+00 : f32
      %24 = vector.broadcast %cst_14 : f32 to vector<8x128xf32>
      %c0_15 = arith.constant 0 : index
      %c0_16 = arith.constant 0 : index
      %25 = vector.load %arg4[%c0_15, %c0_16] : memref<128x4096xbf16, #tpu.memory_space<vmem>>, vector<128x4096xbf16>
      %cst_17 = arith.constant dense<0.000000e+00> : vector<8x4096xf32>
      %26 = tpu.matmul %23, %25, %cst_17 {dimension_numbers = #tpu.dot_dimension_numbers<[1], [0], [0], [1], [0, 0, 1, 1], [], []>} : vector<8x128xbf16>, vector<128x4096xbf16>, vector<8x4096xf32> -> vector<8x4096xf32>
      %27 = vector.shape_cast %26 : vector<8x4096xf32> to vector<8x32x128xf32>
      %28 = vector.shape_cast %22 : vector<8x32xf32> to vector<8x32x1xf32>
      %29 = vector.broadcast %28 : vector<8x32x1xf32> to vector<8x32x128xf32>
      %30 = arith.mulf %29, %27 : vector<8x32x128xf32>
      %cst_18 = arith.constant dense<0.000000e+00> : vector<8x128xf32>
      %31 = vector.multi_reduction <add>, %30, %cst_18 [1] : vector<8x32x128xf32> to vector<8x128xf32>
      %32 = arith.addf %24, %31 : vector<8x128xf32>
      %33 = vector.extract_strided_slice %14 {offsets = [2, 0], sizes = [1, 128], strides = [1, 1]} : vector<4x128xf32> to vector<1x128xf32>
      %34 = vector.broadcast %33 : vector<1x128xf32> to vector<8x128xf32>
      %35 = arith.mulf %32, %34 : vector<8x128xf32>
      %36 = vector.extract_strided_slice %14 {offsets = [3, 0], sizes = [1, 128], strides = [1, 1]} : vector<4x128xf32> to vector<1x128xf32>
      %37 = vector.broadcast %36 : vector<1x128xf32> to vector<8x128xf32>
      %38 = arith.addf %35, %37 : vector<8x128xf32>
      %39 = arith.truncf %38 : vector<8x128xf32> to vector<8x128xbf16>
      %c0_19 = arith.constant 0 : index
      %c0_20 = arith.constant 0 : index
      %40 = vector.load %arg8[%c0_19, %c0_20] : memref<8x128xbf16, #tpu.memory_space<vmem>>, vector<8x128xbf16>
      tpu.vector_store %arg8[%c0_19, %c0_20], %39 {strides = array<i32>} : memref<8x128xbf16, #tpu.memory_space<vmem>>, vector<8x128xbf16>,
    } else {
    }
    %c0 = arith.constant 0 : index
    %c0_1 = arith.constant 0 : index
    %3 = vector.load %arg8[%c0, %c0_1] : memref<8x128xbf16, #tpu.memory_space<vmem>>, vector<8x128xbf16>
    %c0_2 = arith.constant 0 : index
    %c0_3 = arith.constant 0 : index
    %4 = vector.load %arg6[%c0_2, %c0_3] : memref<128x256xbf16, #tpu.memory_space<vmem>>, vector<128x256xbf16>
    %cst = arith.constant dense<0.000000e+00> : vector<8x256xf32>
    %5 = tpu.matmul %3, %4, %cst {dimension_numbers = #tpu.dot_dimension_numbers<[1], [0], [0], [1], [0, 0, 1, 1], [], []>} : vector<8x128xbf16>, vector<128x256xbf16>, vector<8x256xf32> -> vector<8x256xf32>
    %cst_4 = arith.constant 0.000000e+00 : f32
    %6 = vector.broadcast %cst_4 : f32 to vector<8x256xf32>
    %7 = arith.subf %6, %5 : vector<8x256xf32>
    %8 = math.exp %7 : vector<8x256xf32>
    %cst_5 = arith.constant 1.000000e+00 : f32
    %9 = vector.broadcast %cst_5 : f32 to vector<8x256xf32>
    %10 = arith.addf %9, %8 : vector<8x256xf32>
    %11 = tpu.reciprocal %10 {approx = true} : vector<8x256xf32> -> vector<8x256xf32>
    %12 = arith.truncf %11 : vector<8x256xf32> to vector<8x256xbf16>
    %c0_6 = arith.constant 0 : index
    %c0_7 = arith.constant 0 : index
    %13 = vector.load %arg7[%c0_6, %c0_7] : memref<8x256xbf16, #tpu.memory_space<vmem>>, vector<8x256xbf16>
    tpu.vector_store %arg7[%c0_6, %c0_7], %12 {strides = array<i32>} : memref<8x256xbf16, #tpu.memory_space<vmem>>, vector<8x256xbf16>,
    return
  }
  func.func @transform_0(%arg0: i32, %arg1: i32) -> (i32, i32) {
    %c0_i32 = arith.constant 0 : i32
    %c0_i32_0 = arith.constant 0 : i32
    return %arg0, %c0_i32 : i32, i32
  }
  func.func @transform_1(%arg0: i32, %arg1: i32) -> (i32, i32) {
    %c0_i32 = arith.constant 0 : i32
    %c0_i32_0 = arith.constant 0 : i32
    return %arg0, %c0_i32 : i32, i32
  }
  func.func @transform_2(%arg0: i32, %arg1: i32) -> (i32, i32) {
    %c0_i32 = arith.constant 0 : i32
    %c0_i32_0 = arith.constant 0 : i32
    %c0_i32_1 = arith.constant 0 : i32
    return %c0_i32, %c0_i32_0 : i32, i32
  }
  func.func @transform_3(%arg0: i32, %arg1: i32) -> (i32, i32) {
    %c0_i32 = arith.constant 0 : i32
    %c0_i32_0 = arith.constant 0 : i32
    %c0_i32_1 = arith.constant 0 : i32
    return %c0_i32, %c0_i32_0 : i32, i32
  }
  func.func @transform_4(%arg0: i32, %arg1: i32) -> (i32, i32) {
    %c0_i32 = arith.constant 0 : i32
    %c0_i32_0 = arith.constant 0 : i32
    return %c0_i32, %arg1 : i32, i32
  }
  func.func @transform_5(%arg0: i32, %arg1: i32) -> (i32, i32) {
    %c0_i32 = arith.constant 0 : i32
    return %arg0, %arg1 : i32, i32
  }
}

</mosaic_0001>

<llo_original>
// kernel: tucker_forward.1
$region0: #{tucker_forward.1}
  #allocation0 [shape = 'u32[]', space=smem, size = 0x4, offset = 0x4, fixed_abs, tag = 'smem constant byte address 0x4 - core index']
  #allocation1 [shape = 'u32[144,128]{1,0:T(1,128)}', space=vmem, size = 0x12000, scoped, tag = 'internal scratch']
  #allocation2 [shape = 'bf16[8,128]{1,0:T(8,128)(2,1)}', space=vmem, size = 0x800, scoped, tag = 'scratch operand']
  %s0 = inlined_call_operand.vmem [shape: f32[16,128], index: 0, kind: input, shape index: {}]
  %s1 = inlined_call_operand.vmem [shape: f32[16,32], index: 1, kind: input, shape index: {}]
  %s2 = inlined_call_operand.vmem [shape: bf16[128,4096], index: 2, kind: input, shape index: {}]
  %s3 = inlined_call_operand.vmem [shape: f32[4,128], index: 3, kind: input, shape index: {}]
  %s4 = inlined_call_operand.vmem [shape: bf16[128,256], index: 4, kind: input, shape index: {}]
  %s5 = inlined_call_operand.hbm [shape: bf16[16,256], index: 5, kind: output, shape index: {}]
  %s6 = sld [smem:[#allocation0]]
  $region57: #{tucker_forward.1} parent=0
    _
  %s8 = ssub.s32 1, %s6
  %s9 = scalar_select 0, %s8, %s6
  $region1: #{tucker_forward.1} parent=0
    #allocation3 [shape = 'u8[8192]{0}', space=vmem, size = 0x2000, scoped, tag = 'output window, operand 0']
    #allocation4 [shape = 's32[2]{0}', space=sflag, size = 0x8, scoped, tag = 'scoped memory for tucker_forward.1']
    %10 = vsyncpa [#allocation4], 0
    %s11 = scalar_lea.sflag [#allocation4], 1
    %12 = vsyncpa %s11, 0
    loop: start=0, step=1, limit=4
    $region2: #{tucker_forward.1} parent=1 // loop_pre_header
      _
    $region3: #{tucker_forward.1} parent=1 // loop_header
      %s14 = sphi 0, %s18
      %p15 = scmp.ge.s32.totalorder %s14, 4
      %s21 = sphi 0, %s33
      %s22 = sphi 0, %s29
      %s23 = sphi 0, %s21
      %s24 = sphi 0, %s22
      %s25 = sphi 0, %s23
      %s26 = sphi 0, %s24
      %s36 = sphi 0, %s38
      %s39 = sphi 0, %s36
      %s40 = sphi 0, %s39
      %s56 = sphi 0, %s40
      %s62 = sphi 0, %s64
      %s65 = sphi 0, %s62
      %s66 = sphi 0, %s65
      %s82 = sphi 0, %s66
      %s86 = sphi 0, %s86
      %s88 = sphi 0, %s86
      %s89 = sphi 0, %s88
      %s103 = sphi 0, %s89
      %s107 = sphi 0, %s107
      %s109 = sphi 0, %s107
      %s110 = sphi 0, %s109
      %s124 = sphi 0, %s110
      %s130 = sphi 0, %s132
      %s133 = sphi 0, %s130
      %s134 = sphi 0, %s133
      %s150 = sphi 0, %s134
      %s158 = sphi 0, %s160
      %s161 = sphi 0, %s158
      %s162 = sphi 0, %s161
      %s178 = sphi 0, %s162
    $region4: #{tucker_forward.1} parent=1 // loop_header_branch
      %17 = sbr.rel (%p15) target = $region8
    $region5: #{tucker_forward.1} parent=1 // loop_body
      %s19 = ssub.s32 %s14, 1
      %s20 = ssub.s32 %s14, 2
      %s27 = sadd.s32 1, %s22
      %p28 = scmp.ge.s32.totalorder %s27, 1
      %s29 = scalar_select %p28, 0, %s27
      %s30 = sadd.s32 1, %s21
      %s31 = scalar_select %p28, %s30, %s21
      %p32 = scmp.ge.s32.totalorder %s31, 2
      %s33 = scalar_select %p32, 0, %s31
      %s34 = ssub.s32 %s21, %s33
      %p35 = scmp.eq.s32.totalorder %s34, 0
      %s37 = sadd.s32 %s36, 1
      %s38 = scalar_select %p35, %s36, %s37
      %p41 = pneg %p35
      %p42 = scmp.eq.s32.totalorder %s14, 1
      %p43 = por %p41, %p42
      %p44 = scmp.ne.s32.totalorder %s36, %s39
      %p45 = scmp.eq.s32.totalorder %s14, 0
      %p46 = por %p44, %p45
      %p47 = scmp.ne.s32.totalorder %s36, %s39
      %p48 = scmp.eq.s32.totalorder %s19, 1
      %p49 = por %p47, %p48
      %p50 = scmp.ne.s32.totalorder %s39, %s40
      %p51 = scmp.eq.s32.totalorder %s19, 0
      %p52 = por %p50, %p51
      %p53 = scmp.ne.s32.totalorder %s39, %s40
      %p54 = scmp.eq.s32.totalorder %s20, 1
      %p55 = por %p53, %p54
      %p57 = scmp.ne.s32.totalorder %s40, %s56
      %p58 = scmp.eq.s32.totalorder %s20, 0
      %p59 = por %p57, %p58
      %s60 = ssub.s32 %s21, %s33
      %p61 = scmp.eq.s32.totalorder %s60, 0
      %s63 = sadd.s32 %s62, 1
      %s64 = scalar_select %p61, %s62, %s63
      %p67 = pneg %p61
      %p68 = scmp.eq.s32.totalorder %s14, 1
      %p69 = por %p67, %p68
      %p70 = scmp.ne.s32.totalorder %s62, %s65
      %p71 = scmp.eq.s32.totalorder %s14, 0
      %p72 = por %p70, %p71
      %p73 = scmp.ne.s32.totalorder %s62, %s65
      %p74 = scmp.eq.s32.totalorder %s19, 1
      %p75 = por %p73, %p74
      %p76 = scmp.ne.s32.totalorder %s65, %s66
      %p77 = scmp.eq.s32.totalorder %s19, 0
      %p78 = por %p76, %p77
      %p79 = scmp.ne.s32.totalorder %s65, %s66
      %p80 = scmp.eq.s32.totalorder %s20, 1
      %p81 = por %p79, %p80
      %p83 = scmp.ne.s32.totalorder %s66, %s82
      %p84 = scmp.eq.s32.totalorder %s20, 0
      %p85 = por %p83, %p84
      %s87 = sadd.s32 %s86, 1
      %p90 = scmp.eq.s32.totalorder %s14, 1
      %p91 = scmp.ne.s32.totalorder %s86, %s88
      %p92 = scmp.eq.s32.totalorder %s14, 0
      %p93 = por %p91, %p92
      %p94 = scmp.ne.s32.totalorder %s86, %s88
      %p95 = scmp.eq.s32.totalorder %s19, 1
      %p96 = por %p94, %p95
      %p97 = scmp.ne.s32.totalorder %s88, %s89
      %p98 = scmp.eq.s32.totalorder %s19, 0
      %p99 = por %p97, %p98
      %p100 = scmp.ne.s32.totalorder %s88, %s89
      %p101 = scmp.eq.s32.totalorder %s20, 1
      %p102 = por %p100, %p101
      %p104 = scmp.ne.s32.totalorder %s89, %s103
      %p105 = scmp.eq.s32.totalorder %s20, 0
      %p106 = por %p104, %p105
      %s108 = sadd.s32 %s107, 1
      %p111 = scmp.eq.s32.totalorder %s14, 1
      %p112 = scmp.ne.s32.totalorder %s107, %s109
      %p113 = scmp.eq.s32.totalorder %s14, 0
      %p114 = por %p112, %p113
      %p115 = scmp.ne.s32.totalorder %s107, %s109
      %p116 = scmp.eq.s32.totalorder %s19, 1
      %p117 = por %p115, %p116
      %p118 = scmp.ne.s32.totalorder %s109, %s110
      %p119 = scmp.eq.s32.totalorder %s19, 0
      %p120 = por %p118, %p119
      %p121 = scmp.ne.s32.totalorder %s109, %s110
      %p122 = scmp.eq.s32.totalorder %s20, 1
      %p123 = por %p121, %p122
      %p125 = scmp.ne.s32.totalorder %s110, %s124
      %p126 = scmp.eq.s32.totalorder %s20, 0
      %p127 = por %p125, %p126
      %s128 = ssub.s32 %s22, %s29
      %p129 = scmp.eq.s32.totalorder %s128, 0
      %s131 = sadd.s32 %s130, 1
      %s132 = scalar_select %p129, %s130, %s131
      %p135 = pneg %p129
      %p136 = scmp.eq.s32.totalorder %s14, 1
      %p137 = por %p135, %p136
      %p138 = scmp.ne.s32.totalorder %s130, %s133
      %p139 = scmp.eq.s32.totalorder %s14, 0
      %p140 = por %p138, %p139
      %p141 = scmp.ne.s32.totalorder %s130, %s133
      %p142 = scmp.eq.s32.totalorder %s19, 1
      %p143 = por %p141, %p142
      %p144 = scmp.ne.s32.totalorder %s133, %s134
      %p145 = scmp.eq.s32.totalorder %s19, 0
      %p146 = por %p144, %p145
      %p147 = scmp.ne.s32.totalorder %s133, %s134
      %p148 = scmp.eq.s32.totalorder %s20, 1
      %p149 = por %p147, %p148
      %p151 = scmp.ne.s32.totalorder %s134, %s150
      %p152 = scmp.eq.s32.totalorder %s20, 0
      %p153 = por %p151, %p152
      %s154 = ssub.s32 %s21, %s33
      %s155 = ssub.s32 %s22, %s29
      %s156 = sor.u32 %s154, %s155
      %p157 = scmp.eq.s32.totalorder %s156, 0
      %s159 = sadd.s32 %s158, 1
      %s160 = scalar_select %p157, %s158, %s159
      %p163 = pneg %p157
      %p164 = scmp.eq.s32.totalorder %s14, 1
      %p165 = por %p163, %p164
      %p166 = scmp.ne.s32.totalorder %s158, %s161
      %p167 = scmp.eq.s32.totalorder %s14, 0
      %p168 = por %p166, %p167
      %p169 = scmp.ne.s32.totalorder %s158, %s161
      %p170 = scmp.eq.s32.totalorder %s19, 1
      %p171 = por %p169, %p170
      %p172 = scmp.ne.s32.totalorder %s161, %s162
      %p173 = scmp.eq.s32.totalorder %s19, 0
      %p174 = por %p172, %p173
      %p175 = scmp.ne.s32.totalorder %s161, %s162
      %p176 = scmp.eq.s32.totalorder %s20, 1
      %p177 = por %p175, %p176
      %p179 = scmp.ne.s32.totalorder %s162, %s178
      %p180 = scmp.eq.s32.totalorder %s20, 0
      %p181 = por %p179, %p180
      %p182 = scmp.le.s32.totalorder 1, %s14
      %p183 = scmp.lt.s32.totalorder %s14, 3
      %p184 = pnand %p182, %p183
      %p185 = pneg %p184
      // Predicated region
      $region9: #{tucker_forward.1} parent=5 // pred_check
        _
      $region10: #{tucker_forward.1} parent=5 // pred_check_branch
        %187 = sbr.rel (%p184) target = $region12
      $region11: #{tucker_forward.1} parent=5 // pred_region
        %s188 = ssub.s32 %s14, 1
        // Predicated region
        $region13: #{tucker_forward.1} parent=11 // pred_check
          %p189 = pneg %p99
        $region14: #{tucker_forward.1} parent=11 // pred_check_branch
          %191 = sbr.rel (%p189) target = $region16
        $region15: #{tucker_forward.1} parent=11 // pred_region
          _
        $region16: #{tucker_forward.1} parent=11 // pred_fallthru
          _
        // Predicated region
        $region17: #{tucker_forward.1} parent=11 // pred_check
          %p192 = pneg %p120
        $region18: #{tucker_forward.1} parent=11 // pred_check_branch
          %194 = sbr.rel (%p192) target = $region20
        $region19: #{tucker_forward.1} parent=11 // pred_region
          _
        $region20: #{tucker_forward.1} parent=11 // pred_fallthru
          _
        // Predicated region
        $region21: #{tucker_forward.1} parent=11 // pred_check
          %p195 = pneg %p146
        $region22: #{tucker_forward.1} parent=11 // pred_check_branch
          %197 = sbr.rel (%p195) target = $region24
        $region23: #{tucker_forward.1} parent=11 // pred_region
          %s198 = smul.u32 2, %s24
          %p199 = scmp.lt.s32.totalorder %s198, 1
          %s200 = scalar_select %p199, %s198, 1
          %s201 = smul.addr %s200, 4
          %s202 = scalar_lea.vmem %s4, %s201
          %s203 = smul.u32 2, %s24
        $region24: #{tucker_forward.1} parent=11 // pred_fallthru
          _
      $region12: #{tucker_forward.1} parent=5 // pred_fallthru
        _
      %p204 = scmp.lt.s32.totalorder %s14, 2
      // Predicated region
      $region25: #{tucker_forward.1} parent=5 // pred_check
        %p205 = pneg %p204
      $region26: #{tucker_forward.1} parent=5 // pred_check_branch
        %207 = sbr.rel (%p205) target = $region28
      $region27: #{tucker_forward.1} parent=5 // pred_region
        // Predicated region
        $region29: #{tucker_forward.1} parent=27 // pred_check
          %p208 = pneg %p46
        $region30: #{tucker_forward.1} parent=27 // pred_check_branch
          %210 = sbr.rel (%p208) target = $region32
        $region31: #{tucker_forward.1} parent=27 // pred_region
          %p211 = scmp.lt.s32.totalorder %s21, 1
          %s212 = scalar_select %p211, %s21, 1
          %s213 = smul.addr %s212, 8
          %s214 = scalar_lea.vmem %s0, %s213
        $region32: #{tucker_forward.1} parent=27 // pred_fallthru
          _
        // Predicated region
        $region33: #{tucker_forward.1} parent=27 // pred_check
          %p215 = pneg %p72
        $region34: #{tucker_forward.1} parent=27 // pred_check_branch
          %217 = sbr.rel (%p215) target = $region36
        $region35: #{tucker_forward.1} parent=27 // pred_region
          %p218 = scmp.lt.s32.totalorder %s21, 1
          %s219 = scalar_select %p218, %s21, 1
          %s220 = smul.addr %s219, 8
          %s221 = scalar_lea.vmem %s1, %s220
        $region36: #{tucker_forward.1} parent=27 // pred_fallthru
          _
      $region28: #{tucker_forward.1} parent=5 // pred_fallthru
        _
      %p222 = scmp.le.s32.totalorder 1, %s14
      %p223 = scmp.lt.s32.totalorder %s14, 3
      %p224 = pnand %p222, %p223
      %p225 = pneg %p224
      // Predicated region
      $region37: #{tucker_forward.1} parent=5 // pred_check
        _
      $region38: #{tucker_forward.1} parent=5 // pred_check_branch
        %227 = sbr.rel (%p224) target = $region40
      $region39: #{tucker_forward.1} parent=5 // pred_region
        %s228 = ssub.s32 %s14, 1
        %p229 = scmp.lt.s32.totalorder %s23, 1
        %s230 = scalar_select %p229, %s23, 1
        %s231 = smul.addr %s230, 8
        %s232 = scalar_lea.vmem %s0, %s231
        %p233 = pneg %p52
        %p234 = pneg %p49
        %p235 = scmp.lt.s32.totalorder %s23, 1
        %s236 = scalar_select %p235, %s23, 1
        %s237 = smul.addr %s236, 8
        %s238 = scalar_lea.vmem %s1, %s237
        %p239 = pneg %p78
        %p240 = pneg %p75
        %p241 = pneg %p99
        %p242 = pneg %p96
        %p243 = pneg %p120
        %p244 = pneg %p117
        %s245 = smul.u32 2, %s24
        %p246 = scmp.lt.s32.totalorder %s245, 1
        %s247 = scalar_select %p246, %s245, 1
        %s248 = smul.addr %s247, 4
        %s249 = scalar_lea.vmem %s4, %s248
        %p250 = pneg %p146
        %p251 = pneg %p143
        %p252 = pneg %p174
        %p253 = pneg %p171
        %s254 = sand.u32 %s161, 1
        %s255 = scalar_lea.sflag [#allocation4], %s254
        %s256 = sand.u32 %s161, 1
        %s257 = smul.addr %s256, 8
        %s258 = scalar_lea.vmem [#allocation3], %s257
        %p259 = scmp.lt.s32.totalorder %s23, 1
        %s260 = scalar_select %p259, %s23, 1
        %s261 = smul.addr %s260, 8
        %s262 = scalar_lea.vmem %s0, %s261
        %p263 = scmp.lt.s32.totalorder %s23, 1
        %s264 = scalar_select %p263, %s23, 1
        %s265 = smul.addr %s264, 8
        %s266 = scalar_lea.vmem %s1, %s265
        %s267 = smul.u32 2, %s24
        %p268 = scmp.lt.s32.totalorder %s267, 1
        %s269 = scalar_select %p268, %s267, 1
        %s270 = smul.addr %s269, 4
        %s271 = scalar_lea.vmem %s4, %s270
        %s272 = smul.u32 2, %s24
        %s273 = smul.u32 2, %s24
        %p275 = scmp.eq.s32.totalorder %s24, 0
        // Predicated region
        $region41: #{tucker_forward.1} parent=39 // pred_check
          %p276 = pneg %p275
        $region42: #{tucker_forward.1} parent=39 // pred_check_branch
          %278 = sbr.rel (%p276) target = $region44
        $region43: #{tucker_forward.1} parent=39 // pred_region
          %v279 = vld [vmem:[%s3] sm:$0xf]
          %v280 = vld [vmem:[%s262] sm:$0xff]
          %v281 = vlaneseq
          %v282 = vshrl.u32 %v281, 7
          %v283 = vsub.s32 0, %v282
          %v284 = vrot.slane %v279, %v283
          %v285 = vmul.f32 %v280, %v284
          %v286 = vlaneseq
          %v287 = vshrl.u32 %v286, 7
          %v288 = vsub.s32 1, %v287
          %v289 = vrot.slane %v279, %v288
          %v290 = vadd.f32 %v285, %v289
          %v291 = vld [vmem:[%s266] sm:$0xff]
          %v292 = vpack.c.bf16 %v290, %v290
          %v293 = vld [vmem:[%s2] sm:$0xff]
          %v294 = vld [vmem:[%s2 + $0x8] sm:$0xff]
          %v295 = vld [vmem:[%s2 + $0x10] sm:$0xff]
          %v296 = vld [vmem:[%s2 + $0x18] sm:$0xff]
          %v297 = vld [vmem:[%s2 + $0x20] sm:$0xff]
          %v298 = vld [vmem:[%s2 + $0x28] sm:$0xff]
          %v299 = vld [vmem:[%s2 + $0x30] sm:$0xff]
          %v300 = vld [vmem:[%s2 + $0x38] sm:$0xff]
          %v301 = vld [vmem:[%s2 + $0x40] sm:$0xff]
          %v302 = vld [vmem:[%s2 + $0x48] sm:$0xff]
          %v303 = vld [vmem:[%s2 + $0x50] sm:$0xff]
          %v304 = vld [vmem:[%s2 + $0x58] sm:$0xff]
          %v305 = vld [vmem:[%s2 + $0x60] sm:$0xff]
          %v306 = vld [vmem:[%s2 + $0x68] sm:$0xff]
          %v307 = vld [vmem:[%s2 + $0x70] sm:$0xff]
          %v308 = vld [vmem:[%s2 + $0x78] sm:$0xff]
          %v309 = vld [vmem:[%s2 + $0x80] sm:$0xff]
          %v310 = vld [vmem:[%s2 + $0x88] sm:$0xff]
          %v311 = vld [vmem:[%s2 + $0x90] sm:$0xff]
          %v312 = vld [vmem:[%s2 + $0x98] sm:$0xff]
          %v313 = vld [vmem:[%s2 + $0xa0] sm:$0xff]
          %v314 = vld [vmem:[%s2 + $0xa8] sm:$0xff]
          %v315 = vld [vmem:[%s2 + $0xb0] sm:$0xff]
          %v316 = vld [vmem:[%s2 + $0xb8] sm:$0xff]
          %v317 = vld [vmem:[%s2 + $0xc0] sm:$0xff]
          %v318 = vld [vmem:[%s2 + $0xc8] sm:$0xff]
          %v319 = vld [vmem:[%s2 + $0xd0] sm:$0xff]
          %v320 = vld [vmem:[%s2 + $0xd8] sm:$0xff]
          %v321 = vld [vmem:[%s2 + $0xe0] sm:$0xff]
          %v322 = vld [vmem:[%s2 + $0xe8] sm:$0xff]
          %v323 = vld [vmem:[%s2 + $0xf0] sm:$0xff]
          %v324 = vld [vmem:[%s2 + $0xf8] sm:$0xff]
          %v325 = vld [vmem:[%s2 + $0x100] sm:$0xff]
          %v326 = vld [vmem:[%s2 + $0x108] sm:$0xff]
          %v327 = vld [vmem:[%s2 + $0x110] sm:$0xff]
          %v328 = vld [vmem:[%s2 + $0x118] sm:$0xff]
          %v329 = vld [vmem:[%s2 + $0x120] sm:$0xff]
          %v330 = vld [vmem:[%s2 + $0x128] sm:$0xff]
          %v331 = vld [vmem:[%s2 + $0x130] sm:$0xff]
          %v332 = vld [vmem:[%s2 + $0x138] sm:$0xff]
          %v333 = vld [vmem:[%s2 + $0x140] sm:$0xff]
          %v334 = vld [vmem:[%s2 + $0x148] sm:$0xff]
          %v335 = vld [vmem:[%s2 + $0x150] sm:$0xff]
          %v336 = vld [vmem:[%s2 + $0x158] sm:$0xff]
          %v337 = vld [vmem:[%s2 + $0x160] sm:$0xff]
          %v338 = vld [vmem:[%s2 + $0x168] sm:$0xff]
          %v339 = vld [vmem:[%s2 + $0x170] sm:$0xff]
          %v340 = vld [vmem:[%s2 + $0x178] sm:$0xff]
          %v341 = vld [vmem:[%s2 + $0x180] sm:$0xff]
          %v342 = vld [vmem:[%s2 + $0x188] sm:$0xff]
          %v343 = vld [vmem:[%s2 + $0x190] sm:$0xff]
          %v344 = vld [vmem:[%s2 + $0x198] sm:$0xff]
          %v345 = vld [vmem:[%s2 + $0x1a0] sm:$0xff]
          %v346 = vld [vmem:[%s2 + $0x1a8] sm:$0xff]
          %v347 = vld [vmem:[%s2 + $0x1b0] sm:$0xff]
          %v348 = vld [vmem:[%s2 + $0x1b8] sm:$0xff]
          %v349 = vld [vmem:[%s2 + $0x1c0] sm:$0xff]
          %v350 = vld [vmem:[%s2 + $0x1c8] sm:$0xff]
          %v351 = vld [vmem:[%s2 + $0x1d0] sm:$0xff]
          %v352 = vld [vmem:[%s2 + $0x1d8] sm:$0xff]
          %v353 = vld [vmem:[%s2 + $0x1e0] sm:$0xff]
          %v354 = vld [vmem:[%s2 + $0x1e8] sm:$0xff]
          %v355 = vld [vmem:[%s2 + $0x1f0] sm:$0xff]
          %v356 = vld [vmem:[%s2 + $0x1f8] sm:$0xff]
          %v357 = vld [vmem:[%s2 + $0x200] sm:$0xff]
          %v358 = vld [vmem:[%s2 + $0x208] sm:$0xff]
          %v359 = vld [vmem:[%s2 + $0x210] sm:$0xff]
          %v360 = vld [vmem:[%s2 + $0x218] sm:$0xff]
          %v361 = vld [vmem:[%s2 + $0x220] sm:$0xff]
          %v362 = vld [vmem:[%s2 + $0x228] sm:$0xff]
          %v363 = vld [vmem:[%s2 + $0x230] sm:$0xff]
          %v364 = vld [vmem:[%s2 + $0x238] sm:$0xff]
          %v365 = vld [vmem:[%s2 + $0x240] sm:$0xff]
          %v366 = vld [vmem:[%s2 + $0x248] sm:$0xff]
          %v367 = vld [vmem:[%s2 + $0x250] sm:$0xff]
          %v368 = vld [vmem:[%s2 + $0x258] sm:$0xff]
          %v369 = vld [vmem:[%s2 + $0x260] sm:$0xff]
          %v370 = vld [vmem:[%s2 + $0x268] sm:$0xff]
          %v371 = vld [vmem:[%s2 + $0x270] sm:$0xff]
          %v372 = vld [vmem:[%s2 + $0x278] sm:$0xff]
          %v373 = vld [vmem:[%s2 + $0x280] sm:$0xff]
          %v374 = vld [vmem:[%s2 + $0x288] sm:$0xff]
          %v375 = vld [vmem:[%s2 + $0x290] sm:$0xff]
          %v376 = vld [vmem:[%s2 + $0x298] sm:$0xff]
          %v377 = vld [vmem:[%s2 + $0x2a0] sm:$0xff]
          %v378 = vld [vmem:[%s2 + $0x2a8] sm:$0xff]
          %v379 = vld [vmem:[%s2 + $0x2b0] sm:$0xff]
          %v380 = vld [vmem:[%s2 + $0x2b8] sm:$0xff]
          %v381 = vld [vmem:[%s2 + $0x2c0] sm:$0xff]
          %v382 = vld [vmem:[%s2 + $0x2c8] sm:$0xff]
          %v383 = vld [vmem:[%s2 + $0x2d0] sm:$0xff]
          %v384 = vld [vmem:[%s2 + $0x2d8] sm:$0xff]
          %v385 = vld [vmem:[%s2 + $0x2e0] sm:$0xff]
          %v386 = vld [vmem:[%s2 + $0x2e8] sm:$0xff]
          %v387 = vld [vmem:[%s2 + $0x2f0] sm:$0xff]
          %v388 = vld [vmem:[%s2 + $0x2f8] sm:$0xff]
          %v389 = vld [vmem:[%s2 + $0x300] sm:$0xff]
          %v390 = vld [vmem:[%s2 + $0x308] sm:$0xff]
          %v391 = vld [vmem:[%s2 + $0x310] sm:$0xff]
          %v392 = vld [vmem:[%s2 + $0x318] sm:$0xff]
          %v393 = vld [vmem:[%s2 + $0x320] sm:$0xff]
          %v394 = vld [vmem:[%s2 + $0x328] sm:$0xff]
          %v395 = vld [vmem:[%s2 + $0x330] sm:$0xff]
          %v396 = vld [vmem:[%s2 + $0x338] sm:$0xff]
          %v397 = vld [vmem:[%s2 + $0x340] sm:$0xff]
          %v398 = vld [vmem:[%s2 + $0x348] sm:$0xff]
          %v399 = vld [vmem:[%s2 + $0x350] sm:$0xff]
          %v400 = vld [vmem:[%s2 + $0x358] sm:$0xff]
          %v401 = vld [vmem:[%s2 + $0x360] sm:$0xff]
          %v402 = vld [vmem:[%s2 + $0x368] sm:$0xff]
          %v403 = vld [vmem:[%s2 + $0x370] sm:$0xff]
          %v404 = vld [vmem:[%s2 + $0x378] sm:$0xff]
          %v405 = vld [vmem:[%s2 + $0x380] sm:$0xff]
          %v406 = vld [vmem:[%s2 + $0x388] sm:$0xff]
          %v407 = vld [vmem:[%s2 + $0x390] sm:$0xff]
          %v408 = vld [vmem:[%s2 + $0x398] sm:$0xff]
          %v409 = vld [vmem:[%s2 + $0x3a0] sm:$0xff]
          %v410 = vld [vmem:[%s2 + $0x3a8] sm:$0xff]
          %v411 = vld [vmem:[%s2 + $0x3b0] sm:$0xff]
          %v412 = vld [vmem:[%s2 + $0x3b8] sm:$0xff]
          %v413 = vld [vmem:[%s2 + $0x3c0] sm:$0xff]
          %v414 = vld [vmem:[%s2 + $0x3c8] sm:$0xff]
          %v415 = vld [vmem:[%s2 + $0x3d0] sm:$0xff]
          %v416 = vld [vmem:[%s2 + $0x3d8] sm:$0xff]
          %v417 = vld [vmem:[%s2 + $0x3e0] sm:$0xff]
          %v418 = vld [vmem:[%s2 + $0x3e8] sm:$0xff]
          %v419 = vld [vmem:[%s2 + $0x3f0] sm:$0xff]
          %v420 = vld [vmem:[%s2 + $0x3f8] sm:$0xff]
          %v421 = vld [vmem:[%s2 + $0x400] sm:$0xff]
          %v422 = vld [vmem:[%s2 + $0x408] sm:$0xff]
          %v423 = vld [vmem:[%s2 + $0x410] sm:$0xff]
          %v424 = vld [vmem:[%s2 + $0x418] sm:$0xff]
          %v425 = vld [vmem:[%s2 + $0x420] sm:$0xff]
          %v426 = vld [vmem:[%s2 + $0x428] sm:$0xff]
          %v427 = vld [vmem:[%s2 + $0x430] sm:$0xff]
          %v428 = vld [vmem:[%s2 + $0x438] sm:$0xff]
          %v429 = vld [vmem:[%s2 + $0x440] sm:$0xff]
          %v430 = vld [vmem:[%s2 + $0x448] sm:$0xff]
          %v431 = vld [vmem:[%s2 + $0x450] sm:$0xff]
          %v432 = vld [vmem:[%s2 + $0x458] sm:$0xff]
          %v433 = vld [vmem:[%s2 + $0x460] sm:$0xff]
          %v434 = vld [vmem:[%s2 + $0x468] sm:$0xff]
          %v435 = vld [vmem:[%s2 + $0x470] sm:$0xff]
          %v436 = vld [vmem:[%s2 + $0x478] sm:$0xff]
          %v437 = vld [vmem:[%s2 + $0x480] sm:$0xff]
          %v438 = vld [vmem:[%s2 + $0x488] sm:$0xff]
          %v439 = vld [vmem:[%s2 + $0x490] sm:$0xff]
          %v440 = vld [vmem:[%s2 + $0x498] sm:$0xff]
          %v441 = vld [vmem:[%s2 + $0x4a0] sm:$0xff]
          %v442 = vld [vmem:[%s2 + $0x4a8] sm:$0xff]
          %v443 = vld [vmem:[%s2 + $0x4b0] sm:$0xff]
          %v444 = vld [vmem:[%s2 + $0x4b8] sm:$0xff]
          %v445 = vld [vmem:[%s2 + $0x4c0] sm:$0xff]
          %v446 = vld [vmem:[%s2 + $0x4c8] sm:$0xff]
          %v447 = vld [vmem:[%s2 + $0x4d0] sm:$0xff]
          %v448 = vld [vmem:[%s2 + $0x4d8] sm:$0xff]
          %v449 = vld [vmem:[%s2 + $0x4e0] sm:$0xff]
          %v450 = vld [vmem:[%s2 + $0x4e8] sm:$0xff]
          %v451 = vld [vmem:[%s2 + $0x4f0] sm:$0xff]
          %v452 = vld [vmem:[%s2 + $0x4f8] sm:$0xff]
          %v453 = vld [vmem:[%s2 + $0x500] sm:$0xff]
          %v454 = vld [vmem:[%s2 + $0x508] sm:$0xff]
          %v455 = vld [vmem:[%s2 + $0x510] sm:$0xff]
          %v456 = vld [vmem:[%s2 + $0x518] sm:$0xff]
          %v457 = vld [vmem:[%s2 + $0x520] sm:$0xff]
          %v458 = vld [vmem:[%s2 + $0x528] sm:$0xff]
          %v459 = vld [vmem:[%s2 + $0x530] sm:$0xff]
          %v460 = vld [vmem:[%s2 + $0x538] sm:$0xff]
          %v461 = vld [vmem:[%s2 + $0x540] sm:$0xff]
          %v462 = vld [vmem:[%s2 + $0x548] sm:$0xff]
          %v463 = vld [vmem:[%s2 + $0x550] sm:$0xff]
          %v464 = vld [vmem:[%s2 + $0x558] sm:$0xff]
          %v465 = vld [vmem:[%s2 + $0x560] sm:$0xff]
          %v466 = vld [vmem:[%s2 + $0x568] sm:$0xff]
          %v467 = vld [vmem:[%s2 + $0x570] sm:$0xff]
          %v468 = vld [vmem:[%s2 + $0x578] sm:$0xff]
          %v469 = vld [vmem:[%s2 + $0x580] sm:$0xff]
          %v470 = vld [vmem:[%s2 + $0x588] sm:$0xff]
          %v471 = vld [vmem:[%s2 + $0x590] sm:$0xff]
          %v472 = vld [vmem:[%s2 + $0x598] sm:$0xff]
          %v473 = vld [vmem:[%s2 + $0x5a0] sm:$0xff]
          %v474 = vld [vmem:[%s2 + $0x5a8] sm:$0xff]
          %v475 = vld [vmem:[%s2 + $0x5b0] sm:$0xff]
          %v476 = vld [vmem:[%s2 + $0x5b8] sm:$0xff]
          %v477 = vld [vmem:[%s2 + $0x5c0] sm:$0xff]
          %v478 = vld [vmem:[%s2 + $0x5c8] sm:$0xff]
          %v479 = vld [vmem:[%s2 + $0x5d0] sm:$0xff]
          %v480 = vld [vmem:[%s2 + $0x5d8] sm:$0xff]
          %v481 = vld [vmem:[%s2 + $0x5e0] sm:$0xff]
          %v482 = vld [vmem:[%s2 + $0x5e8] sm:$0xff]
          %v483 = vld [vmem:[%s2 + $0x5f0] sm:$0xff]
          %v484 = vld [vmem:[%s2 + $0x5f8] sm:$0xff]
          %v485 = vld [vmem:[%s2 + $0x600] sm:$0xff]
          %v486 = vld [vmem:[%s2 + $0x608] sm:$0xff]
          %v487 = vld [vmem:[%s2 + $0x610] sm:$0xff]
          %v488 = vld [vmem:[%s2 + $0x618] sm:$0xff]
          %v489 = vld [vmem:[%s2 + $0x620] sm:$0xff]
          %v490 = vld [vmem:[%s2 + $0x628] sm:$0xff]
          %v491 = vld [vmem:[%s2 + $0x630] sm:$0xff]
          %v492 = vld [vmem:[%s2 + $0x638] sm:$0xff]
          %v493 = vld [vmem:[%s2 + $0x640] sm:$0xff]
          %v494 = vld [vmem:[%s2 + $0x648] sm:$0xff]
          %v495 = vld [vmem:[%s2 + $0x650] sm:$0xff]
          %v496 = vld [vmem:[%s2 + $0x658] sm:$0xff]
          %v497 = vld [vmem:[%s2 + $0x660] sm:$0xff]
          %v498 = vld [vmem:[%s2 + $0x668] sm:$0xff]
          %v499 = vld [vmem:[%s2 + $0x670] sm:$0xff]
          %v500 = vld [vmem:[%s2 + $0x678] sm:$0xff]
          %v501 = vld [vmem:[%s2 + $0x680] sm:$0xff]
          %v502 = vld [vmem:[%s2 + $0x688] sm:$0xff]
          %v503 = vld [vmem:[%s2 + $0x690] sm:$0xff]
          %v504 = vld [vmem:[%s2 + $0x698] sm:$0xff]
          %v505 = vld [vmem:[%s2 + $0x6a0] sm:$0xff]
          %v506 = vld [vmem:[%s2 + $0x6a8] sm:$0xff]
          %v507 = vld [vmem:[%s2 + $0x6b0] sm:$0xff]
          %v508 = vld [vmem:[%s2 + $0x6b8] sm:$0xff]
          %v509 = vld [vmem:[%s2 + $0x6c0] sm:$0xff]
          %v510 = vld [vmem:[%s2 + $0x6c8] sm:$0xff]
          %v511 = vld [vmem:[%s2 + $0x6d0] sm:$0xff]
          %v512 = vld [vmem:[%s2 + $0x6d8] sm:$0xff]
          %v513 = vld [vmem:[%s2 + $0x6e0] sm:$0xff]
          %v514 = vld [vmem:[%s2 + $0x6e8] sm:$0xff]
          %v515 = vld [vmem:[%s2 + $0x6f0] sm:$0xff]
          %v516 = vld [vmem:[%s2 + $0x6f8] sm:$0xff]
          %v517 = vld [vmem:[%s2 + $0x700] sm:$0xff]
          %v518 = vld [vmem:[%s2 + $0x708] sm:$0xff]
          %v519 = vld [vmem:[%s2 + $0x710] sm:$0xff]
          %v520 = vld [vmem:[%s2 + $0x718] sm:$0xff]
          %v521 = vld [vmem:[%s2 + $0x720] sm:$0xff]
          %v522 = vld [vmem:[%s2 + $0x728] sm:$0xff]
          %v523 = vld [vmem:[%s2 + $0x730] sm:$0xff]
          %v524 = vld [vmem:[%s2 + $0x738] sm:$0xff]
          %v525 = vld [vmem:[%s2 + $0x740] sm:$0xff]
          %v526 = vld [vmem:[%s2 + $0x748] sm:$0xff]
          %v527 = vld [vmem:[%s2 + $0x750] sm:$0xff]
          %v528 = vld [vmem:[%s2 + $0x758] sm:$0xff]
          %v529 = vld [vmem:[%s2 + $0x760] sm:$0xff]
          %v530 = vld [vmem:[%s2 + $0x768] sm:$0xff]
          %v531 = vld [vmem:[%s2 + $0x770] sm:$0xff]
          %v532 = vld [vmem:[%s2 + $0x778] sm:$0xff]
          %v533 = vld [vmem:[%s2 + $0x780] sm:$0xff]
          %v534 = vld [vmem:[%s2 + $0x788] sm:$0xff]
          %v535 = vld [vmem:[%s2 + $0x790] sm:$0xff]
          %v536 = vld [vmem:[%s2 + $0x798] sm:$0xff]
          %v537 = vld [vmem:[%s2 + $0x7a0] sm:$0xff]
          %v538 = vld [vmem:[%s2 + $0x7a8] sm:$0xff]
          %v539 = vld [vmem:[%s2 + $0x7b0] sm:$0xff]
          %v540 = vld [vmem:[%s2 + $0x7b8] sm:$0xff]
          %v541 = vld [vmem:[%s2 + $0x7c0] sm:$0xff]
          %v542 = vld [vmem:[%s2 + $0x7c8] sm:$0xff]
          %v543 = vld [vmem:[%s2 + $0x7d0] sm:$0xff]
          %v544 = vld [vmem:[%s2 + $0x7d8] sm:$0xff]
          %v545 = vld [vmem:[%s2 + $0x7e0] sm:$0xff]
          %v546 = vld [vmem:[%s2 + $0x7e8] sm:$0xff]
          %v547 = vld [vmem:[%s2 + $0x7f0] sm:$0xff]
          %v548 = vld [vmem:[%s2 + $0x7f8] sm:$0xff]
          %v805 = vunpack.c.l.b16 %v293
          %v806 = vunpack.c.h.b16 %v293
          %v807 = vunpack.c.l.b16 %v294
          %v808 = vunpack.c.h.b16 %v294
          %v809 = vunpack.c.l.b16 %v295
          %v810 = vunpack.c.h.b16 %v295
          %v811 = vunpack.c.l.b16 %v296
          %v812 = vunpack.c.h.b16 %v296
          %v813 = vunpack.c.l.b16 %v297
          %v814 = vunpack.c.h.b16 %v297
          %v815 = vunpack.c.l.b16 %v298
          %v816 = vunpack.c.h.b16 %v298
          %v817 = vunpack.c.l.b16 %v299
          %v818 = vunpack.c.h.b16 %v299
          %v819 = vunpack.c.l.b16 %v300
          %v820 = vunpack.c.h.b16 %v300
          %v821 = vunpack.c.l.b16 %v301
          %v822 = vunpack.c.h.b16 %v301
          %v823 = vunpack.c.l.b16 %v302
          %v824 = vunpack.c.h.b16 %v302
          %v825 = vunpack.c.l.b16 %v303
          %v826 = vunpack.c.h.b16 %v303
          %v827 = vunpack.c.l.b16 %v304
          %v828 = vunpack.c.h.b16 %v304
          %v829 = vunpack.c.l.b16 %v305
          %v830 = vunpack.c.h.b16 %v305
          %v831 = vunpack.c.l.b16 %v306
          %v832 = vunpack.c.h.b16 %v306
          %v833 = vunpack.c.l.b16 %v307
          %v834 = vunpack.c.h.b16 %v307
          %v835 = vunpack.c.l.b16 %v308
          %v836 = vunpack.c.h.b16 %v308
          %v837 = vunpack.c.l.b16 %v309
          %v838 = vunpack.c.h.b16 %v309
          %v839 = vunpack.c.l.b16 %v310
          %v840 = vunpack.c.h.b16 %v310
          %v841 = vunpack.c.l.b16 %v311
          %v842 = vunpack.c.h.b16 %v311
          %v843 = vunpack.c.l.b16 %v312
          %v844 = vunpack.c.h.b16 %v312
          %v845 = vunpack.c.l.b16 %v313
          %v846 = vunpack.c.h.b16 %v313
          %v847 = vunpack.c.l.b16 %v314
          %v848 = vunpack.c.h.b16 %v314
          %v849 = vunpack.c.l.b16 %v315
          %v850 = vunpack.c.h.b16 %v315
          %v851 = vunpack.c.l.b16 %v316
          %v852 = vunpack.c.h.b16 %v316
          %v853 = vunpack.c.l.b16 %v317
          %v854 = vunpack.c.h.b16 %v317
          %v855 = vunpack.c.l.b16 %v318
          %v856 = vunpack.c.h.b16 %v318
          %v857 = vunpack.c.l.b16 %v319
          %v858 = vunpack.c.h.b16 %v319
          %v859 = vunpack.c.l.b16 %v320
          %v860 = vunpack.c.h.b16 %v320
          %v861 = vunpack.c.l.b16 %v321
          %v862 = vunpack.c.h.b16 %v321
          %v863 = vunpack.c.l.b16 %v322
          %v864 = vunpack.c.h.b16 %v322
          %v865 = vunpack.c.l.b16 %v323
          %v866 = vunpack.c.h.b16 %v323
          %v867 = vunpack.c.l.b16 %v324
          %v868 = vunpack.c.h.b16 %v324
          %v869 = vunpack.c.l.b16 %v325
          %v870 = vunpack.c.h.b16 %v325
          %v871 = vunpack.c.l.b16 %v326
          %v872 = vunpack.c.h.b16 %v326
          %v873 = vunpack.c.l.b16 %v327
          %v874 = vunpack.c.h.b16 %v327
          %v875 = vunpack.c.l.b16 %v328
          %v876 = vunpack.c.h.b16 %v328
          %v877 = vunpack.c.l.b16 %v329
          %v878 = vunpack.c.h.b16 %v329
          %v879 = vunpack.c.l.b16 %v330
          %v880 = vunpack.c.h.b16 %v330
          %v881 = vunpack.c.l.b16 %v331
          %v882 = vunpack.c.h.b16 %v331
          %v883 = vunpack.c.l.b16 %v332
          %v884 = vunpack.c.h.b16 %v332
          %v885 = vunpack.c.l.b16 %v333
          %v886 = vunpack.c.h.b16 %v333
          %v887 = vunpack.c.l.b16 %v334
          %v888 = vunpack.c.h.b16 %v334
          %v889 = vunpack.c.l.b16 %v335
          %v890 = vunpack.c.h.b16 %v335
          %v891 = vunpack.c.l.b16 %v336
          %v892 = vunpack.c.h.b16 %v336
          %v893 = vunpack.c.l.b16 %v337
          %v894 = vunpack.c.h.b16 %v337
          %v895 = vunpack.c.l.b16 %v338
          %v896 = vunpack.c.h.b16 %v338
          %v897 = vunpack.c.l.b16 %v339
          %v898 = vunpack.c.h.b16 %v339
          %v899 = vunpack.c.l.b16 %v340
          %v900 = vunpack.c.h.b16 %v340
          %v901 = vunpack.c.l.b16 %v341
          %v902 = vunpack.c.h.b16 %v341
          %v903 = vunpack.c.l.b16 %v342
          %v904 = vunpack.c.h.b16 %v342
          %v905 = vunpack.c.l.b16 %v343
          %v906 = vunpack.c.h.b16 %v343
          %v907 = vunpack.c.l.b16 %v344
          %v908 = vunpack.c.h.b16 %v344
          %v909 = vunpack.c.l.b16 %v345
          %v910 = vunpack.c.h.b16 %v345
          %v911 = vunpack.c.l.b16 %v346
          %v912 = vunpack.c.h.b16 %v346
          %v913 = vunpack.c.l.b16 %v347
          %v914 = vunpack.c.h.b16 %v347
          %v915 = vunpack.c.l.b16 %v348
          %v916 = vunpack.c.h.b16 %v348
          %v917 = vunpack.c.l.b16 %v349
          %v918 = vunpack.c.h.b16 %v349
          %v919 = vunpack.c.l.b16 %v350
          %v920 = vunpack.c.h.b16 %v350
          %v921 = vunpack.c.l.b16 %v351
          %v922 = vunpack.c.h.b16 %v351
          %v923 = vunpack.c.l.b16 %v352
          %v924 = vunpack.c.h.b16 %v352
          %v925 = vunpack.c.l.b16 %v353
          %v926 = vunpack.c.h.b16 %v353
          %v927 = vunpack.c.l.b16 %v354
          %v928 = vunpack.c.h.b16 %v354
          %v929 = vunpack.c.l.b16 %v355
          %v930 = vunpack.c.h.b16 %v355
          %v931 = vunpack.c.l.b16 %v356
          %v932 = vunpack.c.h.b16 %v356
          %v933 = vunpack.c.l.b16 %v357
          %v934 = vunpack.c.h.b16 %v357
          %v935 = vunpack.c.l.b16 %v358
          %v936 = vunpack.c.h.b16 %v358
          %v937 = vunpack.c.l.b16 %v359
          %v938 = vunpack.c.h.b16 %v359
          %v939 = vunpack.c.l.b16 %v360
          %v940 = vunpack.c.h.b16 %v360
          %v941 = vunpack.c.l.b16 %v361
          %v942 = vunpack.c.h.b16 %v361
          %v943 = vunpack.c.l.b16 %v362
          %v944 = vunpack.c.h.b16 %v362
          %v945 = vunpack.c.l.b16 %v363
          %v946 = vunpack.c.h.b16 %v363
          %v947 = vunpack.c.l.b16 %v364
          %v948 = vunpack.c.h.b16 %v364
          %v949 = vunpack.c.l.b16 %v365
          %v950 = vunpack.c.h.b16 %v365
          %v951 = vunpack.c.l.b16 %v366
          %v952 = vunpack.c.h.b16 %v366
          %v953 = vunpack.c.l.b16 %v367
          %v954 = vunpack.c.h.b16 %v367
          %v955 = vunpack.c.l.b16 %v368
          %v956 = vunpack.c.h.b16 %v368
          %v957 = vunpack.c.l.b16 %v369
          %v958 = vunpack.c.h.b16 %v369
          %v959 = vunpack.c.l.b16 %v370
          %v960 = vunpack.c.h.b16 %v370
          %v961 = vunpack.c.l.b16 %v371
          %v962 = vunpack.c.h.b16 %v371
          %v963 = vunpack.c.l.b16 %v372
          %v964 = vunpack.c.h.b16 %v372
          %v965 = vunpack.c.l.b16 %v373
          %v966 = vunpack.c.h.b16 %v373
          %v967 = vunpack.c.l.b16 %v374
          %v968 = vunpack.c.h.b16 %v374
          %v969 = vunpack.c.l.b16 %v375
          %v970 = vunpack.c.h.b16 %v375
          %v971 = vunpack.c.l.b16 %v376
          %v972 = vunpack.c.h.b16 %v376
          %v973 = vunpack.c.l.b16 %v377
          %v974 = vunpack.c.h.b16 %v377
          %v975 = vunpack.c.l.b16 %v378
          %v976 = vunpack.c.h.b16 %v378
          %v977 = vunpack.c.l.b16 %v379
          %v978 = vunpack.c.h.b16 %v379
          %v979 = vunpack.c.l.b16 %v380
          %v980 = vunpack.c.h.b16 %v380
          %v981 = vunpack.c.l.b16 %v381
          %v982 = vunpack.c.h.b16 %v381
          %v983 = vunpack.c.l.b16 %v382
          %v984 = vunpack.c.h.b16 %v382
          %v985 = vunpack.c.l.b16 %v383
          %v986 = vunpack.c.h.b16 %v383
          %v987 = vunpack.c.l.b16 %v384
          %v988 = vunpack.c.h.b16 %v384
          %v989 = vunpack.c.l.b16 %v385
          %v990 = vunpack.c.h.b16 %v385
          %v991 = vunpack.c.l.b16 %v386
          %v992 = vunpack.c.h.b16 %v386
          %v993 = vunpack.c.l.b16 %v387
          %v994 = vunpack.c.h.b16 %v387
          %v995 = vunpack.c.l.b16 %v388
          %v996 = vunpack.c.h.b16 %v388
          %v997 = vunpack.c.l.b16 %v389
          %v998 = vunpack.c.h.b16 %v389
          %v999 = vunpack.c.l.b16 %v390
          %v1000 = vunpack.c.h.b16 %v390
          %v1001 = vunpack.c.l.b16 %v391
          %v1002 = vunpack.c.h.b16 %v391
          %v1003 = vunpack.c.l.b16 %v392
          %v1004 = vunpack.c.h.b16 %v392
          %v1005 = vunpack.c.l.b16 %v393
          %v1006 = vunpack.c.h.b16 %v393
          %v1007 = vunpack.c.l.b16 %v394
          %v1008 = vunpack.c.h.b16 %v394
          %v1009 = vunpack.c.l.b16 %v395
          %v1010 = vunpack.c.h.b16 %v395
          %v1011 = vunpack.c.l.b16 %v396
          %v1012 = vunpack.c.h.b16 %v396
          %v1013 = vunpack.c.l.b16 %v397
          %v1014 = vunpack.c.h.b16 %v397
          %v1015 = vunpack.c.l.b16 %v398
          %v1016 = vunpack.c.h.b16 %v398
          %v1017 = vunpack.c.l.b16 %v399
          %v1018 = vunpack.c.h.b16 %v399
          %v1019 = vunpack.c.l.b16 %v400
          %v1020 = vunpack.c.h.b16 %v400
          %v1021 = vunpack.c.l.b16 %v401
          %v1022 = vunpack.c.h.b16 %v401
          %v1023 = vunpack.c.l.b16 %v402
          %v1024 = vunpack.c.h.b16 %v402
          %v1025 = vunpack.c.l.b16 %v403
          %v1026 = vunpack.c.h.b16 %v403
          %v1027 = vunpack.c.l.b16 %v404
          %v1028 = vunpack.c.h.b16 %v404
          %v1029 = vunpack.c.l.b16 %v405
          %v1030 = vunpack.c.h.b16 %v405
          %v1031 = vunpack.c.l.b16 %v406
          %v1032 = vunpack.c.h.b16 %v406
          %v1033 = vunpack.c.l.b16 %v407
          %v1034 = vunpack.c.h.b16 %v407
          %v1035 = vunpack.c.l.b16 %v408
          %v1036 = vunpack.c.h.b16 %v408
          %v1037 = vunpack.c.l.b16 %v409
          %v1038 = vunpack.c.h.b16 %v409
          %v1039 = vunpack.c.l.b16 %v410
          %v1040 = vunpack.c.h.b16 %v410
          %v1041 = vunpack.c.l.b16 %v411
          %v1042 = vunpack.c.h.b16 %v411
          %v1043 = vunpack.c.l.b16 %v412
          %v1044 = vunpack.c.h.b16 %v412
          %v1045 = vunpack.c.l.b16 %v413
          %v1046 = vunpack.c.h.b16 %v413
          %v1047 = vunpack.c.l.b16 %v414
          %v1048 = vunpack.c.h.b16 %v414
          %v1049 = vunpack.c.l.b16 %v415
          %v1050 = vunpack.c.h.b16 %v415
          %v1051 = vunpack.c.l.b16 %v416
          %v1052 = vunpack.c.h.b16 %v416
          %v1053 = vunpack.c.l.b16 %v417
          %v1054 = vunpack.c.h.b16 %v417
          %v1055 = vunpack.c.l.b16 %v418
          %v1056 = vunpack.c.h.b16 %v418
          %v1057 = vunpack.c.l.b16 %v419
          %v1058 = vunpack.c.h.b16 %v419
          %v1059 = vunpack.c.l.b16 %v420
          %v1060 = vunpack.c.h.b16 %v420
          %v1061 = vunpack.c.l.b16 %v421
          %v1062 = vunpack.c.h.b16 %v421
          %v1063 = vunpack.c.l.b16 %v422
          %v1064 = vunpack.c.h.b16 %v422
          %v1065 = vunpack.c.l.b16 %v423
          %v1066 = vunpack.c.h.b16 %v423
          %v1067 = vunpack.c.l.b16 %v424
          %v1068 = vunpack.c.h.b16 %v424
          %v1069 = vunpack.c.l.b16 %v425
          %v1070 = vunpack.c.h.b16 %v425
          %v1071 = vunpack.c.l.b16 %v426
          %v1072 = vunpack.c.h.b16 %v426
          %v1073 = vunpack.c.l.b16 %v427
          %v1074 = vunpack.c.h.b16 %v427
          %v1075 = vunpack.c.l.b16 %v428
          %v1076 = vunpack.c.h.b16 %v428
          %v1077 = vunpack.c.l.b16 %v429
          %v1078 = vunpack.c.h.b16 %v429
          %v1079 = vunpack.c.l.b16 %v430
          %v1080 = vunpack.c.h.b16 %v430
          %v1081 = vunpack.c.l.b16 %v431
          %v1082 = vunpack.c.h.b16 %v431
          %v1083 = vunpack.c.l.b16 %v432
          %v1084 = vunpack.c.h.b16 %v432
          %v1085 = vunpack.c.l.b16 %v433
          %v1086 = vunpack.c.h.b16 %v433
          %v1087 = vunpack.c.l.b16 %v434
          %v1088 = vunpack.c.h.b16 %v434
          %v1089 = vunpack.c.l.b16 %v435
          %v1090 = vunpack.c.h.b16 %v435
          %v1091 = vunpack.c.l.b16 %v436
          %v1092 = vunpack.c.h.b16 %v436
          %v1093 = vunpack.c.l.b16 %v437
          %v1094 = vunpack.c.h.b16 %v437
          %v1095 = vunpack.c.l.b16 %v438
          %v1096 = vunpack.c.h.b16 %v438
          %v1097 = vunpack.c.l.b16 %v439
          %v1098 = vunpack.c.h.b16 %v439
          %v1099 = vunpack.c.l.b16 %v440
          %v1100 = vunpack.c.h.b16 %v440
          %v1101 = vunpack.c.l.b16 %v441
          %v1102 = vunpack.c.h.b16 %v441
          %v1103 = vunpack.c.l.b16 %v442
          %v1104 = vunpack.c.h.b16 %v442
          %v1105 = vunpack.c.l.b16 %v443
          %v1106 = vunpack.c.h.b16 %v443
          %v1107 = vunpack.c.l.b16 %v444
          %v1108 = vunpack.c.h.b16 %v444
          %v1109 = vunpack.c.l.b16 %v445
          %v1110 = vunpack.c.h.b16 %v445
          %v1111 = vunpack.c.l.b16 %v446
          %v1112 = vunpack.c.h.b16 %v446
          %v1113 = vunpack.c.l.b16 %v447
          %v1114 = vunpack.c.h.b16 %v447
          %v1115 = vunpack.c.l.b16 %v448
          %v1116 = vunpack.c.h.b16 %v448
          %v1117 = vunpack.c.l.b16 %v449
          %v1118 = vunpack.c.h.b16 %v449
          %v1119 = vunpack.c.l.b16 %v450
          %v1120 = vunpack.c.h.b16 %v450
          %v1121 = vunpack.c.l.b16 %v451
          %v1122 = vunpack.c.h.b16 %v451
          %v1123 = vunpack.c.l.b16 %v452
          %v1124 = vunpack.c.h.b16 %v452
          %v1125 = vunpack.c.l.b16 %v453
          %v1126 = vunpack.c.h.b16 %v453
          %v1127 = vunpack.c.l.b16 %v454
          %v1128 = vunpack.c.h.b16 %v454
          %v1129 = vunpack.c.l.b16 %v455
          %v1130 = vunpack.c.h.b16 %v455
          %v1131 = vunpack.c.l.b16 %v456
          %v1132 = vunpack.c.h.b16 %v456
          %v1133 = vunpack.c.l.b16 %v457
          %v1134 = vunpack.c.h.b16 %v457
          %v1135 = vunpack.c.l.b16 %v458
          %v1136 = vunpack.c.h.b16 %v458
          %v1137 = vunpack.c.l.b16 %v459
          %v1138 = vunpack.c.h.b16 %v459
          %v1139 = vunpack.c.l.b16 %v460
          %v1140 = vunpack.c.h.b16 %v460
          %v1141 = vunpack.c.l.b16 %v461
          %v1142 = vunpack.c.h.b16 %v461
          %v1143 = vunpack.c.l.b16 %v462
          %v1144 = vunpack.c.h.b16 %v462
          %v1145 = vunpack.c.l.b16 %v463
          %v1146 = vunpack.c.h.b16 %v463
          %v1147 = vunpack.c.l.b16 %v464
          %v1148 = vunpack.c.h.b16 %v464
          %v1149 = vunpack.c.l.b16 %v465
          %v1150 = vunpack.c.h.b16 %v465
          %v1151 = vunpack.c.l.b16 %v466
          %v1152 = vunpack.c.h.b16 %v466
          %v1153 = vunpack.c.l.b16 %v467
          %v1154 = vunpack.c.h.b16 %v467
          %v1155 = vunpack.c.l.b16 %v468
          %v1156 = vunpack.c.h.b16 %v468
          %v1157 = vunpack.c.l.b16 %v469
          %v1158 = vunpack.c.h.b16 %v469
          %v1159 = vunpack.c.l.b16 %v470
          %v1160 = vunpack.c.h.b16 %v470
          %v1161 = vunpack.c.l.b16 %v471
          %v1162 = vunpack.c.h.b16 %v471
          %v1163 = vunpack.c.l.b16 %v472
          %v1164 = vunpack.c.h.b16 %v472
          %v1165 = vunpack.c.l.b16 %v473
          %v1166 = vunpack.c.h.b16 %v473
          %v1167 = vunpack.c.l.b16 %v474
          %v1168 = vunpack.c.h.b16 %v474
          %v1169 = vunpack.c.l.b16 %v475
          %v1170 = vunpack.c.h.b16 %v475
          %v1171 = vunpack.c.l.b16 %v476
          %v1172 = vunpack.c.h.b16 %v476
          %v1173 = vunpack.c.l.b16 %v477
          %v1174 = vunpack.c.h.b16 %v477
          %v1175 = vunpack.c.l.b16 %v478
          %v1176 = vunpack.c.h.b16 %v478
          %v1177 = vunpack.c.l.b16 %v479
          %v1178 = vunpack.c.h.b16 %v479
          %v1179 = vunpack.c.l.b16 %v480
          %v1180 = vunpack.c.h.b16 %v480
          %v1181 = vunpack.c.l.b16 %v481
          %v1182 = vunpack.c.h.b16 %v481
          %v1183 = vunpack.c.l.b16 %v482
          %v1184 = vunpack.c.h.b16 %v482
          %v1185 = vunpack.c.l.b16 %v483
          %v1186 = vunpack.c.h.b16 %v483
          %v1187 = vunpack.c.l.b16 %v484
          %v1188 = vunpack.c.h.b16 %v484
          %v1189 = vunpack.c.l.b16 %v485
          %v1190 = vunpack.c.h.b16 %v485
          %v1191 = vunpack.c.l.b16 %v486
          %v1192 = vunpack.c.h.b16 %v486
          %v1193 = vunpack.c.l.b16 %v487
          %v1194 = vunpack.c.h.b16 %v487
          %v1195 = vunpack.c.l.b16 %v488
          %v1196 = vunpack.c.h.b16 %v488
          %v1197 = vunpack.c.l.b16 %v489
          %v1198 = vunpack.c.h.b16 %v489
          %v1199 = vunpack.c.l.b16 %v490
          %v1200 = vunpack.c.h.b16 %v490
          %v1201 = vunpack.c.l.b16 %v491
          %v1202 = vunpack.c.h.b16 %v491
          %v1203 = vunpack.c.l.b16 %v492
          %v1204 = vunpack.c.h.b16 %v492
          %v1205 = vunpack.c.l.b16 %v493
          %v1206 = vunpack.c.h.b16 %v493
          %v1207 = vunpack.c.l.b16 %v494
          %v1208 = vunpack.c.h.b16 %v494
          %v1209 = vunpack.c.l.b16 %v495
          %v1210 = vunpack.c.h.b16 %v495
          %v1211 = vunpack.c.l.b16 %v496
          %v1212 = vunpack.c.h.b16 %v496
          %v1213 = vunpack.c.l.b16 %v497
          %v1214 = vunpack.c.h.b16 %v497
          %v1215 = vunpack.c.l.b16 %v498
          %v1216 = vunpack.c.h.b16 %v498
          %v1217 = vunpack.c.l.b16 %v499
          %v1218 = vunpack.c.h.b16 %v499
          %v1219 = vunpack.c.l.b16 %v500
          %v1220 = vunpack.c.h.b16 %v500
          %v1221 = vunpack.c.l.b16 %v501
          %v1222 = vunpack.c.h.b16 %v501
          %v1223 = vunpack.c.l.b16 %v502
          %v1224 = vunpack.c.h.b16 %v502
          %v1225 = vunpack.c.l.b16 %v503
          %v1226 = vunpack.c.h.b16 %v503
          %v1227 = vunpack.c.l.b16 %v504
          %v1228 = vunpack.c.h.b16 %v504
          %v1229 = vunpack.c.l.b16 %v505
          %v1230 = vunpack.c.h.b16 %v505
          %v1231 = vunpack.c.l.b16 %v506
          %v1232 = vunpack.c.h.b16 %v506
          %v1233 = vunpack.c.l.b16 %v507
          %v1234 = vunpack.c.h.b16 %v507
          %v1235 = vunpack.c.l.b16 %v508
          %v1236 = vunpack.c.h.b16 %v508
          %v1237 = vunpack.c.l.b16 %v509
          %v1238 = vunpack.c.h.b16 %v509
          %v1239 = vunpack.c.l.b16 %v510
          %v1240 = vunpack.c.h.b16 %v510
          %v1241 = vunpack.c.l.b16 %v511
          %v1242 = vunpack.c.h.b16 %v511
          %v1243 = vunpack.c.l.b16 %v512
          %v1244 = vunpack.c.h.b16 %v512
          %v1245 = vunpack.c.l.b16 %v513
          %v1246 = vunpack.c.h.b16 %v513
          %v1247 = vunpack.c.l.b16 %v514
          %v1248 = vunpack.c.h.b16 %v514
          %v1249 = vunpack.c.l.b16 %v515
          %v1250 = vunpack.c.h.b16 %v515
          %v1251 = vunpack.c.l.b16 %v516
          %v1252 = vunpack.c.h.b16 %v516
          %v1253 = vunpack.c.l.b16 %v517
          %v1254 = vunpack.c.h.b16 %v517
          %v1255 = vunpack.c.l.b16 %v518
          %v1256 = vunpack.c.h.b16 %v518
          %v1257 = vunpack.c.l.b16 %v519
          %v1258 = vunpack.c.h.b16 %v519
          %v1259 = vunpack.c.l.b16 %v520
          %v1260 = vunpack.c.h.b16 %v520
          %v1261 = vunpack.c.l.b16 %v521
          %v1262 = vunpack.c.h.b16 %v521
          %v1263 = vunpack.c.l.b16 %v522
          %v1264 = vunpack.c.h.b16 %v522
          %v1265 = vunpack.c.l.b16 %v523
          %v1266 = vunpack.c.h.b16 %v523
          %v1267 = vunpack.c.l.b16 %v524
          %v1268 = vunpack.c.h.b16 %v524
          %v1269 = vunpack.c.l.b16 %v525
          %v1270 = vunpack.c.h.b16 %v525
          %v1271 = vunpack.c.l.b16 %v526
          %v1272 = vunpack.c.h.b16 %v526
          %v1273 = vunpack.c.l.b16 %v527
          %v1274 = vunpack.c.h.b16 %v527
          %v1275 = vunpack.c.l.b16 %v528
          %v1276 = vunpack.c.h.b16 %v528
          %v1277 = vunpack.c.l.b16 %v529
          %v1278 = vunpack.c.h.b16 %v529
          %v1279 = vunpack.c.l.b16 %v530
          %v1280 = vunpack.c.h.b16 %v530
          %v1281 = vunpack.c.l.b16 %v531
          %v1282 = vunpack.c.h.b16 %v531
          %v1283 = vunpack.c.l.b16 %v532
          %v1284 = vunpack.c.h.b16 %v532
          %v1285 = vunpack.c.l.b16 %v533
          %v1286 = vunpack.c.h.b16 %v533
          %v1287 = vunpack.c.l.b16 %v534
          %v1288 = vunpack.c.h.b16 %v534
          %v1289 = vunpack.c.l.b16 %v535
          %v1290 = vunpack.c.h.b16 %v535
          %v1291 = vunpack.c.l.b16 %v536
          %v1292 = vunpack.c.h.b16 %v536
          %v1293 = vunpack.c.l.b16 %v537
          %v1294 = vunpack.c.h.b16 %v537
          %v1295 = vunpack.c.l.b16 %v538
          %v1296 = vunpack.c.h.b16 %v538
          %v1297 = vunpack.c.l.b16 %v539
          %v1298 = vunpack.c.h.b16 %v539
          %v1299 = vunpack.c.l.b16 %v540
          %v1300 = vunpack.c.h.b16 %v540
          %v1301 = vunpack.c.l.b16 %v541
          %v1302 = vunpack.c.h.b16 %v541
          %v1303 = vunpack.c.l.b16 %v542
          %v1304 = vunpack.c.h.b16 %v542
          %v1305 = vunpack.c.l.b16 %v543
          %v1306 = vunpack.c.h.b16 %v543
          %v1307 = vunpack.c.l.b16 %v544
          %v1308 = vunpack.c.h.b16 %v544
          %v1309 = vunpack.c.l.b16 %v545
          %v1310 = vunpack.c.h.b16 %v545
          %v1311 = vunpack.c.l.b16 %v546
          %v1312 = vunpack.c.h.b16 %v546
          %v1313 = vunpack.c.l.b16 %v547
          %v1314 = vunpack.c.h.b16 %v547
          %v1315 = vunpack.c.l.b16 %v548
          %v1316 = vunpack.c.h.b16 %v548
          %v1317 = vpack.c.b16 %v837, %v805
          %v1318 = vpack.c.b16 %v838, %v806
          %v1319 = vpack.c.b16 %v839, %v807
          %v1320 = vpack.c.b16 %v840, %v808
          %v1321 = vpack.c.b16 %v841, %v809
          %v1322 = vpack.c.b16 %v842, %v810
          %v1323 = vpack.c.b16 %v843, %v811
          %v1324 = vpack.c.b16 %v844, %v812
          %v1325 = vpack.c.b16 %v845, %v813
          %v1326 = vpack.c.b16 %v846, %v814
          %v1327 = vpack.c.b16 %v847, %v815
          %v1328 = vpack.c.b16 %v848, %v816
          %v1329 = vpack.c.b16 %v849, %v817
          %v1330 = vpack.c.b16 %v850, %v818
          %v1331 = vpack.c.b16 %v851, %v819
          %v1332 = vpack.c.b16 %v852, %v820
          %v1333 = vpack.c.b16 %v853, %v821
          %v1334 = vpack.c.b16 %v854, %v822
          %v1335 = vpack.c.b16 %v855, %v823
          %v1336 = vpack.c.b16 %v856, %v824
          %v1337 = vpack.c.b16 %v857, %v825
          %v1338 = vpack.c.b16 %v858, %v826
          %v1339 = vpack.c.b16 %v859, %v827
          %v1340 = vpack.c.b16 %v860, %v828
          %v1341 = vpack.c.b16 %v861, %v829
          %v1342 = vpack.c.b16 %v862, %v830
          %v1343 = vpack.c.b16 %v863, %v831
          %v1344 = vpack.c.b16 %v864, %v832
          %v1345 = vpack.c.b16 %v865, %v833
          %v1346 = vpack.c.b16 %v866, %v834
          %v1347 = vpack.c.b16 %v867, %v835
          %v1348 = vpack.c.b16 %v868, %v836
          %v1349 = vpack.c.b16 %v901, %v869
          %v1350 = vpack.c.b16 %v902, %v870
          %v1351 = vpack.c.b16 %v903, %v871
          %v1352 = vpack.c.b16 %v904, %v872
          %v1353 = vpack.c.b16 %v905, %v873
          %v1354 = vpack.c.b16 %v906, %v874
          %v1355 = vpack.c.b16 %v907, %v875
          %v1356 = vpack.c.b16 %v908, %v876
          %v1357 = vpack.c.b16 %v909, %v877
          %v1358 = vpack.c.b16 %v910, %v878
          %v1359 = vpack.c.b16 %v911, %v879
          %v1360 = vpack.c.b16 %v912, %v880
          %v1361 = vpack.c.b16 %v913, %v881
          %v1362 = vpack.c.b16 %v914, %v882
          %v1363 = vpack.c.b16 %v915, %v883
          %v1364 = vpack.c.b16 %v916, %v884
          %v1365 = vpack.c.b16 %v917, %v885
          %v1366 = vpack.c.b16 %v918, %v886
          %v1367 = vpack.c.b16 %v919, %v887
          %v1368 = vpack.c.b16 %v920, %v888
          %v1369 = vpack.c.b16 %v921, %v889
          %v1370 = vpack.c.b16 %v922, %v890
          %v1371 = vpack.c.b16 %v923, %v891
          %v1372 = vpack.c.b16 %v924, %v892
          %v1373 = vpack.c.b16 %v925, %v893
          %v1374 = vpack.c.b16 %v926, %v894
          %v1375 = vpack.c.b16 %v927, %v895
          %v1376 = vpack.c.b16 %v928, %v896
          %v1377 = vpack.c.b16 %v929, %v897
          %v1378 = vpack.c.b16 %v930, %v898
          %v1379 = vpack.c.b16 %v931, %v899
          %v1380 = vpack.c.b16 %v932, %v900
          %v1381 = vpack.c.b16 %v965, %v933
          %v1382 = vpack.c.b16 %v966, %v934
          %v1383 = vpack.c.b16 %v967, %v935
          %v1384 = vpack.c.b16 %v968, %v936
          %v1385 = vpack.c.b16 %v969, %v937
          %v1386 = vpack.c.b16 %v970, %v938
          %v1387 = vpack.c.b16 %v971, %v939
          %v1388 = vpack.c.b16 %v972, %v940
          %v1389 = vpack.c.b16 %v973, %v941
          %v1390 = vpack.c.b16 %v974, %v942
          %v1391 = vpack.c.b16 %v975, %v943
          %v1392 = vpack.c.b16 %v976, %v944
          %v1393 = vpack.c.b16 %v977, %v945
          %v1394 = vpack.c.b16 %v978, %v946
          %v1395 = vpack.c.b16 %v979, %v947
          %v1396 = vpack.c.b16 %v980, %v948
          %v1397 = vpack.c.b16 %v981, %v949
          %v1398 = vpack.c.b16 %v982, %v950
          %v1399 = vpack.c.b16 %v983, %v951
          %v1400 = vpack.c.b16 %v984, %v952
          %v1401 = vpack.c.b16 %v985, %v953
          %v1402 = vpack.c.b16 %v986, %v954
          %v1403 = vpack.c.b16 %v987, %v955
          %v1404 = vpack.c.b16 %v988, %v956
          %v1405 = vpack.c.b16 %v989, %v957
          %v1406 = vpack.c.b16 %v990, %v958
          %v1407 = vpack.c.b16 %v991, %v959
          %v1408 = vpack.c.b16 %v992, %v960
          %v1409 = vpack.c.b16 %v993, %v961
          %v1410 = vpack.c.b16 %v994, %v962
          %v1411 = vpack.c.b16 %v995, %v963
          %v1412 = vpack.c.b16 %v996, %v964
          %v1413 = vpack.c.b16 %v1029, %v997
          %v1414 = vpack.c.b16 %v1030, %v998
          %v1415 = vpack.c.b16 %v1031, %v999
          %v1416 = vpack.c.b16 %v1032, %v1000
          %v1417 = vpack.c.b16 %v1033, %v1001
          %v1418 = vpack.c.b16 %v1034, %v1002
          %v1419 = vpack.c.b16 %v1035, %v1003
          %v1420 = vpack.c.b16 %v1036, %v1004
          %v1421 = vpack.c.b16 %v1037, %v1005
          %v1422 = vpack.c.b16 %v1038, %v1006
          %v1423 = vpack.c.b16 %v1039, %v1007
          %v1424 = vpack.c.b16 %v1040, %v1008
          %v1425 = vpack.c.b16 %v1041, %v1009
          %v1426 = vpack.c.b16 %v1042, %v1010
          %v1427 = vpack.c.b16 %v1043, %v1011
          %v1428 = vpack.c.b16 %v1044, %v1012
          %v1429 = vpack.c.b16 %v1045, %v1013
          %v1430 = vpack.c.b16 %v1046, %v1014
          %v1431 = vpack.c.b16 %v1047, %v1015
          %v1432 = vpack.c.b16 %v1048, %v1016
          %v1433 = vpack.c.b16 %v1049, %v1017
          %v1434 = vpack.c.b16 %v1050, %v1018
          %v1435 = vpack.c.b16 %v1051, %v1019
          %v1436 = vpack.c.b16 %v1052, %v1020
          %v1437 = vpack.c.b16 %v1053, %v1021
          %v1438 = vpack.c.b16 %v1054, %v1022
          %v1439 = vpack.c.b16 %v1055, %v1023
          %v1440 = vpack.c.b16 %v1056, %v1024
          %v1441 = vpack.c.b16 %v1057, %v1025
          %v1442 = vpack.c.b16 %v1058, %v1026
          %v1443 = vpack.c.b16 %v1059, %v1027
          %v1444 = vpack.c.b16 %v1060, %v1028
          %v1445 = vpack.c.b16 %v1093, %v1061
          %v1446 = vpack.c.b16 %v1094, %v1062
          %v1447 = vpack.c.b16 %v1095, %v1063
          %v1448 = vpack.c.b16 %v1096, %v1064
          %v1449 = vpack.c.b16 %v1097, %v1065
          %v1450 = vpack.c.b16 %v1098, %v1066
          %v1451 = vpack.c.b16 %v1099, %v1067
          %v1452 = vpack.c.b16 %v1100, %v1068
          %v1453 = vpack.c.b16 %v1101, %v1069
          %v1454 = vpack.c.b16 %v1102, %v1070
          %v1455 = vpack.c.b16 %v1103, %v1071
          %v1456 = vpack.c.b16 %v1104, %v1072
          %v1457 = vpack.c.b16 %v1105, %v1073
          %v1458 = vpack.c.b16 %v1106, %v1074
          %v1459 = vpack.c.b16 %v1107, %v1075
          %v1460 = vpack.c.b16 %v1108, %v1076
          %v1461 = vpack.c.b16 %v1109, %v1077
          %v1462 = vpack.c.b16 %v1110, %v1078
          %v1463 = vpack.c.b16 %v1111, %v1079
          %v1464 = vpack.c.b16 %v1112, %v1080
          %v1465 = vpack.c.b16 %v1113, %v1081
          %v1466 = vpack.c.b16 %v1114, %v1082
          %v1467 = vpack.c.b16 %v1115, %v1083
          %v1468 = vpack.c.b16 %v1116, %v1084
          %v1469 = vpack.c.b16 %v1117, %v1085
          %v1470 = vpack.c.b16 %v1118, %v1086
          %v1471 = vpack.c.b16 %v1119, %v1087
          %v1472 = vpack.c.b16 %v1120, %v1088
          %v1473 = vpack.c.b16 %v1121, %v1089
          %v1474 = vpack.c.b16 %v1122, %v1090
          %v1475 = vpack.c.b16 %v1123, %v1091
          %v1476 = vpack.c.b16 %v1124, %v1092
          %v1477 = vpack.c.b16 %v1157, %v1125
          %v1478 = vpack.c.b16 %v1158, %v1126
          %v1479 = vpack.c.b16 %v1159, %v1127
          %v1480 = vpack.c.b16 %v1160, %v1128
          %v1481 = vpack.c.b16 %v1161, %v1129
          %v1482 = vpack.c.b16 %v1162, %v1130
          %v1483 = vpack.c.b16 %v1163, %v1131
          %v1484 = vpack.c.b16 %v1164, %v1132
          %v1485 = vpack.c.b16 %v1165, %v1133
          %v1486 = vpack.c.b16 %v1166, %v1134
          %v1487 = vpack.c.b16 %v1167, %v1135
          %v1488 = vpack.c.b16 %v1168, %v1136
          %v1489 = vpack.c.b16 %v1169, %v1137
          %v1490 = vpack.c.b16 %v1170, %v1138
          %v1491 = vpack.c.b16 %v1171, %v1139
          %v1492 = vpack.c.b16 %v1172, %v1140
          %v1493 = vpack.c.b16 %v1173, %v1141
          %v1494 = vpack.c.b16 %v1174, %v1142
          %v1495 = vpack.c.b16 %v1175, %v1143
          %v1496 = vpack.c.b16 %v1176, %v1144
          %v1497 = vpack.c.b16 %v1177, %v1145
          %v1498 = vpack.c.b16 %v1178, %v1146
          %v1499 = vpack.c.b16 %v1179, %v1147
          %v1500 = vpack.c.b16 %v1180, %v1148
          %v1501 = vpack.c.b16 %v1181, %v1149
          %v1502 = vpack.c.b16 %v1182, %v1150
          %v1503 = vpack.c.b16 %v1183, %v1151
          %v1504 = vpack.c.b16 %v1184, %v1152
          %v1505 = vpack.c.b16 %v1185, %v1153
          %v1506 = vpack.c.b16 %v1186, %v1154
          %v1507 = vpack.c.b16 %v1187, %v1155
          %v1508 = vpack.c.b16 %v1188, %v1156
          %v1509 = vpack.c.b16 %v1221, %v1189
          %v1510 = vpack.c.b16 %v1222, %v1190
          %v1511 = vpack.c.b16 %v1223, %v1191
          %v1512 = vpack.c.b16 %v1224, %v1192
          %v1513 = vpack.c.b16 %v1225, %v1193
          %v1514 = vpack.c.b16 %v1226, %v1194
          %v1515 = vpack.c.b16 %v1227, %v1195
          %v1516 = vpack.c.b16 %v1228, %v1196
          %v1517 = vpack.c.b16 %v1229, %v1197
          %v1518 = vpack.c.b16 %v1230, %v1198
          %v1519 = vpack.c.b16 %v1231, %v1199
          %v1520 = vpack.c.b16 %v1232, %v1200
          %v1521 = vpack.c.b16 %v1233, %v1201
          %v1522 = vpack.c.b16 %v1234, %v1202
          %v1523 = vpack.c.b16 %v1235, %v1203
          %v1524 = vpack.c.b16 %v1236, %v1204
          %v1525 = vpack.c.b16 %v1237, %v1205
          %v1526 = vpack.c.b16 %v1238, %v1206
          %v1527 = vpack.c.b16 %v1239, %v1207
          %v1528 = vpack.c.b16 %v1240, %v1208
          %v1529 = vpack.c.b16 %v1241, %v1209
          %v1530 = vpack.c.b16 %v1242, %v1210
          %v1531 = vpack.c.b16 %v1243, %v1211
          %v1532 = vpack.c.b16 %v1244, %v1212
          %v1533 = vpack.c.b16 %v1245, %v1213
          %v1534 = vpack.c.b16 %v1246, %v1214
          %v1535 = vpack.c.b16 %v1247, %v1215
          %v1536 = vpack.c.b16 %v1248, %v1216
          %v1537 = vpack.c.b16 %v1249, %v1217
          %v1538 = vpack.c.b16 %v1250, %v1218
          %v1539 = vpack.c.b16 %v1251, %v1219
          %v1540 = vpack.c.b16 %v1252, %v1220
          %v1541 = vpack.c.b16 %v1285, %v1253
          %v1542 = vpack.c.b16 %v1286, %v1254
          %v1543 = vpack.c.b16 %v1287, %v1255
          %v1544 = vpack.c.b16 %v1288, %v1256
          %v1545 = vpack.c.b16 %v1289, %v1257
          %v1546 = vpack.c.b16 %v1290, %v1258
          %v1547 = vpack.c.b16 %v1291, %v1259
          %v1548 = vpack.c.b16 %v1292, %v1260
          %v1549 = vpack.c.b16 %v1293, %v1261
          %v1550 = vpack.c.b16 %v1294, %v1262
          %v1551 = vpack.c.b16 %v1295, %v1263
          %v1552 = vpack.c.b16 %v1296, %v1264
          %v1553 = vpack.c.b16 %v1297, %v1265
          %v1554 = vpack.c.b16 %v1298, %v1266
          %v1555 = vpack.c.b16 %v1299, %v1267
          %v1556 = vpack.c.b16 %v1300, %v1268
          %v1557 = vpack.c.b16 %v1301, %v1269
          %v1558 = vpack.c.b16 %v1302, %v1270
          %v1559 = vpack.c.b16 %v1303, %v1271
          %v1560 = vpack.c.b16 %v1304, %v1272
          %v1561 = vpack.c.b16 %v1305, %v1273
          %v1562 = vpack.c.b16 %v1306, %v1274
          %v1563 = vpack.c.b16 %v1307, %v1275
          %v1564 = vpack.c.b16 %v1308, %v1276
          %v1565 = vpack.c.b16 %v1309, %v1277
          %v1566 = vpack.c.b16 %v1310, %v1278
          %v1567 = vpack.c.b16 %v1311, %v1279
          %v1568 = vpack.c.b16 %v1312, %v1280
          %v1569 = vpack.c.b16 %v1313, %v1281
          %v1570 = vpack.c.b16 %v1314, %v1282
          %v1571 = vpack.c.b16 %v1315, %v1283
          %v1572 = vpack.c.b16 %v1316, %v1284
          %1829 = vmatprep.subr.bf16.mxu0 %v1542
          %1830 = vmatpush1.bf16.msra.mxu0 %v1541
          %1831 = vmatprep.subr.bf16.mxu0 %v1510
          %1832 = vmatpush1.bf16.msra.mxu0 %v1509
          %1833 = vmatprep.subr.bf16.mxu0 %v1478
          %1834 = vmatpush1.bf16.msra.mxu0 %v1477
          %1835 = vmatprep.subr.bf16.mxu0 %v1446
          %1836 = vmatpush1.bf16.msra.mxu0 %v1445
          %1837 = vmatprep.subr.bf16.mxu0 %v1414
          %1838 = vmatpush1.bf16.msra.mxu0 %v1413
          %1839 = vmatprep.subr.bf16.mxu0 %v1382
          %1840 = vmatpush1.bf16.msra.mxu0 %v1381
          %1841 = vmatprep.subr.bf16.mxu0 %v1350
          %1842 = vmatpush1.bf16.msra.mxu0 %v1349
          %1843 = vmatprep.subr.bf16.mxu0 %v1318
          %1844 = vmatpush1.bf16.msra.mxu0 %v1317
          %1845 = vmatprep.subr.bf16.mxu0 0
          %1846 = vmatpush2.bf16.msra.mxu0 0
          %1847 = vmatprep.subr.bf16.mxu0 0
          %1848 = vmatpush2.bf16.msra.mxu0 0
          %1849 = vmatprep.subr.bf16.mxu0 0
          %1850 = vmatpush2.bf16.msra.mxu0 0
          %1851 = vmatprep.subr.bf16.mxu0 0
          %1852 = vmatpush2.bf16.msra.mxu0 0
          %1853 = vmatprep.subr.bf16.mxu0 0
          %1854 = vmatpush2.bf16.msra.mxu0 0
          %1855 = vmatprep.subr.bf16.mxu0 0
          %1856 = vmatpush2.bf16.msra.mxu0 0
          %1857 = vmatprep.subr.bf16.mxu0 0
          %1858 = vmatpush2.bf16.msra.mxu0 0
          %1859 = vmatprep.subr.bf16.mxu0 0
          %1860 = vmatpush2.bf16.msra.mxu0 0
          %1861 = vmatprep.mubr.bf16.mxu0 0
          %1862 = vmatmul.mubr.bf16.gmra.mxu0 %v292
          %v1863 = vpop.f32.mrf.mxu0
          %v1864 = vadd.f32 0.0, %v1863
          %v1865 = vpop.f32.mrf.mxu0
          %v1866 = vadd.f32 0.0, %v1865
          %v1867 = vpop.f32.mrf.mxu0
          %v1868 = vpop.f32.mrf.mxu0
          %1869 = vdwg.mxu0
          %1870 = vmatprep.subr.bf16.mxu0 %v1544
          %1871 = vmatpush1.bf16.msra.mxu0 %v1543
          %1872 = vmatprep.subr.bf16.mxu0 %v1512
          %1873 = vmatpush1.bf16.msra.mxu0 %v1511
          %1874 = vmatprep.subr.bf16.mxu0 %v1480
          %1875 = vmatpush1.bf16.msra.mxu0 %v1479
          %1876 = vmatprep.subr.bf16.mxu0 %v1448
          %1877 = vmatpush1.bf16.msra.mxu0 %v1447
          %1878 = vmatprep.subr.bf16.mxu0 %v1416
          %1879 = vmatpush1.bf16.msra.mxu0 %v1415
          %1880 = vmatprep.subr.bf16.mxu0 %v1384
          %1881 = vmatpush1.bf16.msra.mxu0 %v1383
          %1882 = vmatprep.subr.bf16.mxu0 %v1352
          %1883 = vmatpush1.bf16.msra.mxu0 %v1351
          %1884 = vmatprep.subr.bf16.mxu0 %v1320
          %1885 = vmatpush1.bf16.msra.mxu0 %v1319
          %1886 = vmatprep.subr.bf16.mxu0 0
          %1887 = vmatpush2.bf16.msra.mxu0 0
          %1888 = vmatprep.subr.bf16.mxu0 0
          %1889 = vmatpush2.bf16.msra.mxu0 0
          %1890 = vmatprep.subr.bf16.mxu0 0
          %1891 = vmatpush2.bf16.msra.mxu0 0
          %1892 = vmatprep.subr.bf16.mxu0 0
          %1893 = vmatpush2.bf16.msra.mxu0 0
          %1894 = vmatprep.subr.bf16.mxu0 0
          %1895 = vmatpush2.bf16.msra.mxu0 0
          %1896 = vmatprep.subr.bf16.mxu0 0
          %1897 = vmatpush2.bf16.msra.mxu0 0
          %1898 = vmatprep.subr.bf16.mxu0 0
          %1899 = vmatpush2.bf16.msra.mxu0 0
          %1900 = vmatprep.subr.bf16.mxu0 0
          %1901 = vmatpush2.bf16.msra.mxu0 0
          %1902 = vmatprep.mubr.bf16.mxu0 0
          %1903 = vmatmul.mubr.bf16.gmra.mxu0 %v292
          %v1904 = vpop.f32.mrf.mxu0
          %v1905 = vadd.f32 0.0, %v1904
          %v1906 = vpop.f32.mrf.mxu0
          %v1907 = vadd.f32 0.0, %v1906
          %v1908 = vpop.f32.mrf.mxu0
          %v1909 = vpop.f32.mrf.mxu0
          %1910 = vdwg.mxu0
          %1911 = vmatprep.subr.bf16.mxu0 %v1546
          %1912 = vmatpush1.bf16.msra.mxu0 %v1545
          %1913 = vmatprep.subr.bf16.mxu0 %v1514
          %1914 = vmatpush1.bf16.msra.mxu0 %v1513
          %1915 = vmatprep.subr.bf16.mxu0 %v1482
          %1916 = vmatpush1.bf16.msra.mxu0 %v1481
          %1917 = vmatprep.subr.bf16.mxu0 %v1450
          %1918 = vmatpush1.bf16.msra.mxu0 %v1449
          %1919 = vmatprep.subr.bf16.mxu0 %v1418
          %1920 = vmatpush1.bf16.msra.mxu0 %v1417
          %1921 = vmatprep.subr.bf16.mxu0 %v1386
          %1922 = vmatpush1.bf16.msra.mxu0 %v1385
          %1923 = vmatprep.subr.bf16.mxu0 %v1354
          %1924 = vmatpush1.bf16.msra.mxu0 %v1353
          %1925 = vmatprep.subr.bf16.mxu0 %v1322
          %1926 = vmatpush1.bf16.msra.mxu0 %v1321
          %1927 = vmatprep.subr.bf16.mxu0 0
          %1928 = vmatpush2.bf16.msra.mxu0 0
          %1929 = vmatprep.subr.bf16.mxu0 0
          %1930 = vmatpush2.bf16.msra.mxu0 0
          %1931 = vmatprep.subr.bf16.mxu0 0
          %1932 = vmatpush2.bf16.msra.mxu0 0
          %1933 = vmatprep.subr.bf16.mxu0 0
          %1934 = vmatpush2.bf16.msra.mxu0 0
          %1935 = vmatprep.subr.bf16.mxu0 0
          %1936 = vmatpush2.bf16.msra.mxu0 0
          %1937 = vmatprep.subr.bf16.mxu0 0
          %1938 = vmatpush2.bf16.msra.mxu0 0
          %1939 = vmatprep.subr.bf16.mxu0 0
          %1940 = vmatpush2.bf16.msra.mxu0 0
          %1941 = vmatprep.subr.bf16.mxu0 0
          %1942 = vmatpush2.bf16.msra.mxu0 0
          %1943 = vmatprep.mubr.bf16.mxu0 0
          %1944 = vmatmul.mubr.bf16.gmra.mxu0 %v292
          %v1945 = vpop.f32.mrf.mxu0
          %v1946 = vadd.f32 0.0, %v1945
          %v1947 = vpop.f32.mrf.mxu0
          %v1948 = vadd.f32 0.0, %v1947
          %v1949 = vpop.f32.mrf.mxu0
          %v1950 = vpop.f32.mrf.mxu0
          %1951 = vdwg.mxu0
          %1952 = vmatprep.subr.bf16.mxu0 %v1548
          %1953 = vmatpush1.bf16.msra.mxu0 %v1547
          %1954 = vmatprep.subr.bf16.mxu0 %v1516
          %1955 = vmatpush1.bf16.msra.mxu0 %v1515
          %1956 = vmatprep.subr.bf16.mxu0 %v1484
          %1957 = vmatpush1.bf16.msra.mxu0 %v1483
          %1958 = vmatprep.subr.bf16.mxu0 %v1452
          %1959 = vmatpush1.bf16.msra.mxu0 %v1451
          %1960 = vmatprep.subr.bf16.mxu0 %v1420
          %1961 = vmatpush1.bf16.msra.mxu0 %v1419
          %1962 = vmatprep.subr.bf16.mxu0 %v1388
          %1963 = vmatpush1.bf16.msra.mxu0 %v1387
          %1964 = vmatprep.subr.bf16.mxu0 %v1356
          %1965 = vmatpush1.bf16.msra.mxu0 %v1355
          %1966 = vmatprep.subr.bf16.mxu0 %v1324
          %1967 = vmatpush1.bf16.msra.mxu0 %v1323
          %1968 = vmatprep.subr.bf16.mxu0 0
          %1969 = vmatpush2.bf16.msra.mxu0 0
          %1970 = vmatprep.subr.bf16.mxu0 0
          %1971 = vmatpush2.bf16.msra.mxu0 0
          %1972 = vmatprep.subr.bf16.mxu0 0
          %1973 = vmatpush2.bf16.msra.mxu0 0
          %1974 = vmatprep.subr.bf16.mxu0 0
          %1975 = vmatpush2.bf16.msra.mxu0 0
          %1976 = vmatprep.subr.bf16.mxu0 0
          %1977 = vmatpush2.bf16.msra.mxu0 0
          %1978 = vmatprep.subr.bf16.mxu0 0
          %1979 = vmatpush2.bf16.msra.mxu0 0
          %1980 = vmatprep.subr.bf16.mxu0 0
          %1981 = vmatpush2.bf16.msra.mxu0 0
          %1982 = vmatprep.subr.bf16.mxu0 0
          %1983 = vmatpush2.bf16.msra.mxu0 0
          %1984 = vmatprep.mubr.bf16.mxu0 0
          %1985 = vmatmul.mubr.bf16.gmra.mxu0 %v292
          %v1986 = vpop.f32.mrf.mxu0
          %v1987 = vadd.f32 0.0, %v1986
          %v1988 = vpop.f32.mrf.mxu0
          %v1989 = vadd.f32 0.0, %v1988
          %v1990 = vpop.f32.mrf.mxu0
          %v1991 = vpop.f32.mrf.mxu0
          %1992 = vdwg.mxu0
          %1993 = vmatprep.subr.bf16.mxu0 %v1550
          %1994 = vmatpush1.bf16.msra.mxu0 %v1549
          %1995 = vmatprep.subr.bf16.mxu0 %v1518
          %1996 = vmatpush1.bf16.msra.mxu0 %v1517
          %1997 = vmatprep.subr.bf16.mxu0 %v1486
          %1998 = vmatpush1.bf16.msra.mxu0 %v1485
          %1999 = vmatprep.subr.bf16.mxu0 %v1454
          %2000 = vmatpush1.bf16.msra.mxu0 %v1453
          %2001 = vmatprep.subr.bf16.mxu0 %v1422
          %2002 = vmatpush1.bf16.msra.mxu0 %v1421
          %2003 = vmatprep.subr.bf16.mxu0 %v1390
          %2004 = vmatpush1.bf16.msra.mxu0 %v1389
          %2005 = vmatprep.subr.bf16.mxu0 %v1358
          %2006 = vmatpush1.bf16.msra.mxu0 %v1357
          %2007 = vmatprep.subr.bf16.mxu0 %v1326
          %2008 = vmatpush1.bf16.msra.mxu0 %v1325
          %2009 = vmatprep.subr.bf16.mxu0 0
          %2010 = vmatpush2.bf16.msra.mxu0 0
          %2011 = vmatprep.subr.bf16.mxu0 0
          %2012 = vmatpush2.bf16.msra.mxu0 0
          %2013 = vmatprep.subr.bf16.mxu0 0
          %2014 = vmatpush2.bf16.msra.mxu0 0
          %2015 = vmatprep.subr.bf16.mxu0 0
          %2016 = vmatpush2.bf16.msra.mxu0 0
          %2017 = vmatprep.subr.bf16.mxu0 0
          %2018 = vmatpush2.bf16.msra.mxu0 0
          %2019 = vmatprep.subr.bf16.mxu0 0
          %2020 = vmatpush2.bf16.msra.mxu0 0
          %2021 = vmatprep.subr.bf16.mxu0 0
          %2022 = vmatpush2.bf16.msra.mxu0 0
          %2023 = vmatprep.subr.bf16.mxu0 0
          %2024 = vmatpush2.bf16.msra.mxu0 0
          %2025 = vmatprep.mubr.bf16.mxu0 0
          %2026 = vmatmul.mubr.bf16.gmra.mxu0 %v292
          %v2027 = vpop.f32.mrf.mxu0
          %v2028 = vadd.f32 0.0, %v2027
          %v2029 = vpop.f32.mrf.mxu0
          %v2030 = vadd.f32 0.0, %v2029
          %v2031 = vpop.f32.mrf.mxu0
          %v2032 = vpop.f32.mrf.mxu0
          %2033 = vdwg.mxu0
          %2034 = vmatprep.subr.bf16.mxu0 %v1552
          %2035 = vmatpush1.bf16.msra.mxu0 %v1551
          %2036 = vmatprep.subr.bf16.mxu0 %v1520
          %2037 = vmatpush1.bf16.msra.mxu0 %v1519
          %2038 = vmatprep.subr.bf16.mxu0 %v1488
          %2039 = vmatpush1.bf16.msra.mxu0 %v1487
          %2040 = vmatprep.subr.bf16.mxu0 %v1456
          %2041 = vmatpush1.bf16.msra.mxu0 %v1455
          %2042 = vmatprep.subr.bf16.mxu0 %v1424
          %2043 = vmatpush1.bf16.msra.mxu0 %v1423
          %2044 = vmatprep.subr.bf16.mxu0 %v1392
          %2045 = vmatpush1.bf16.msra.mxu0 %v1391
          %2046 = vmatprep.subr.bf16.mxu0 %v1360
          %2047 = vmatpush1.bf16.msra.mxu0 %v1359
          %2048 = vmatprep.subr.bf16.mxu0 %v1328
          %2049 = vmatpush1.bf16.msra.mxu0 %v1327
          %2050 = vmatprep.subr.bf16.mxu0 0
          %2051 = vmatpush2.bf16.msra.mxu0 0
          %2052 = vmatprep.subr.bf16.mxu0 0
          %2053 = vmatpush2.bf16.msra.mxu0 0
          %2054 = vmatprep.subr.bf16.mxu0 0
          %2055 = vmatpush2.bf16.msra.mxu0 0
          %2056 = vmatprep.subr.bf16.mxu0 0
          %2057 = vmatpush2.bf16.msra.mxu0 0
          %2058 = vmatprep.subr.bf16.mxu0 0
          %2059 = vmatpush2.bf16.msra.mxu0 0
          %2060 = vmatprep.subr.bf16.mxu0 0
          %2061 = vmatpush2.bf16.msra.mxu0 0
          %2062 = vmatprep.subr.bf16.mxu0 0
          %2063 = vmatpush2.bf16.msra.mxu0 0
          %2064 = vmatprep.subr.bf16.mxu0 0
          %2065 = vmatpush2.bf16.msra.mxu0 0
          %2066 = vmatprep.mubr.bf16.mxu0 0
          %2067 = vmatmul.mubr.bf16.gmra.mxu0 %v292
          %v2068 = vpop.f32.mrf.mxu0
          %v2069 = vadd.f32 0.0, %v2068
          %v2070 = vpop.f32.mrf.mxu0
          %v2071 = vadd.f32 0.0, %v2070
          %v2072 = vpop.f32.mrf.mxu0
          %v2073 = vpop.f32.mrf.mxu0
          %2074 = vdwg.mxu0
          %2075 = vmatprep.subr.bf16.mxu0 %v1554
          %2076 = vmatpush1.bf16.msra.mxu0 %v1553
          %2077 = vmatprep.subr.bf16.mxu0 %v1522
          %2078 = vmatpush1.bf16.msra.mxu0 %v1521
          %2079 = vmatprep.subr.bf16.mxu0 %v1490
          %2080 = vmatpush1.bf16.msra.mxu0 %v1489
          %2081 = vmatprep.subr.bf16.mxu0 %v1458
          %2082 = vmatpush1.bf16.msra.mxu0 %v1457
          %2083 = vmatprep.subr.bf16.mxu0 %v1426
          %2084 = vmatpush1.bf16.msra.mxu0 %v1425
          %2085 = vmatprep.subr.bf16.mxu0 %v1394
          %2086 = vmatpush1.bf16.msra.mxu0 %v1393
          %2087 = vmatprep.subr.bf16.mxu0 %v1362
          %2088 = vmatpush1.bf16.msra.mxu0 %v1361
          %2089 = vmatprep.subr.bf16.mxu0 %v1330
          %2090 = vmatpush1.bf16.msra.mxu0 %v1329
          %2091 = vmatprep.subr.bf16.mxu0 0
          %2092 = vmatpush2.bf16.msra.mxu0 0
          %2093 = vmatprep.subr.bf16.mxu0 0
          %2094 = vmatpush2.bf16.msra.mxu0 0
          %2095 = vmatprep.subr.bf16.mxu0 0
          %2096 = vmatpush2.bf16.msra.mxu0 0
          %2097 = vmatprep.subr.bf16.mxu0 0
          %2098 = vmatpush2.bf16.msra.mxu0 0
          %2099 = vmatprep.subr.bf16.mxu0 0
          %2100 = vmatpush2.bf16.msra.mxu0 0
          %2101 = vmatprep.subr.bf16.mxu0 0
          %2102 = vmatpush2.bf16.msra.mxu0 0
          %2103 = vmatprep.subr.bf16.mxu0 0
          %2104 = vmatpush2.bf16.msra.mxu0 0
          %2105 = vmatprep.subr.bf16.mxu0 0
          %2106 = vmatpush2.bf16.msra.mxu0 0
          %2107 = vmatprep.mubr.bf16.mxu0 0
          %2108 = vmatmul.mubr.bf16.gmra.mxu0 %v292
          %v2109 = vpop.f32.mrf.mxu0
          %v2110 = vadd.f32 0.0, %v2109
          %v2111 = vpop.f32.mrf.mxu0
          %v2112 = vadd.f32 0.0, %v2111
          %v2113 = vpop.f32.mrf.mxu0
          %v2114 = vpop.f32.mrf.mxu0
          %2115 = vdwg.mxu0
          %2116 = vmatprep.subr.bf16.mxu0 %v1556
          %2117 = vmatpush1.bf16.msra.mxu0 %v1555
          %2118 = vmatprep.subr.bf16.mxu0 %v1524
          %2119 = vmatpush1.bf16.msra.mxu0 %v1523
          %2120 = vmatprep.subr.bf16.mxu0 %v1492
          %2121 = vmatpush1.bf16.msra.mxu0 %v1491
          %2122 = vmatprep.subr.bf16.mxu0 %v1460
          %2123 = vmatpush1.bf16.msra.mxu0 %v1459
          %2124 = vmatprep.subr.bf16.mxu0 %v1428
          %2125 = vmatpush1.bf16.msra.mxu0 %v1427
          %2126 = vmatprep.subr.bf16.mxu0 %v1396
          %2127 = vmatpush1.bf16.msra.mxu0 %v1395
          %2128 = vmatprep.subr.bf16.mxu0 %v1364
          %2129 = vmatpush1.bf16.msra.mxu0 %v1363
          %2130 = vmatprep.subr.bf16.mxu0 %v1332
          %2131 = vmatpush1.bf16.msra.mxu0 %v1331
          %2132 = vmatprep.subr.bf16.mxu0 0
          %2133 = vmatpush2.bf16.msra.mxu0 0
          %2134 = vmatprep.subr.bf16.mxu0 0
          %2135 = vmatpush2.bf16.msra.mxu0 0
          %2136 = vmatprep.subr.bf16.mxu0 0
          %2137 = vmatpush2.bf16.msra.mxu0 0
          %2138 = vmatprep.subr.bf16.mxu0 0
          %2139 = vmatpush2.bf16.msra.mxu0 0
          %2140 = vmatprep.subr.bf16.mxu0 0
          %2141 = vmatpush2.bf16.msra.mxu0 0
          %2142 = vmatprep.subr.bf16.mxu0 0
          %2143 = vmatpush2.bf16.msra.mxu0 0
          %2144 = vmatprep.subr.bf16.mxu0 0
          %2145 = vmatpush2.bf16.msra.mxu0 0
          %2146 = vmatprep.subr.bf16.mxu0 0
          %2147 = vmatpush2.bf16.msra.mxu0 0
          %2148 = vmatprep.mubr.bf16.mxu0 0
          %2149 = vmatmul.mubr.bf16.gmra.mxu0 %v292
          %v2150 = vpop.f32.mrf.mxu0
          %v2151 = vadd.f32 0.0, %v2150
          %v2152 = vpop.f32.mrf.mxu0
          %v2153 = vadd.f32 0.0, %v2152
          %v2154 = vpop.f32.mrf.mxu0
          %v2155 = vpop.f32.mrf.mxu0
          %2156 = vdwg.mxu0
          %2157 = vmatprep.subr.bf16.mxu0 %v1558
          %2158 = vmatpush1.bf16.msra.mxu0 %v1557
          %2159 = vmatprep.subr.bf16.mxu0 %v1526
          %2160 = vmatpush1.bf16.msra.mxu0 %v1525
          %2161 = vmatprep.subr.bf16.mxu0 %v1494
          %2162 = vmatpush1.bf16.msra.mxu0 %v1493
          %2163 = vmatprep.subr.bf16.mxu0 %v1462
          %2164 = vmatpush1.bf16.msra.mxu0 %v1461
          %2165 = vmatprep.subr.bf16.mxu0 %v1430
          %2166 = vmatpush1.bf16.msra.mxu0 %v1429
          %2167 = vmatprep.subr.bf16.mxu0 %v1398
          %2168 = vmatpush1.bf16.msra.mxu0 %v1397
          %2169 = vmatprep.subr.bf16.mxu0 %v1366
          %2170 = vmatpush1.bf16.msra.mxu0 %v1365
          %2171 = vmatprep.subr.bf16.mxu0 %v1334
          %2172 = vmatpush1.bf16.msra.mxu0 %v1333
          %2173 = vmatprep.subr.bf16.mxu0 0
          %2174 = vmatpush2.bf16.msra.mxu0 0
          %2175 = vmatprep.subr.bf16.mxu0 0
          %2176 = vmatpush2.bf16.msra.mxu0 0
          %2177 = vmatprep.subr.bf16.mxu0 0
          %2178 = vmatpush2.bf16.msra.mxu0 0
          %2179 = vmatprep.subr.bf16.mxu0 0
          %2180 = vmatpush2.bf16.msra.mxu0 0
          %2181 = vmatprep.subr.bf16.mxu0 0
          %2182 = vmatpush2.bf16.msra.mxu0 0
          %2183 = vmatprep.subr.bf16.mxu0 0
          %2184 = vmatpush2.bf16.msra.mxu0 0
          %2185 = vmatprep.subr.bf16.mxu0 0
          %2186 = vmatpush2.bf16.msra.mxu0 0
          %2187 = vmatprep.subr.bf16.mxu0 0
          %2188 = vmatpush2.bf16.msra.mxu0 0
          %2189 = vmatprep.mubr.bf16.mxu0 0
          %2190 = vmatmul.mubr.bf16.gmra.mxu0 %v292
          %v2191 = vpop.f32.mrf.mxu0
          %v2192 = vadd.f32 0.0, %v2191
          %v2193 = vpop.f32.mrf.mxu0
          %v2194 = vadd.f32 0.0, %v2193
          %v2195 = vpop.f32.mrf.mxu0
          %v2196 = vpop.f32.mrf.mxu0
          %2197 = vdwg.mxu0
          %2198 = vmatprep.subr.bf16.mxu0 %v1560
          %2199 = vmatpush1.bf16.msra.mxu0 %v1559
          %2200 = vmatprep.subr.bf16.mxu0 %v1528
          %2201 = vmatpush1.bf16.msra.mxu0 %v1527
          %2202 = vmatprep.subr.bf16.mxu0 %v1496
          %2203 = vmatpush1.bf16.msra.mxu0 %v1495
          %2204 = vmatprep.subr.bf16.mxu0 %v1464
          %2205 = vmatpush1.bf16.msra.mxu0 %v1463
          %2206 = vmatprep.subr.bf16.mxu0 %v1432
          %2207 = vmatpush1.bf16.msra.mxu0 %v1431
          %2208 = vmatprep.subr.bf16.mxu0 %v1400
          %2209 = vmatpush1.bf16.msra.mxu0 %v1399
          %2210 = vmatprep.subr.bf16.mxu0 %v1368
          %2211 = vmatpush1.bf16.msra.mxu0 %v1367
          %2212 = vmatprep.subr.bf16.mxu0 %v1336
          %2213 = vmatpush1.bf16.msra.mxu0 %v1335
          %2214 = vmatprep.subr.bf16.mxu0 0
          %2215 = vmatpush2.bf16.msra.mxu0 0
          %2216 = vmatprep.subr.bf16.mxu0 0
          %2217 = vmatpush2.bf16.msra.mxu0 0
          %2218 = vmatprep.subr.bf16.mxu0 0
          %2219 = vmatpush2.bf16.msra.mxu0 0
          %2220 = vmatprep.subr.bf16.mxu0 0
          %2221 = vmatpush2.bf16.msra.mxu0 0
          %2222 = vmatprep.subr.bf16.mxu0 0
          %2223 = vmatpush2.bf16.msra.mxu0 0
          %2224 = vmatprep.subr.bf16.mxu0 0
          %2225 = vmatpush2.bf16.msra.mxu0 0
          %2226 = vmatprep.subr.bf16.mxu0 0
          %2227 = vmatpush2.bf16.msra.mxu0 0
          %2228 = vmatprep.subr.bf16.mxu0 0
          %2229 = vmatpush2.bf16.msra.mxu0 0
          %2230 = vmatprep.mubr.bf16.mxu0 0
          %2231 = vmatmul.mubr.bf16.gmra.mxu0 %v292
          %v2232 = vpop.f32.mrf.mxu0
          %v2233 = vadd.f32 0.0, %v2232
          %v2234 = vpop.f32.mrf.mxu0
          %v2235 = vadd.f32 0.0, %v2234
          %v2236 = vpop.f32.mrf.mxu0
          %v2237 = vpop.f32.mrf.mxu0
          %2238 = vdwg.mxu0
          %2239 = vmatprep.subr.bf16.mxu0 %v1562
          %2240 = vmatpush1.bf16.msra.mxu0 %v1561
          %2241 = vmatprep.subr.bf16.mxu0 %v1530
          %2242 = vmatpush1.bf16.msra.mxu0 %v1529
          %2243 = vmatprep.subr.bf16.mxu0 %v1498
          %2244 = vmatpush1.bf16.msra.mxu0 %v1497
          %2245 = vmatprep.subr.bf16.mxu0 %v1466
          %2246 = vmatpush1.bf16.msra.mxu0 %v1465
          %2247 = vmatprep.subr.bf16.mxu0 %v1434
          %2248 = vmatpush1.bf16.msra.mxu0 %v1433
          %2249 = vmatprep.subr.bf16.mxu0 %v1402
          %2250 = vmatpush1.bf16.msra.mxu0 %v1401
          %2251 = vmatprep.subr.bf16.mxu0 %v1370
          %2252 = vmatpush1.bf16.msra.mxu0 %v1369
          %2253 = vmatprep.subr.bf16.mxu0 %v1338
          %2254 = vmatpush1.bf16.msra.mxu0 %v1337
          %2255 = vmatprep.subr.bf16.mxu0 0
          %2256 = vmatpush2.bf16.msra.mxu0 0
          %2257 = vmatprep.subr.bf16.mxu0 0
          %2258 = vmatpush2.bf16.msra.mxu0 0
          %2259 = vmatprep.subr.bf16.mxu0 0
          %2260 = vmatpush2.bf16.msra.mxu0 0
          %2261 = vmatprep.subr.bf16.mxu0 0
          %2262 = vmatpush2.bf16.msra.mxu0 0
          %2263 = vmatprep.subr.bf16.mxu0 0
          %2264 = vmatpush2.bf16.msra.mxu0 0
          %2265 = vmatprep.subr.bf16.mxu0 0
          %2266 = vmatpush2.bf16.msra.mxu0 0
          %2267 = vmatprep.subr.bf16.mxu0 0
          %2268 = vmatpush2.bf16.msra.mxu0 0
          %2269 = vmatprep.subr.bf16.mxu0 0
          %2270 = vmatpush2.bf16.msra.mxu0 0
          %2271 = vmatprep.mubr.bf16.mxu0 0
          %2272 = vmatmul.mubr.bf16.gmra.mxu0 %v292
          %v2273 = vpop.f32.mrf.mxu0
          %v2274 = vadd.f32 0.0, %v2273
          %v2275 = vpop.f32.mrf.mxu0
          %v2276 = vadd.f32 0.0, %v2275
          %v2277 = vpop.f32.mrf.mxu0
          %v2278 = vpop.f32.mrf.mxu0
          %2279 = vdwg.mxu0
          %2280 = vmatprep.subr.bf16.mxu0 %v1564
          %2281 = vmatpush1.bf16.msra.mxu0 %v1563
          %2282 = vmatprep.subr.bf16.mxu0 %v1532
          %2283 = vmatpush1.bf16.msra.mxu0 %v1531
          %2284 = vmatprep.subr.bf16.mxu0 %v1500
          %2285 = vmatpush1.bf16.msra.mxu0 %v1499
          %2286 = vmatprep.subr.bf16.mxu0 %v1468
          %2287 = vmatpush1.bf16.msra.mxu0 %v1467
          %2288 = vmatprep.subr.bf16.mxu0 %v1436
          %2289 = vmatpush1.bf16.msra.mxu0 %v1435
          %2290 = vmatprep.subr.bf16.mxu0 %v1404
          %2291 = vmatpush1.bf16.msra.mxu0 %v1403
          %2292 = vmatprep.subr.bf16.mxu0 %v1372
          %2293 = vmatpush1.bf16.msra.mxu0 %v1371
          %2294 = vmatprep.subr.bf16.mxu0 %v1340
          %2295 = vmatpush1.bf16.msra.mxu0 %v1339
          %2296 = vmatprep.subr.bf16.mxu0 0
          %2297 = vmatpush2.bf16.msra.mxu0 0
          %2298 = vmatprep.subr.bf16.mxu0 0
          %2299 = vmatpush2.bf16.msra.mxu0 0
          %2300 = vmatprep.subr.bf16.mxu0 0
          %2301 = vmatpush2.bf16.msra.mxu0 0
          %2302 = vmatprep.subr.bf16.mxu0 0
          %2303 = vmatpush2.bf16.msra.mxu0 0
          %2304 = vmatprep.subr.bf16.mxu0 0
          %2305 = vmatpush2.bf16.msra.mxu0 0
          %2306 = vmatprep.subr.bf16.mxu0 0
          %2307 = vmatpush2.bf16.msra.mxu0 0
          %2308 = vmatprep.subr.bf16.mxu0 0
          %2309 = vmatpush2.bf16.msra.mxu0 0
          %2310 = vmatprep.subr.bf16.mxu0 0
          %2311 = vmatpush2.bf16.msra.mxu0 0
          %2312 = vmatprep.mubr.bf16.mxu0 0
          %2313 = vmatmul.mubr.bf16.gmra.mxu0 %v292
          %v2314 = vpop.f32.mrf.mxu0
          %v2315 = vadd.f32 0.0, %v2314
          %v2316 = vpop.f32.mrf.mxu0
          %v2317 = vadd.f32 0.0, %v2316
          %v2318 = vpop.f32.mrf.mxu0
          %v2319 = vpop.f32.mrf.mxu0
          %2320 = vdwg.mxu0
          %2321 = vmatprep.subr.bf16.mxu0 %v1566
          %2322 = vmatpush1.bf16.msra.mxu0 %v1565
          %2323 = vmatprep.subr.bf16.mxu0 %v1534
          %2324 = vmatpush1.bf16.msra.mxu0 %v1533
          %2325 = vmatprep.subr.bf16.mxu0 %v1502
          %2326 = vmatpush1.bf16.msra.mxu0 %v1501
          %2327 = vmatprep.subr.bf16.mxu0 %v1470
          %2328 = vmatpush1.bf16.msra.mxu0 %v1469
          %2329 = vmatprep.subr.bf16.mxu0 %v1438
          %2330 = vmatpush1.bf16.msra.mxu0 %v1437
          %2331 = vmatprep.subr.bf16.mxu0 %v1406
          %2332 = vmatpush1.bf16.msra.mxu0 %v1405
          %2333 = vmatprep.subr.bf16.mxu0 %v1374
          %2334 = vmatpush1.bf16.msra.mxu0 %v1373
          %2335 = vmatprep.subr.bf16.mxu0 %v1342
          %2336 = vmatpush1.bf16.msra.mxu0 %v1341
          %2337 = vmatprep.subr.bf16.mxu0 0
          %2338 = vmatpush2.bf16.msra.mxu0 0
          %2339 = vmatprep.subr.bf16.mxu0 0
          %2340 = vmatpush2.bf16.msra.mxu0 0
          %2341 = vmatprep.subr.bf16.mxu0 0
          %2342 = vmatpush2.bf16.msra.mxu0 0
          %2343 = vmatprep.subr.bf16.mxu0 0
          %2344 = vmatpush2.bf16.msra.mxu0 0
          %2345 = vmatprep.subr.bf16.mxu0 0
          %2346 = vmatpush2.bf16.msra.mxu0 0
          %2347 = vmatprep.subr.bf16.mxu0 0
          %2348 = vmatpush2.bf16.msra.mxu0 0
          %2349 = vmatprep.subr.bf16.mxu0 0
          %2350 = vmatpush2.bf16.msra.mxu0 0
          %2351 = vmatprep.subr.bf16.mxu0 0
          %2352 = vmatpush2.bf16.msra.mxu0 0
          %2353 = vmatprep.mubr.bf16.mxu0 0
          %2354 = vmatmul.mubr.bf16.gmra.mxu0 %v292
          %v2355 = vpop.f32.mrf.mxu0
          %v2356 = vadd.f32 0.0, %v2355
          %v2357 = vpop.f32.mrf.mxu0
          %v2358 = vadd.f32 0.0, %v2357
          %v2359 = vpop.f32.mrf.mxu0
          %v2360 = vpop.f32.mrf.mxu0
          %2361 = vdwg.mxu0
          %2362 = vmatprep.subr.bf16.mxu0 %v1568
          %2363 = vmatpush1.bf16.msra.mxu0 %v1567
          %2364 = vmatprep.subr.bf16.mxu0 %v1536
          %2365 = vmatpush1.bf16.msra.mxu0 %v1535
          %2366 = vmatprep.subr.bf16.mxu0 %v1504
          %2367 = vmatpush1.bf16.msra.mxu0 %v1503
          %2368 = vmatprep.subr.bf16.mxu0 %v1472
          %2369 = vmatpush1.bf16.msra.mxu0 %v1471
          %2370 = vmatprep.subr.bf16.mxu0 %v1440
          %2371 = vmatpush1.bf16.msra.mxu0 %v1439
          %2372 = vmatprep.subr.bf16.mxu0 %v1408
          %2373 = vmatpush1.bf16.msra.mxu0 %v1407
          %2374 = vmatprep.subr.bf16.mxu0 %v1376
          %2375 = vmatpush1.bf16.msra.mxu0 %v1375
          %2376 = vmatprep.subr.bf16.mxu0 %v1344
          %2377 = vmatpush1.bf16.msra.mxu0 %v1343
          %2378 = vmatprep.subr.bf16.mxu0 0
          %2379 = vmatpush2.bf16.msra.mxu0 0
          %2380 = vmatprep.subr.bf16.mxu0 0
          %2381 = vmatpush2.bf16.msra.mxu0 0
          %2382 = vmatprep.subr.bf16.mxu0 0
          %2383 = vmatpush2.bf16.msra.mxu0 0
          %2384 = vmatprep.subr.bf16.mxu0 0
          %2385 = vmatpush2.bf16.msra.mxu0 0
          %2386 = vmatprep.subr.bf16.mxu0 0
          %2387 = vmatpush2.bf16.msra.mxu0 0
          %2388 = vmatprep.subr.bf16.mxu0 0
          %2389 = vmatpush2.bf16.msra.mxu0 0
          %2390 = vmatprep.subr.bf16.mxu0 0
          %2391 = vmatpush2.bf16.msra.mxu0 0
          %2392 = vmatprep.subr.bf16.mxu0 0
          %2393 = vmatpush2.bf16.msra.mxu0 0
          %2394 = vmatprep.mubr.bf16.mxu0 0
          %2395 = vmatmul.mubr.bf16.gmra.mxu0 %v292
          %v2396 = vpop.f32.mrf.mxu0
          %v2397 = vadd.f32 0.0, %v2396
          %v2398 = vpop.f32.mrf.mxu0
          %v2399 = vadd.f32 0.0, %v2398
          %v2400 = vpop.f32.mrf.mxu0
          %v2401 = vpop.f32.mrf.mxu0
          %2402 = vdwg.mxu0
          %2403 = vmatprep.subr.bf16.mxu0 %v1570
          %2404 = vmatpush1.bf16.msra.mxu0 %v1569
          %2405 = vmatprep.subr.bf16.mxu0 %v1538
          %2406 = vmatpush1.bf16.msra.mxu0 %v1537
          %2407 = vmatprep.subr.bf16.mxu0 %v1506
          %2408 = vmatpush1.bf16.msra.mxu0 %v1505
          %2409 = vmatprep.subr.bf16.mxu0 %v1474
          %2410 = vmatpush1.bf16.msra.mxu0 %v1473
          %2411 = vmatprep.subr.bf16.mxu0 %v1442
          %2412 = vmatpush1.bf16.msra.mxu0 %v1441
          %2413 = vmatprep.subr.bf16.mxu0 %v1410
          %2414 = vmatpush1.bf16.msra.mxu0 %v1409
          %2415 = vmatprep.subr.bf16.mxu0 %v1378
          %2416 = vmatpush1.bf16.msra.mxu0 %v1377
          %2417 = vmatprep.subr.bf16.mxu0 %v1346
          %2418 = vmatpush1.bf16.msra.mxu0 %v1345
          %2419 = vmatprep.subr.bf16.mxu0 0
          %2420 = vmatpush2.bf16.msra.mxu0 0
          %2421 = vmatprep.subr.bf16.mxu0 0
          %2422 = vmatpush2.bf16.msra.mxu0 0
          %2423 = vmatprep.subr.bf16.mxu0 0
          %2424 = vmatpush2.bf16.msra.mxu0 0
          %2425 = vmatprep.subr.bf16.mxu0 0
          %2426 = vmatpush2.bf16.msra.mxu0 0
          %2427 = vmatprep.subr.bf16.mxu0 0
          %2428 = vmatpush2.bf16.msra.mxu0 0
          %2429 = vmatprep.subr.bf16.mxu0 0
          %2430 = vmatpush2.bf16.msra.mxu0 0
          %2431 = vmatprep.subr.bf16.mxu0 0
          %2432 = vmatpush2.bf16.msra.mxu0 0
          %2433 = vmatprep.subr.bf16.mxu0 0
          %2434 = vmatpush2.bf16.msra.mxu0 0
          %2435 = vmatprep.mubr.bf16.mxu0 0
          %2436 = vmatmul.mubr.bf16.gmra.mxu0 %v292
          %v2437 = vpop.f32.mrf.mxu0
          %v2438 = vadd.f32 0.0, %v2437
          %v2439 = vpop.f32.mrf.mxu0
          %v2440 = vadd.f32 0.0, %v2439
          %v2441 = vpop.f32.mrf.mxu0
          %v2442 = vpop.f32.mrf.mxu0
          %2443 = vdwg.mxu0
          %2444 = vmatprep.subr.bf16.mxu0 %v1572
          %2445 = vmatpush1.bf16.msra.mxu0 %v1571
          %2446 = vmatprep.subr.bf16.mxu0 %v1540
          %2447 = vmatpush1.bf16.msra.mxu0 %v1539
          %2448 = vmatprep.subr.bf16.mxu0 %v1508
          %2449 = vmatpush1.bf16.msra.mxu0 %v1507
          %2450 = vmatprep.subr.bf16.mxu0 %v1476
          %2451 = vmatpush1.bf16.msra.mxu0 %v1475
          %2452 = vmatprep.subr.bf16.mxu0 %v1444
          %2453 = vmatpush1.bf16.msra.mxu0 %v1443
          %2454 = vmatprep.subr.bf16.mxu0 %v1412
          %2455 = vmatpush1.bf16.msra.mxu0 %v1411
          %2456 = vmatprep.subr.bf16.mxu0 %v1380
          %2457 = vmatpush1.bf16.msra.mxu0 %v1379
          %2458 = vmatprep.subr.bf16.mxu0 %v1348
          %2459 = vmatpush1.bf16.msra.mxu0 %v1347
          %2460 = vmatprep.subr.bf16.mxu0 0
          %2461 = vmatpush2.bf16.msra.mxu0 0
          %2462 = vmatprep.subr.bf16.mxu0 0
          %2463 = vmatpush2.bf16.msra.mxu0 0
          %2464 = vmatprep.subr.bf16.mxu0 0
          %2465 = vmatpush2.bf16.msra.mxu0 0
          %2466 = vmatprep.subr.bf16.mxu0 0
          %2467 = vmatpush2.bf16.msra.mxu0 0
          %2468 = vmatprep.subr.bf16.mxu0 0
          %2469 = vmatpush2.bf16.msra.mxu0 0
          %2470 = vmatprep.subr.bf16.mxu0 0
          %2471 = vmatpush2.bf16.msra.mxu0 0
          %2472 = vmatprep.subr.bf16.mxu0 0
          %2473 = vmatpush2.bf16.msra.mxu0 0
          %2474 = vmatprep.subr.bf16.mxu0 0
          %2475 = vmatpush2.bf16.msra.mxu0 0
          %2476 = vmatprep.mubr.bf16.mxu0 0
          %2477 = vmatmul.mubr.bf16.gmra.mxu0 %v292
          %v2478 = vpop.f32.mrf.mxu0
          %v2479 = vadd.f32 0.0, %v2478
          %v2480 = vpop.f32.mrf.mxu0
          %v2481 = vadd.f32 0.0, %v2480
          %v2482 = vpop.f32.mrf.mxu0
          %v2483 = vpop.f32.mrf.mxu0
          %2484 = vdwg.mxu0
          %v2485 = vcombine.low %v1864, %v1905
          %v2486 = vcombine.high %v1864, %v1905
          %v2488 = vunpack.c.l.s4 1983009808
          %v2489 = vunpack.c.0.s8 %v2488
          %v2490 = vlaneseq
          %v2491 = vshrl.u32 %v2490, 7
          %v2492 = vsub.s32 %v2489, %v2491
          %v2493 = vrot.slane %v2485, %v2492
          %v2495 = vunpack.c.l.s4 1983009808
          %v2496 = vunpack.c.0.s8 %v2495
          %v2497 = vlaneseq
          %v2498 = vshrl.u32 %v2497, 7
          %v2499 = vsub.s32 %v2496, %v2498
          %v2500 = vrot.slane %v2486, %v2499
          %v2501 = vcombine.low %v1866, %v1907
          %v2502 = vcombine.high %v1866, %v1907
          %v2504 = vunpack.c.l.s4 1983009808
          %v2505 = vunpack.c.0.s8 %v2504
          %v2506 = vlaneseq
          %v2507 = vshrl.u32 %v2506, 7
          %v2508 = vsub.s32 %v2505, %v2507
          %v2509 = vrot.slane %v2501, %v2508
          %v2511 = vunpack.c.l.s4 1983009808
          %v2512 = vunpack.c.0.s8 %v2511
          %v2513 = vlaneseq
          %v2514 = vshrl.u32 %v2513, 7
          %v2515 = vsub.s32 %v2512, %v2514
          %v2516 = vrot.slane %v2502, %v2515
          %v2517 = vcombine.low %v1946, %v1987
          %v2518 = vcombine.high %v1946, %v1987
          %v2520 = vunpack.c.l.s4 1983009808
          %v2521 = vunpack.c.0.s8 %v2520
          %v2522 = vlaneseq
          %v2523 = vshrl.u32 %v2522, 7
          %v2524 = vsub.s32 %v2521, %v2523
          %v2525 = vrot.slane %v2517, %v2524
          %v2527 = vunpack.c.l.s4 1983009808
          %v2528 = vunpack.c.0.s8 %v2527
          %v2529 = vlaneseq
          %v2530 = vshrl.u32 %v2529, 7
          %v2531 = vsub.s32 %v2528, %v2530
          %v2532 = vrot.slane %v2518, %v2531
          %v2533 = vcombine.low %v1948, %v1989
          %v2534 = vcombine.high %v1948, %v1989
          %v2536 = vunpack.c.l.s4 1983009808
          %v2537 = vunpack.c.0.s8 %v2536
          %v2538 = vlaneseq
          %v2539 = vshrl.u32 %v2538, 7
          %v2540 = vsub.s32 %v2537, %v2539
          %v2541 = vrot.slane %v2533, %v2540
          %v2543 = vunpack.c.l.s4 1983009808
          %v2544 = vunpack.c.0.s8 %v2543
          %v2545 = vlaneseq
          %v2546 = vshrl.u32 %v2545, 7
          %v2547 = vsub.s32 %v2544, %v2546
          %v2548 = vrot.slane %v2534, %v2547
          %v2549 = vcombine.low %v2493, %v2509
          %v2550 = vcombine.high %v2493, %v2509
          %v2552 = vunpack.c.l.s4 1934713408
          %v2553 = vunpack.c.0.s8 %v2552
          %v2554 = vlaneseq
          %v2555 = vshrl.u32 %v2554, 7
          %v2556 = vsub.s32 %v2553, %v2555
          %v2557 = vrot.slane %v2549, %v2556
          %v2559 = vunpack.c.l.s4 1934713408
          %v2560 = vunpack.c.0.s8 %v2559
          %v2561 = vlaneseq
          %v2562 = vshrl.u32 %v2561, 7
          %v2563 = vsub.s32 %v2560, %v2562
          %v2564 = vrot.slane %v2550, %v2563
          %v2565 = vcombine.low %v2500, %v2516
          %v2566 = vcombine.high %v2500, %v2516
          %v2568 = vunpack.c.l.s4 1934713408
          %v2569 = vunpack.c.0.s8 %v2568
          %v2570 = vlaneseq
          %v2571 = vshrl.u32 %v2570, 7
          %v2572 = vsub.s32 %v2569, %v2571
          %v2573 = vrot.slane %v2565, %v2572
          %v2575 = vunpack.c.l.s4 1934713408
          %v2576 = vunpack.c.0.s8 %v2575
          %v2577 = vlaneseq
          %v2578 = vshrl.u32 %v2577, 7
          %v2579 = vsub.s32 %v2576, %v2578
          %v2580 = vrot.slane %v2566, %v2579
          %v2581 = vcombine.low %v2525, %v2541
          %v2582 = vcombine.high %v2525, %v2541
          %v2584 = vunpack.c.l.s4 1934713408
          %v2585 = vunpack.c.0.s8 %v2584
          %v2586 = vlaneseq
          %v2587 = vshrl.u32 %v2586, 7
          %v2588 = vsub.s32 %v2585, %v2587
          %v2589 = vrot.slane %v2581, %v2588
          %v2591 = vunpack.c.l.s4 1934713408
          %v2592 = vunpack.c.0.s8 %v2591
          %v2593 = vlaneseq
          %v2594 = vshrl.u32 %v2593, 7
          %v2595 = vsub.s32 %v2592, %v2594
          %v2596 = vrot.slane %v2582, %v2595
          %v2597 = vcombine.low %v2532, %v2548
          %v2598 = vcombine.high %v2532, %v2548
          %v2600 = vunpack.c.l.s4 1934713408
          %v2601 = vunpack.c.0.s8 %v2600
          %v2602 = vlaneseq
          %v2603 = vshrl.u32 %v2602, 7
          %v2604 = vsub.s32 %v2601, %v2603
          %v2605 = vrot.slane %v2597, %v2604
          %v2607 = vunpack.c.l.s4 1934713408
          %v2608 = vunpack.c.0.s8 %v2607
          %v2609 = vlaneseq
          %v2610 = vshrl.u32 %v2609, 7
          %v2611 = vsub.s32 %v2608, %v2610
          %v2612 = vrot.slane %v2598, %v2611
          %v2613 = vcombine.low %v2557, %v2589
          %v2614 = vcombine.high %v2557, %v2589
          %v2615 = vcombine.low %v2564, %v2596
          %v2616 = vcombine.high %v2564, %v2596
          %v2617 = vcombine.low %v2573, %v2605
          %v2618 = vcombine.high %v2573, %v2605
          %v2619 = vcombine.low %v2580, %v2612
          %v2620 = vcombine.high %v2580, %v2612
          %v2621 = vcombine.low %v2028, %v2069
          %v2622 = vcombine.high %v2028, %v2069
          %v2624 = vunpack.c.l.s4 1983009808
          %v2625 = vunpack.c.0.s8 %v2624
          %v2626 = vlaneseq
          %v2627 = vshrl.u32 %v2626, 7
          %v2628 = vsub.s32 %v2625, %v2627
          %v2629 = vrot.slane %v2621, %v2628
          %v2631 = vunpack.c.l.s4 1983009808
          %v2632 = vunpack.c.0.s8 %v2631
          %v2633 = vlaneseq
          %v2634 = vshrl.u32 %v2633, 7
          %v2635 = vsub.s32 %v2632, %v2634
          %v2636 = vrot.slane %v2622, %v2635
          %v2637 = vcombine.low %v2030, %v2071
          %v2638 = vcombine.high %v2030, %v2071
          %v2640 = vunpack.c.l.s4 1983009808
          %v2641 = vunpack.c.0.s8 %v2640
          %v2642 = vlaneseq
          %v2643 = vshrl.u32 %v2642, 7
          %v2644 = vsub.s32 %v2641, %v2643
          %v2645 = vrot.slane %v2637, %v2644
          %v2647 = vunpack.c.l.s4 1983009808
          %v2648 = vunpack.c.0.s8 %v2647
          %v2649 = vlaneseq
          %v2650 = vshrl.u32 %v2649, 7
          %v2651 = vsub.s32 %v2648, %v2650
          %v2652 = vrot.slane %v2638, %v2651
          %v2653 = vcombine.low %v2110, %v2151
          %v2654 = vcombine.high %v2110, %v2151
          %v2656 = vunpack.c.l.s4 1983009808
          %v2657 = vunpack.c.0.s8 %v2656
          %v2658 = vlaneseq
          %v2659 = vshrl.u32 %v2658, 7
          %v2660 = vsub.s32 %v2657, %v2659
          %v2661 = vrot.slane %v2653, %v2660
          %v2663 = vunpack.c.l.s4 1983009808
          %v2664 = vunpack.c.0.s8 %v2663
          %v2665 = vlaneseq
          %v2666 = vshrl.u32 %v2665, 7
          %v2667 = vsub.s32 %v2664, %v2666
          %v2668 = vrot.slane %v2654, %v2667
          %v2669 = vcombine.low %v2112, %v2153
          %v2670 = vcombine.high %v2112, %v2153
          %v2672 = vunpack.c.l.s4 1983009808
          %v2673 = vunpack.c.0.s8 %v2672
          %v2674 = vlaneseq
          %v2675 = vshrl.u32 %v2674, 7
          %v2676 = vsub.s32 %v2673, %v2675
          %v2677 = vrot.slane %v2669, %v2676
          %v2679 = vunpack.c.l.s4 1983009808
          %v2680 = vunpack.c.0.s8 %v2679
          %v2681 = vlaneseq
          %v2682 = vshrl.u32 %v2681, 7
          %v2683 = vsub.s32 %v2680, %v2682
          %v2684 = vrot.slane %v2670, %v2683
          %v2685 = vcombine.low %v2629, %v2645
          %v2686 = vcombine.high %v2629, %v2645
          %v2688 = vunpack.c.l.s4 1934713408
          %v2689 = vunpack.c.0.s8 %v2688
          %v2690 = vlaneseq
          %v2691 = vshrl.u32 %v2690, 7
          %v2692 = vsub.s32 %v2689, %v2691
          %v2693 = vrot.slane %v2685, %v2692
          %v2695 = vunpack.c.l.s4 1934713408
          %v2696 = vunpack.c.0.s8 %v2695
          %v2697 = vlaneseq
          %v2698 = vshrl.u32 %v2697, 7
          %v2699 = vsub.s32 %v2696, %v2698
          %v2700 = vrot.slane %v2686, %v2699
          %v2701 = vcombine.low %v2636, %v2652
          %v2702 = vcombine.high %v2636, %v2652
          %v2704 = vunpack.c.l.s4 1934713408
          %v2705 = vunpack.c.0.s8 %v2704
          %v2706 = vlaneseq
          %v2707 = vshrl.u32 %v2706, 7
          %v2708 = vsub.s32 %v2705, %v2707
          %v2709 = vrot.slane %v2701, %v2708
          %v2711 = vunpack.c.l.s4 1934713408
          %v2712 = vunpack.c.0.s8 %v2711
          %v2713 = vlaneseq
          %v2714 = vshrl.u32 %v2713, 7
          %v2715 = vsub.s32 %v2712, %v2714
          %v2716 = vrot.slane %v2702, %v2715
          %v2717 = vcombine.low %v2661, %v2677
          %v2718 = vcombine.high %v2661, %v2677
          %v2720 = vunpack.c.l.s4 1934713408
          %v2721 = vunpack.c.0.s8 %v2720
          %v2722 = vlaneseq
          %v2723 = vshrl.u32 %v2722, 7
          %v2724 = vsub.s32 %v2721, %v2723
          %v2725 = vrot.slane %v2717, %v2724
          %v2727 = vunpack.c.l.s4 1934713408
          %v2728 = vunpack.c.0.s8 %v2727
          %v2729 = vlaneseq
          %v2730 = vshrl.u32 %v2729, 7
          %v2731 = vsub.s32 %v2728, %v2730
          %v2732 = vrot.slane %v2718, %v2731
          %v2733 = vcombine.low %v2668, %v2684
          %v2734 = vcombine.high %v2668, %v2684
          %v2736 = vunpack.c.l.s4 1934713408
          %v2737 = vunpack.c.0.s8 %v2736
          %v2738 = vlaneseq
          %v2739 = vshrl.u32 %v2738, 7
          %v2740 = vsub.s32 %v2737, %v2739
          %v2741 = vrot.slane %v2733, %v2740
          %v2743 = vunpack.c.l.s4 1934713408
          %v2744 = vunpack.c.0.s8 %v2743
          %v2745 = vlaneseq
          %v2746 = vshrl.u32 %v2745, 7
          %v2747 = vsub.s32 %v2744, %v2746
          %v2748 = vrot.slane %v2734, %v2747
          %v2749 = vcombine.low %v2693, %v2725
          %v2750 = vcombine.high %v2693, %v2725
          %v2751 = vcombine.low %v2700, %v2732
          %v2752 = vcombine.high %v2700, %v2732
          %v2753 = vcombine.low %v2709, %v2741
          %v2754 = vcombine.high %v2709, %v2741
          %v2755 = vcombine.low %v2716, %v2748
          %v2756 = vcombine.high %v2716, %v2748
          %v2757 = vcombine.low %v2192, %v2233
          %v2758 = vcombine.high %v2192, %v2233
          %v2760 = vunpack.c.l.s4 1983009808
          %v2761 = vunpack.c.0.s8 %v2760
          %v2762 = vlaneseq
          %v2763 = vshrl.u32 %v2762, 7
          %v2764 = vsub.s32 %v2761, %v2763
          %v2765 = vrot.slane %v2757, %v2764
          %v2767 = vunpack.c.l.s4 1983009808
          %v2768 = vunpack.c.0.s8 %v2767
          %v2769 = vlaneseq
          %v2770 = vshrl.u32 %v2769, 7
          %v2771 = vsub.s32 %v2768, %v2770
          %v2772 = vrot.slane %v2758, %v2771
          %v2773 = vcombine.low %v2194, %v2235
          %v2774 = vcombine.high %v2194, %v2235
          %v2776 = vunpack.c.l.s4 1983009808
          %v2777 = vunpack.c.0.s8 %v2776
          %v2778 = vlaneseq
          %v2779 = vshrl.u32 %v2778, 7
          %v2780 = vsub.s32 %v2777, %v2779
          %v2781 = vrot.slane %v2773, %v2780
          %v2783 = vunpack.c.l.s4 1983009808
          %v2784 = vunpack.c.0.s8 %v2783
          %v2785 = vlaneseq
          %v2786 = vshrl.u32 %v2785, 7
          %v2787 = vsub.s32 %v2784, %v2786
          %v2788 = vrot.slane %v2774, %v2787
          %v2789 = vcombine.low %v2274, %v2315
          %v2790 = vcombine.high %v2274, %v2315
          %v2792 = vunpack.c.l.s4 1983009808
          %v2793 = vunpack.c.0.s8 %v2792
          %v2794 = vlaneseq
          %v2795 = vshrl.u32 %v2794, 7
          %v2796 = vsub.s32 %v2793, %v2795
          %v2797 = vrot.slane %v2789, %v2796
          %v2799 = vunpack.c.l.s4 1983009808
          %v2800 = vunpack.c.0.s8 %v2799
          %v2801 = vlaneseq
          %v2802 = vshrl.u32 %v2801, 7
          %v2803 = vsub.s32 %v2800, %v2802
          %v2804 = vrot.slane %v2790, %v2803
          %v2805 = vcombine.low %v2276, %v2317
          %v2806 = vcombine.high %v2276, %v2317
          %v2808 = vunpack.c.l.s4 1983009808
          %v2809 = vunpack.c.0.s8 %v2808
          %v2810 = vlaneseq
          %v2811 = vshrl.u32 %v2810, 7
          %v2812 = vsub.s32 %v2809, %v2811
          %v2813 = vrot.slane %v2805, %v2812
          %v2815 = vunpack.c.l.s4 1983009808
          %v2816 = vunpack.c.0.s8 %v2815
          %v2817 = vlaneseq
          %v2818 = vshrl.u32 %v2817, 7
          %v2819 = vsub.s32 %v2816, %v2818
          %v2820 = vrot.slane %v2806, %v2819
          %v2821 = vcombine.low %v2765, %v2781
          %v2822 = vcombine.high %v2765, %v2781
          %v2824 = vunpack.c.l.s4 1934713408
          %v2825 = vunpack.c.0.s8 %v2824
          %v2826 = vlaneseq
          %v2827 = vshrl.u32 %v2826, 7
          %v2828 = vsub.s32 %v2825, %v2827
          %v2829 = vrot.slane %v2821, %v2828
          %v2831 = vunpack.c.l.s4 1934713408
          %v2832 = vunpack.c.0.s8 %v2831
          %v2833 = vlaneseq
          %v2834 = vshrl.u32 %v2833, 7
          %v2835 = vsub.s32 %v2832, %v2834
          %v2836 = vrot.slane %v2822, %v2835
          %v2837 = vcombine.low %v2772, %v2788
          %v2838 = vcombine.high %v2772, %v2788
          %v2840 = vunpack.c.l.s4 1934713408
          %v2841 = vunpack.c.0.s8 %v2840
          %v2842 = vlaneseq
          %v2843 = vshrl.u32 %v2842, 7
          %v2844 = vsub.s32 %v2841, %v2843
          %v2845 = vrot.slane %v2837, %v2844
          %v2847 = vunpack.c.l.s4 1934713408
          %v2848 = vunpack.c.0.s8 %v2847
          %v2849 = vlaneseq
          %v2850 = vshrl.u32 %v2849, 7
          %v2851 = vsub.s32 %v2848, %v2850
          %v2852 = vrot.slane %v2838, %v2851
          %v2853 = vcombine.low %v2797, %v2813
          %v2854 = vcombine.high %v2797, %v2813
          %v2856 = vunpack.c.l.s4 1934713408
          %v2857 = vunpack.c.0.s8 %v2856
          %v2858 = vlaneseq
          %v2859 = vshrl.u32 %v2858, 7
          %v2860 = vsub.s32 %v2857, %v2859
          %v2861 = vrot.slane %v2853, %v2860
          %v2863 = vunpack.c.l.s4 1934713408
          %v2864 = vunpack.c.0.s8 %v2863
          %v2865 = vlaneseq
          %v2866 = vshrl.u32 %v2865, 7
          %v2867 = vsub.s32 %v2864, %v2866
          %v2868 = vrot.slane %v2854, %v2867
          %v2869 = vcombine.low %v2804, %v2820
          %v2870 = vcombine.high %v2804, %v2820
          %v2872 = vunpack.c.l.s4 1934713408
          %v2873 = vunpack.c.0.s8 %v2872
          %v2874 = vlaneseq
          %v2875 = vshrl.u32 %v2874, 7
          %v2876 = vsub.s32 %v2873, %v2875
          %v2877 = vrot.slane %v2869, %v2876
          %v2879 = vunpack.c.l.s4 1934713408
          %v2880 = vunpack.c.0.s8 %v2879
          %v2881 = vlaneseq
          %v2882 = vshrl.u32 %v2881, 7
          %v2883 = vsub.s32 %v2880, %v2882
          %v2884 = vrot.slane %v2870, %v2883
          %v2885 = vcombine.low %v2829, %v2861
          %v2886 = vcombine.high %v2829, %v2861
          %v2887 = vcombine.low %v2836, %v2868
          %v2888 = vcombine.high %v2836, %v2868
          %v2889 = vcombine.low %v2845, %v2877
          %v2890 = vcombine.high %v2845, %v2877
          %v2891 = vcombine.low %v2852, %v2884
          %v2892 = vcombine.high %v2852, %v2884
          %v2893 = vcombine.low %v2356, %v2397
          %v2894 = vcombine.high %v2356, %v2397
          %v2896 = vunpack.c.l.s4 1983009808
          %v2897 = vunpack.c.0.s8 %v2896
          %v2898 = vlaneseq
          %v2899 = vshrl.u32 %v2898, 7
          %v2900 = vsub.s32 %v2897, %v2899
          %v2901 = vrot.slane %v2893, %v2900
          %v2903 = vunpack.c.l.s4 1983009808
          %v2904 = vunpack.c.0.s8 %v2903
          %v2905 = vlaneseq
          %v2906 = vshrl.u32 %v2905, 7
          %v2907 = vsub.s32 %v2904, %v2906
          %v2908 = vrot.slane %v2894, %v2907
          %v2909 = vcombine.low %v2358, %v2399
          %v2910 = vcombine.high %v2358, %v2399
          %v2912 = vunpack.c.l.s4 1983009808
          %v2913 = vunpack.c.0.s8 %v2912
          %v2914 = vlaneseq
          %v2915 = vshrl.u32 %v2914, 7
          %v2916 = vsub.s32 %v2913, %v2915
          %v2917 = vrot.slane %v2909, %v2916
          %v2919 = vunpack.c.l.s4 1983009808
          %v2920 = vunpack.c.0.s8 %v2919
          %v2921 = vlaneseq
          %v2922 = vshrl.u32 %v2921, 7
          %v2923 = vsub.s32 %v2920, %v2922
          %v2924 = vrot.slane %v2910, %v2923
          %v2925 = vcombine.low %v2438, %v2479
          %v2926 = vcombine.high %v2438, %v2479
          %v2928 = vunpack.c.l.s4 1983009808
          %v2929 = vunpack.c.0.s8 %v2928
          %v2930 = vlaneseq
          %v2931 = vshrl.u32 %v2930, 7
          %v2932 = vsub.s32 %v2929, %v2931
          %v2933 = vrot.slane %v2925, %v2932
          %v2935 = vunpack.c.l.s4 1983009808
          %v2936 = vunpack.c.0.s8 %v2935
          %v2937 = vlaneseq
          %v2938 = vshrl.u32 %v2937, 7
          %v2939 = vsub.s32 %v2936, %v2938
          %v2940 = vrot.slane %v2926, %v2939
          %v2941 = vcombine.low %v2440, %v2481
          %v2942 = vcombine.high %v2440, %v2481
          %v2944 = vunpack.c.l.s4 1983009808
          %v2945 = vunpack.c.0.s8 %v2944
          %v2946 = vlaneseq
          %v2947 = vshrl.u32 %v2946, 7
          %v2948 = vsub.s32 %v2945, %v2947
          %v2949 = vrot.slane %v2941, %v2948
          %v2951 = vunpack.c.l.s4 1983009808
          %v2952 = vunpack.c.0.s8 %v2951
          %v2953 = vlaneseq
          %v2954 = vshrl.u32 %v2953, 7
          %v2955 = vsub.s32 %v2952, %v2954
          %v2956 = vrot.slane %v2942, %v2955
          %v2957 = vcombine.low %v2901, %v2917
          %v2958 = vcombine.high %v2901, %v2917
          %v2960 = vunpack.c.l.s4 1934713408
          %v2961 = vunpack.c.0.s8 %v2960
          %v2962 = vlaneseq
          %v2963 = vshrl.u32 %v2962, 7
          %v2964 = vsub.s32 %v2961, %v2963
          %v2965 = vrot.slane %v2957, %v2964
          %v2967 = vunpack.c.l.s4 1934713408
          %v2968 = vunpack.c.0.s8 %v2967
          %v2969 = vlaneseq
          %v2970 = vshrl.u32 %v2969, 7
          %v2971 = vsub.s32 %v2968, %v2970
          %v2972 = vrot.slane %v2958, %v2971
          %v2973 = vcombine.low %v2908, %v2924
          %v2974 = vcombine.high %v2908, %v2924
          %v2976 = vunpack.c.l.s4 1934713408
          %v2977 = vunpack.c.0.s8 %v2976
          %v2978 = vlaneseq
          %v2979 = vshrl.u32 %v2978, 7
          %v2980 = vsub.s32 %v2977, %v2979
          %v2981 = vrot.slane %v2973, %v2980
          %v2983 = vunpack.c.l.s4 1934713408
          %v2984 = vunpack.c.0.s8 %v2983
          %v2985 = vlaneseq
          %v2986 = vshrl.u32 %v2985, 7
          %v2987 = vsub.s32 %v2984, %v2986
          %v2988 = vrot.slane %v2974, %v2987
          %v2989 = vcombine.low %v2933, %v2949
          %v2990 = vcombine.high %v2933, %v2949
          %v2992 = vunpack.c.l.s4 1934713408
          %v2993 = vunpack.c.0.s8 %v2992
          %v2994 = vlaneseq
          %v2995 = vshrl.u32 %v2994, 7
          %v2996 = vsub.s32 %v2993, %v2995
          %v2997 = vrot.slane %v2989, %v2996
          %v2999 = vunpack.c.l.s4 1934713408
          %v3000 = vunpack.c.0.s8 %v2999
          %v3001 = vlaneseq
          %v3002 = vshrl.u32 %v3001, 7
          %v3003 = vsub.s32 %v3000, %v3002
          %v3004 = vrot.slane %v2990, %v3003
          %v3005 = vcombine.low %v2940, %v2956
          %v3006 = vcombine.high %v2940, %v2956
          %v3008 = vunpack.c.l.s4 1934713408
          %v3009 = vunpack.c.0.s8 %v3008
          %v3010 = vlaneseq
          %v3011 = vshrl.u32 %v3010, 7
          %v3012 = vsub.s32 %v3009, %v3011
          %v3013 = vrot.slane %v3005, %v3012
          %v3015 = vunpack.c.l.s4 1934713408
          %v3016 = vunpack.c.0.s8 %v3015
          %v3017 = vlaneseq
          %v3018 = vshrl.u32 %v3017, 7
          %v3019 = vsub.s32 %v3016, %v3018
          %v3020 = vrot.slane %v3006, %v3019
          %v3021 = vcombine.low %v2965, %v2997
          %v3022 = vcombine.high %v2965, %v2997
          %v3023 = vcombine.low %v2972, %v3004
          %v3024 = vcombine.high %v2972, %v3004
          %v3025 = vcombine.low %v2981, %v3013
          %v3026 = vcombine.high %v2981, %v3013
          %v3027 = vcombine.low %v2988, %v3020
          %v3028 = vcombine.high %v2988, %v3020
          %v3029 = vlaneseq
          %v3030 = vshrl.u32 %v3029, 7
          %v3031 = vsub.s32 0, %v3030
          %v3032 = vrot.slane %v291, %v3031
          %3034 = vbcast.lane.b32.xlu0 %v3032, 256
          %v3035 = vpop.permute.xlu0 %3034
          %s3037 = sor.u32 256, 8
          %3038 = vbcast.lane.b32.xlu0 %v3032, %s3037
          %v3039 = vpop.permute.xlu0 %3038
          %s3041 = sor.u32 256, 16
          %3042 = vbcast.lane.b32.xlu0 %v3032, %s3041
          %v3043 = vpop.permute.xlu0 %3042
          %s3045 = sor.u32 256, 24
          %3046 = vbcast.lane.b32.xlu0 %v3032, %s3045
          %v3047 = vpop.permute.xlu0 %3046
          %v3048 = vlaneseq
          %v3049 = vshrl.u32 %v3048, 7
          %v3050 = vsub.s32 1, %v3049
          %v3051 = vrot.slane %v291, %v3050
          %3053 = vbcast.lane.b32.xlu0 %v3051, 256
          %v3054 = vpop.permute.xlu0 %3053
          %s3056 = sor.u32 256, 8
          %3057 = vbcast.lane.b32.xlu0 %v3051, %s3056
          %v3058 = vpop.permute.xlu0 %3057
          %s3060 = sor.u32 256, 16
          %3061 = vbcast.lane.b32.xlu0 %v3051, %s3060
          %v3062 = vpop.permute.xlu0 %3061
          %s3064 = sor.u32 256, 24
          %3065 = vbcast.lane.b32.xlu0 %v3051, %s3064
          %v3066 = vpop.permute.xlu0 %3065
          %v3067 = vlaneseq
          %v3068 = vshrl.u32 %v3067, 7
          %v3069 = vsub.s32 2, %v3068
          %v3070 = vrot.slane %v291, %v3069
          %3072 = vbcast.lane.b32.xlu0 %v3070, 256
          %v3073 = vpop.permute.xlu0 %3072
          %s3075 = sor.u32 256, 8
          %3076 = vbcast.lane.b32.xlu0 %v3070, %s3075
          %v3077 = vpop.permute.xlu0 %3076
          %s3079 = sor.u32 256, 16
          %3080 = vbcast.lane.b32.xlu0 %v3070, %s3079
          %v3081 = vpop.permute.xlu0 %3080
          %s3083 = sor.u32 256, 24
          %3084 = vbcast.lane.b32.xlu0 %v3070, %s3083
          %v3085 = vpop.permute.xlu0 %3084
          %v3086 = vlaneseq
          %v3087 = vshrl.u32 %v3086, 7
          %v3088 = vsub.s32 3, %v3087
          %v3089 = vrot.slane %v291, %v3088
          %3091 = vbcast.lane.b32.xlu0 %v3089, 256
          %v3092 = vpop.permute.xlu0 %3091
          %s3094 = sor.u32 256, 8
          %3095 = vbcast.lane.b32.xlu0 %v3089, %s3094
          %v3096 = vpop.permute.xlu0 %3095
          %s3098 = sor.u32 256, 16
          %3099 = vbcast.lane.b32.xlu0 %v3089, %s3098
          %v3100 = vpop.permute.xlu0 %3099
          %s3102 = sor.u32 256, 24
          %3103 = vbcast.lane.b32.xlu0 %v3089, %s3102
          %v3104 = vpop.permute.xlu0 %3103
          %v3105 = vlaneseq
          %v3106 = vshrl.u32 %v3105, 7
          %v3107 = vsub.s32 4, %v3106
          %v3108 = vrot.slane %v291, %v3107
          %3110 = vbcast.lane.b32.xlu0 %v3108, 256
          %v3111 = vpop.permute.xlu0 %3110
          %s3113 = sor.u32 256, 8
          %3114 = vbcast.lane.b32.xlu0 %v3108, %s3113
          %v3115 = vpop.permute.xlu0 %3114
          %s3117 = sor.u32 256, 16
          %3118 = vbcast.lane.b32.xlu0 %v3108, %s3117
          %v3119 = vpop.permute.xlu0 %3118
          %s3121 = sor.u32 256, 24
          %3122 = vbcast.lane.b32.xlu0 %v3108, %s3121
          %v3123 = vpop.permute.xlu0 %3122
          %v3124 = vlaneseq
          %v3125 = vshrl.u32 %v3124, 7
          %v3126 = vsub.s32 5, %v3125
          %v3127 = vrot.slane %v291, %v3126
          %3129 = vbcast.lane.b32.xlu0 %v3127, 256
          %v3130 = vpop.permute.xlu0 %3129
          %s3132 = sor.u32 256, 8
          %3133 = vbcast.lane.b32.xlu0 %v3127, %s3132
          %v3134 = vpop.permute.xlu0 %3133
          %s3136 = sor.u32 256, 16
          %3137 = vbcast.lane.b32.xlu0 %v3127, %s3136
          %v3138 = vpop.permute.xlu0 %3137
          %s3140 = sor.u32 256, 24
          %3141 = vbcast.lane.b32.xlu0 %v3127, %s3140
          %v3142 = vpop.permute.xlu0 %3141
          %v3143 = vlaneseq
          %v3144 = vshrl.u32 %v3143, 7
          %v3145 = vsub.s32 6, %v3144
          %v3146 = vrot.slane %v291, %v3145
          %3148 = vbcast.lane.b32.xlu0 %v3146, 256
          %v3149 = vpop.permute.xlu0 %3148
          %s3151 = sor.u32 256, 8
          %3152 = vbcast.lane.b32.xlu0 %v3146, %s3151
          %v3153 = vpop.permute.xlu0 %3152
          %s3155 = sor.u32 256, 16
          %3156 = vbcast.lane.b32.xlu0 %v3146, %s3155
          %v3157 = vpop.permute.xlu0 %3156
          %s3159 = sor.u32 256, 24
          %3160 = vbcast.lane.b32.xlu0 %v3146, %s3159
          %v3161 = vpop.permute.xlu0 %3160
          %v3162 = vlaneseq
          %v3163 = vshrl.u32 %v3162, 7
          %v3164 = vsub.s32 7, %v3163
          %v3165 = vrot.slane %v291, %v3164
          %3167 = vbcast.lane.b32.xlu0 %v3165, 256
          %v3168 = vpop.permute.xlu0 %3167
          %s3170 = sor.u32 256, 8
          %3171 = vbcast.lane.b32.xlu0 %v3165, %s3170
          %v3172 = vpop.permute.xlu0 %3171
          %s3174 = sor.u32 256, 16
          %3175 = vbcast.lane.b32.xlu0 %v3165, %s3174
          %v3176 = vpop.permute.xlu0 %3175
          %s3178 = sor.u32 256, 24
          %3179 = vbcast.lane.b32.xlu0 %v3165, %s3178
          %v3180 = vpop.permute.xlu0 %3179
          %v3181 = vmul.f32 %v3035, %v2613
          %v3182 = vmul.f32 %v3039, %v2749
          %v3183 = vmul.f32 %v3043, %v2885
          %v3184 = vmul.f32 %v3047, %v3021
          %v3185 = vmul.f32 %v3054, %v2614
          %v3186 = vmul.f32 %v3058, %v2750
          %v3187 = vmul.f32 %v3062, %v2886
          %v3188 = vmul.f32 %v3066, %v3022
          %v3189 = vmul.f32 %v3073, %v2615
          %v3190 = vmul.f32 %v3077, %v2751
          %v3191 = vmul.f32 %v3081, %v2887
          %v3192 = vmul.f32 %v3085, %v3023
          %v3193 = vmul.f32 %v3092, %v2616
          %v3194 = vmul.f32 %v3096, %v2752
          %v3195 = vmul.f32 %v3100, %v2888
          %v3196 = vmul.f32 %v3104, %v3024
          %v3197 = vmul.f32 %v3111, %v2617
          %v3198 = vmul.f32 %v3115, %v2753
          %v3199 = vmul.f32 %v3119, %v2889
          %v3200 = vmul.f32 %v3123, %v3025
          %v3201 = vmul.f32 %v3130, %v2618
          %v3202 = vmul.f32 %v3134, %v2754
          %v3203 = vmul.f32 %v3138, %v2890
          %v3204 = vmul.f32 %v3142, %v3026
          %v3205 = vmul.f32 %v3149, %v2619
          %v3206 = vmul.f32 %v3153, %v2755
          %v3207 = vmul.f32 %v3157, %v2891
          %v3208 = vmul.f32 %v3161, %v3027
          %v3209 = vmul.f32 %v3168, %v2620
          %v3210 = vmul.f32 %v3172, %v2756
          %v3211 = vmul.f32 %v3176, %v2892
          %v3212 = vmul.f32 %v3180, %v3028
          %v3213 = vadd.f32 %v3181, %v3182
          %v3214 = vadd.f32 %v3213, %v3183
          %v3215 = vadd.f32 %v3214, %v3184
          %v3216 = vrot.slane %v3215, 4
          %v3217 = vadd.f32 %v3215, %v3216
          %v3218 = vrot.slane %v3217, 2
          %v3219 = vadd.f32 %v3217, %v3218
          %v3220 = vrot.slane %v3219, 1
          %v3221 = vadd.f32 %v3219, %v3220
          %v3222 = vadd.f32 %v3185, %v3186
          %v3223 = vadd.f32 %v3222, %v3187
          %v3224 = vadd.f32 %v3223, %v3188
          %v3225 = vrot.slane %v3224, 4
          %v3226 = vadd.f32 %v3224, %v3225
          %v3227 = vrot.slane %v3226, 2
          %v3228 = vadd.f32 %v3226, %v3227
          %v3229 = vrot.slane %v3228, 1
          %v3230 = vadd.f32 %v3228, %v3229
          %v3231 = vadd.f32 %v3189, %v3190
          %v3232 = vadd.f32 %v3231, %v3191
          %v3233 = vadd.f32 %v3232, %v3192
          %v3234 = vrot.slane %v3233, 4
          %v3235 = vadd.f32 %v3233, %v3234
          %v3236 = vrot.slane %v3235, 2
          %v3237 = vadd.f32 %v3235, %v3236
          %v3238 = vrot.slane %v3237, 1
          %v3239 = vadd.f32 %v3237, %v3238
          %v3240 = vadd.f32 %v3193, %v3194
          %v3241 = vadd.f32 %v3240, %v3195
          %v3242 = vadd.f32 %v3241, %v3196
          %v3243 = vrot.slane %v3242, 4
          %v3244 = vadd.f32 %v3242, %v3243
          %v3245 = vrot.slane %v3244, 2
          %v3246 = vadd.f32 %v3244, %v3245
          %v3247 = vrot.slane %v3246, 1
          %v3248 = vadd.f32 %v3246, %v3247
          %v3249 = vadd.f32 %v3197, %v3198
          %v3250 = vadd.f32 %v3249, %v3199
          %v3251 = vadd.f32 %v3250, %v3200
          %v3252 = vrot.slane %v3251, 4
          %v3253 = vadd.f32 %v3251, %v3252
          %v3254 = vrot.slane %v3253, 2
          %v3255 = vadd.f32 %v3253, %v3254
          %v3256 = vrot.slane %v3255, 1
          %v3257 = vadd.f32 %v3255, %v3256
          %v3258 = vadd.f32 %v3201, %v3202
          %v3259 = vadd.f32 %v3258, %v3203
          %v3260 = vadd.f32 %v3259, %v3204
          %v3261 = vrot.slane %v3260, 4
          %v3262 = vadd.f32 %v3260, %v3261
          %v3263 = vrot.slane %v3262, 2
          %v3264 = vadd.f32 %v3262, %v3263
          %v3265 = vrot.slane %v3264, 1
          %v3266 = vadd.f32 %v3264, %v3265
          %v3267 = vadd.f32 %v3205, %v3206
          %v3268 = vadd.f32 %v3267, %v3207
          %v3269 = vadd.f32 %v3268, %v3208
          %v3270 = vrot.slane %v3269, 4
          %v3271 = vadd.f32 %v3269, %v3270
          %v3272 = vrot.slane %v3271, 2
          %v3273 = vadd.f32 %v3271, %v3272
          %v3274 = vrot.slane %v3273, 1
          %v3275 = vadd.f32 %v3273, %v3274
          %v3276 = vadd.f32 %v3209, %v3210
          %v3277 = vadd.f32 %v3276, %v3211
          %v3278 = vadd.f32 %v3277, %v3212
          %v3279 = vrot.slane %v3278, 4
          %v3280 = vadd.f32 %v3278, %v3279
          %v3281 = vrot.slane %v3280, 2
          %v3282 = vadd.f32 %v3280, %v3281
          %v3283 = vrot.slane %v3282, 1
          %v3284 = vadd.f32 %v3282, %v3283
          %v3285 = vadd.f32 %v3221, 0.0
          %v3286 = vadd.f32 %v3230, 0.0
          %v3287 = vadd.f32 %v3239, 0.0
          %v3288 = vadd.f32 %v3248, 0.0
          %v3289 = vadd.f32 %v3257, 0.0
          %v3290 = vadd.f32 %v3266, 0.0
          %v3291 = vadd.f32 %v3275, 0.0
          %v3292 = vadd.f32 %v3284, 0.0
          %v3293 = vlaneseq
          %v3294 = vshrl.u32 %v3293, 7
          %v3295 = vsub.s32 2, %v3294
          %v3296 = vrot.slane %v279, %v3295
          %v3297 = vmul.f32 %v3285, %v3296
          %v3298 = vmul.f32 %v3286, %v3296
          %v3299 = vmul.f32 %v3287, %v3296
          %v3300 = vmul.f32 %v3288, %v3296
          %v3301 = vmul.f32 %v3289, %v3296
          %v3302 = vmul.f32 %v3290, %v3296
          %v3303 = vmul.f32 %v3291, %v3296
          %v3304 = vmul.f32 %v3292, %v3296
          %v3305 = vlaneseq
          %v3306 = vshrl.u32 %v3305, 7
          %v3307 = vsub.s32 3, %v3306
          %v3308 = vrot.slane %v279, %v3307
          %v3309 = vadd.f32 %v3297, %v3308
          %v3310 = vadd.f32 %v3298, %v3308
          %v3311 = vadd.f32 %v3299, %v3308
          %v3312 = vadd.f32 %v3300, %v3308
          %v3313 = vadd.f32 %v3301, %v3308
          %v3314 = vadd.f32 %v3302, %v3308
          %v3315 = vadd.f32 %v3303, %v3308
          %v3316 = vadd.f32 %v3304, %v3308
          %v3317 = vpack.c.bf16 %v3309, %v3309
          %v3318 = vpack.c.bf16 %v3310, %v3310
          %v3319 = vpack.c.bf16 %v3311, %v3311
          %v3320 = vpack.c.bf16 %v3312, %v3312
          %v3321 = vpack.c.bf16 %v3313, %v3313
          %v3322 = vpack.c.bf16 %v3314, %v3314
          %v3323 = vpack.c.bf16 %v3315, %v3315
          %v3324 = vpack.c.bf16 %v3316, %v3316
          %v3333 = vunpack.c.l.b16 %v3317
          %v3334 = vunpack.c.l.b16 %v3318
          %v3335 = vunpack.c.l.b16 %v3319
          %v3336 = vunpack.c.l.b16 %v3320
          %v3337 = vunpack.c.l.b16 %v3321
          %v3338 = vunpack.c.l.b16 %v3322
          %v3339 = vunpack.c.l.b16 %v3323
          %v3340 = vunpack.c.l.b16 %v3324
          %v3341 = vpack.c.b16 %v3333, %v3333
          %v3342 = vpack.c.b16 %v3334, %v3334
          %v3343 = vpack.c.b16 %v3335, %v3335
          %v3344 = vpack.c.b16 %v3336, %v3336
          %v3345 = vpack.c.b16 %v3337, %v3337
          %v3346 = vpack.c.b16 %v3338, %v3338
          %v3347 = vpack.c.b16 %v3339, %v3339
          %v3348 = vpack.c.b16 %v3340, %v3340
          %v3349 = vunpack.c.l.b16 %v3341
          %v3350 = vunpack.c.l.b16 %v3342
          %v3351 = vunpack.c.l.b16 %v3343
          %v3352 = vunpack.c.l.b16 %v3344
          %v3353 = vunpack.c.l.b16 %v3345
          %v3354 = vunpack.c.l.b16 %v3346
          %v3355 = vunpack.c.l.b16 %v3347
          %v3356 = vunpack.c.l.b16 %v3348
          %v3357 = vrot.slane %v3350, 7
          %vm3358 = vcmask 1041409
          %v3359 = vsel %vm3358, %v3357, %v3349
          %v3360 = vrot.slane %v3351, 6
          %vm3361 = vcmask 1042434
          %v3362 = vsel %vm3361, %v3360, %v3359
          %v3363 = vrot.slane %v3352, 5
          %vm3364 = vcmask 1043459
          %v3365 = vsel %vm3364, %v3363, %v3362
          %v3366 = vrot.slane %v3353, 4
          %vm3367 = vcmask 1044484
          %v3368 = vsel %vm3367, %v3366, %v3365
          %v3369 = vrot.slane %v3354, 3
          %vm3370 = vcmask 1045509
          %v3371 = vsel %vm3370, %v3369, %v3368
          %v3372 = vrot.slane %v3355, 2
          %vm3373 = vcmask 1046534
          %v3374 = vsel %vm3373, %v3372, %v3371
          %v3375 = vrot.slane %v3356, 1
          %vm3376 = vcmask 1047559
          %v3377 = vsel %vm3376, %v3375, %v3374
          %v3378 = vpack.c.b16 %v3377, %v3377
          %3380 = vst [vmem:[#allocation2] sm:$0xf] %v3378
        $region44: #{tucker_forward.1} parent=39 // pred_fallthru
          _
        %v3381 = vld [vmem:[#allocation2] sm:$0xf]
        %v3382 = vld [vmem:[%s271] sm:$0xff]
        %v3383 = vld [vmem:[%s271 + $0x8] sm:$0xff]
        %v3384 = vld [vmem:[%s271 + $0x10] sm:$0xff]
        %v3385 = vld [vmem:[%s271 + $0x18] sm:$0xff]
        %v3386 = vld [vmem:[%s271 + $0x20] sm:$0xff]
        %v3387 = vld [vmem:[%s271 + $0x28] sm:$0xff]
        %v3388 = vld [vmem:[%s271 + $0x30] sm:$0xff]
        %v3389 = vld [vmem:[%s271 + $0x38] sm:$0xff]
        %v3390 = vld [vmem:[%s271 + $0x40] sm:$0xff]
        %v3391 = vld [vmem:[%s271 + $0x48] sm:$0xff]
        %v3392 = vld [vmem:[%s271 + $0x50] sm:$0xff]
        %v3393 = vld [vmem:[%s271 + $0x58] sm:$0xff]
        %v3394 = vld [vmem:[%s271 + $0x60] sm:$0xff]
        %v3395 = vld [vmem:[%s271 + $0x68] sm:$0xff]
        %v3396 = vld [vmem:[%s271 + $0x70] sm:$0xff]
        %v3397 = vld [vmem:[%s271 + $0x78] sm:$0xff]
        %v3414 = vunpack.c.l.b16 %v3382
        %v3415 = vunpack.c.h.b16 %v3382
        %v3416 = vunpack.c.l.b16 %v3383
        %v3417 = vunpack.c.h.b16 %v3383
        %v3418 = vunpack.c.l.b16 %v3384
        %v3419 = vunpack.c.h.b16 %v3384
        %v3420 = vunpack.c.l.b16 %v3385
        %v3421 = vunpack.c.h.b16 %v3385
        %v3422 = vunpack.c.l.b16 %v3386
        %v3423 = vunpack.c.h.b16 %v3386
        %v3424 = vunpack.c.l.b16 %v3387
        %v3425 = vunpack.c.h.b16 %v3387
        %v3426 = vunpack.c.l.b16 %v3388
        %v3427 = vunpack.c.h.b16 %v3388
        %v3428 = vunpack.c.l.b16 %v3389
        %v3429 = vunpack.c.h.b16 %v3389
        %v3430 = vunpack.c.l.b16 %v3390
        %v3431 = vunpack.c.h.b16 %v3390
        %v3432 = vunpack.c.l.b16 %v3391
        %v3433 = vunpack.c.h.b16 %v3391
        %v3434 = vunpack.c.l.b16 %v3392
        %v3435 = vunpack.c.h.b16 %v3392
        %v3436 = vunpack.c.l.b16 %v3393
        %v3437 = vunpack.c.h.b16 %v3393
        %v3438 = vunpack.c.l.b16 %v3394
        %v3439 = vunpack.c.h.b16 %v3394
        %v3440 = vunpack.c.l.b16 %v3395
        %v3441 = vunpack.c.h.b16 %v3395
        %v3442 = vunpack.c.l.b16 %v3396
        %v3443 = vunpack.c.h.b16 %v3396
        %v3444 = vunpack.c.l.b16 %v3397
        %v3445 = vunpack.c.h.b16 %v3397
        %v3446 = vpack.c.b16 %v3416, %v3414
        %v3447 = vpack.c.b16 %v3417, %v3415
        %v3448 = vpack.c.b16 %v3420, %v3418
        %v3449 = vpack.c.b16 %v3421, %v3419
        %v3450 = vpack.c.b16 %v3424, %v3422
        %v3451 = vpack.c.b16 %v3425, %v3423
        %v3452 = vpack.c.b16 %v3428, %v3426
        %v3453 = vpack.c.b16 %v3429, %v3427
        %v3454 = vpack.c.b16 %v3432, %v3430
        %v3455 = vpack.c.b16 %v3433, %v3431
        %v3456 = vpack.c.b16 %v3436, %v3434
        %v3457 = vpack.c.b16 %v3437, %v3435
        %v3458 = vpack.c.b16 %v3440, %v3438
        %v3459 = vpack.c.b16 %v3441, %v3439
        %v3460 = vpack.c.b16 %v3444, %v3442
        %v3461 = vpack.c.b16 %v3445, %v3443
        %3478 = vmatprep.subr.bf16.mxu0 %v3461
        %3479 = vmatpush1.bf16.msra.mxu0 %v3460
        %3480 = vmatprep.subr.bf16.mxu0 %v3459
        %3481 = vmatpush1.bf16.msra.mxu0 %v3458
        %3482 = vmatprep.subr.bf16.mxu0 %v3457
        %3483 = vmatpush1.bf16.msra.mxu0 %v3456
        %3484 = vmatprep.subr.bf16.mxu0 %v3455
        %3485 = vmatpush1.bf16.msra.mxu0 %v3454
        %3486 = vmatprep.subr.bf16.mxu0 %v3453
        %3487 = vmatpush1.bf16.msra.mxu0 %v3452
        %3488 = vmatprep.subr.bf16.mxu0 %v3451
        %3489 = vmatpush1.bf16.msra.mxu0 %v3450
        %3490 = vmatprep.subr.bf16.mxu0 %v3449
        %3491 = vmatpush1.bf16.msra.mxu0 %v3448
        %3492 = vmatprep.subr.bf16.mxu0 %v3447
        %3493 = vmatpush1.bf16.msra.mxu0 %v3446
        %3494 = vmatprep.subr.bf16.mxu0 0
        %3495 = vmatpush2.bf16.msra.mxu0 0
        %3496 = vmatprep.subr.bf16.mxu0 0
        %3497 = vmatpush2.bf16.msra.mxu0 0
        %3498 = vmatprep.subr.bf16.mxu0 0
        %3499 = vmatpush2.bf16.msra.mxu0 0
        %3500 = vmatprep.subr.bf16.mxu0 0
        %3501 = vmatpush2.bf16.msra.mxu0 0
        %3502 = vmatprep.subr.bf16.mxu0 0
        %3503 = vmatpush2.bf16.msra.mxu0 0
        %3504 = vmatprep.subr.bf16.mxu0 0
        %3505 = vmatpush2.bf16.msra.mxu0 0
        %3506 = vmatprep.subr.bf16.mxu0 0
        %3507 = vmatpush2.bf16.msra.mxu0 0
        %3508 = vmatprep.subr.bf16.mxu0 0
        %3509 = vmatpush2.bf16.msra.mxu0 0
        %3510 = vmatprep.mubr.bf16.mxu0 0
        %3511 = vmatmul.mubr.bf16.gmra.mxu0 %v3381
        %v3512 = vpop.f32.mrf.mxu0
        %v3513 = vadd.f32 0.0, %v3512
        %v3514 = vpop.f32.mrf.mxu0
        %v3515 = vadd.f32 0.0, %v3514
        %v3516 = vpop.f32.mrf.mxu0
        %v3517 = vpop.f32.mrf.mxu0
        %3518 = vdwg.mxu0
        %v3519 = vsub.f32 0.0, %v3513
        %v3520 = vsub.f32 0.0, %v3515
        %v3521 = vmul.f32 %v3519, 1.442695
        %v3522 = vpow.pop %v3521
        %v3523 = vmul.f32 %v3520, 1.442695
        %v3524 = vpow.pop %v3523
        %v3525 = vadd.f32 %v3522, 1.0
        %v3526 = vadd.f32 %v3524, 1.0
        %v3527 = vrcp.pop %v3525
        %v3528 = vrcp.pop %v3526
        %v3529 = vpack.c.bf16 %v3527, %v3527
        %v3530 = vpack.c.bf16 %v3528, %v3528
        %v3533 = vunpack.c.l.b16 %v3529
        %v3534 = vunpack.c.l.b16 %v3530
        %v3535 = vpack.c.b16 %v3534, %v3533
        %3537 = vst [vmem:[%s258] sm:$0xff] %v3535
        %s3538 = sand.u32 %s161, 1
        %s3539 = scalar_lea.sflag [#allocation4], %s3538
        %s3540 = sand.u32 %s161, 1
        %s3541 = smul.addr %s3540, 8
        %s3542 = scalar_lea.vmem [#allocation3], %s3541
        // Predicated region
        $region45: #{tucker_forward.1} parent=39 // pred_check
          %p3543 = pneg %p171
        $region46: #{tucker_forward.1} parent=39 // pred_check_branch
          %3545 = sbr.rel (%p3543) target = $region48
        $region47: #{tucker_forward.1} parent=39 // pred_region
          %s3546 = smul.u32 2, %s24
          %s3548 = ssub.s32 128, 128
          %3549 = vsyncadd %s3539, %s3548
          %s3550 = smul.addr %s23, 2
          %s3551 = sadd.s32 %s3546, %s3550
          %s3552 = smul.addr %s3551, 64
          %s3553 = scalar_lea.hbm %s5, %s3552
          %s3555 = sshll.u32 %s3542, 4
          %s3556 = int_to_ptr.vmem [resolvable:$true] %s3555
          %3558 = dma.vmem_to_hbm [thread:$0]  %s3556, 128, %s3553, %s3539
        $region48: #{tucker_forward.1} parent=39 // pred_fallthru
          _
      $region40: #{tucker_forward.1} parent=5 // pred_fallthru
        _
      %p3559 = scmp.le.s32.totalorder 2, %s14
      // Predicated region
      $region49: #{tucker_forward.1} parent=5 // pred_check
        %p3560 = pneg %p3559
      $region50: #{tucker_forward.1} parent=5 // pred_check_branch
        %3562 = sbr.rel (%p3560) target = $region52
      $region51: #{tucker_forward.1} parent=5 // pred_region
        %s3563 = ssub.s32 %s14, 2
        // Predicated region
        $region53: #{tucker_forward.1} parent=51 // pred_check
          %p3564 = pneg %p177
        $region54: #{tucker_forward.1} parent=51 // pred_check_branch
          %3566 = sbr.rel (%p3564) target = $region56
        $region55: #{tucker_forward.1} parent=51 // pred_region
          %s3567 = sand.u32 %s162, 1
          %s3568 = scalar_lea.sflag [#allocation4], %s3567
          %s3569 = sand.u32 %s162, 1
          %s3570 = smul.addr %s3569, 8
          %s3571 = scalar_lea.vmem [#allocation3], %s3570
          %3572 = dma.done %s3568, 128
        $region56: #{tucker_forward.1} parent=51 // pred_fallthru
          _
      $region52: #{tucker_forward.1} parent=5 // pred_fallthru
        _
    $region6: #{tucker_forward.1} parent=1 // loop_footer
      %s18 = sadd.s32 1, %s14
    $region7: #{tucker_forward.1} parent=1 // loop_footer_branch
      %13 = sbr.rel target = $region3
    $region8: #{tucker_forward.1} parent=1 // loop_exit
      _
    %3573 = vsyncpa [#allocation4], 1
    %s3574 = scalar_lea.sflag [#allocation4], 1
    %3575 = vsyncpa %s3574, 1

</llo_original>
